<compile_context>
chip_gen: v6e
topology: v6e:2x2x1
jax: 0.10.0
libtpu: 0.0.40
codegen_flags: <defaults>
</compile_context>

<pallas_src>
import functools
import numpy as np

import jax
import jax.numpy as jnp
from jax import lax
from jax.experimental import pallas as pl
from jax.experimental.pallas import tpu as pltpu


# ----------------------------------------------------------------------------
# One fused kernel: biLSTM (2 layers, both directions) + attention + similarity
# for a single batch_x group of (1 + batch_y) sequences.
# ----------------------------------------------------------------------------
def fused_token_attn_kernel(emb_ref, mask_ref, xmask_ref,
                            l1_wih_ref, l1_whh_ref, l1_b_ref,
                            l2_wih_ref, l2_whh_ref, l2_b_ref,
                            w_attn_ref, b_attn_ref,
                            w1_ref, b1_ref, w2_ref, b2_ref,
                            attn_out_ref, sim_out_ref,
                            h1_sc, h2_sc, *, L, B1, Hd, temperature):
    H = 2 * Hd
    H3 = 3 * Hd

    def cell(gx, h, c, whh):
        # gates packed as [i, f, o, g] (reordered on the host): one wide
        # sigmoid over 3*Hd lanes, one tanh over the last Hd lanes.
        g = gx + jnp.dot(h.astype(jnp.bfloat16), whh,
                         preferred_element_type=jnp.float32)
        s = jax.nn.sigmoid(g[:, :H3])
        gg = jnp.tanh(g[:, H3:])
        i = s[:, :Hd]
        f = s[:, Hd:2 * Hd]
        o = s[:, 2 * Hd:]
        c_new = f * c + i * gg
        return o * jnp.tanh(c_new), c_new

    emb = emb_ref[...]                           # (L*B1, E) bf16
    zeros = jnp.zeros((B1, Hd), jnp.float32)

    # ---- layer 1: hoisted input projections (one matmul per direction) ----
    gx1f = jnp.dot(emb, l1_wih_ref[0],
                   preferred_element_type=jnp.float32) + l1_b_ref[0]
    gx1b = jnp.dot(emb, l1_wih_ref[1],
                   preferred_element_type=jnp.float32) + l1_b_ref[1]
    w1f_hh = l1_whh_ref[0]
    w1b_hh = l1_whh_ref[1]

    hf = cf = hb = cb = zeros
    for t in range(L):
        tb = L - 1 - t
        hf, cf = cell(gx1f[t * B1:(t + 1) * B1], hf, cf, w1f_hh)
        hb, cb = cell(gx1b[tb * B1:(tb + 1) * B1], hb, cb, w1b_hh)
        h1_sc[t * B1:(t + 1) * B1, :Hd] = hf
        h1_sc[tb * B1:(tb + 1) * B1, Hd:] = hb

    # ---- layer 2: single full-width input projection per direction ----
    h1 = h1_sc[...].astype(jnp.bfloat16)         # (L*B1, 2Hd)
    gx2f = jnp.dot(h1, l2_wih_ref[0],
                   preferred_element_type=jnp.float32) + l2_b_ref[0]
    gx2b = jnp.dot(h1, l2_wih_ref[1],
                   preferred_element_type=jnp.float32) + l2_b_ref[1]
    w2f_hh = l2_whh_ref[0]
    w2b_hh = l2_whh_ref[1]

    hf = cf = hb = cb = zeros
    for t in range(L):
        tb = L - 1 - t
        hf, cf = cell(gx2f[t * B1:(t + 1) * B1], hf, cf, w2f_hh)
        hb, cb = cell(gx2b[tb * B1:(tb + 1) * B1], hb, cb, w2b_hh)
        h2_sc[t, :, :Hd] = hf
        h2_sc[tb, :, Hd:] = hb

    # ---- attnLoss hot path on the VMEM-resident layer-2 output ----
    hid = h2_sc[...]                             # (L, B1, H) f32
    m = mask_ref[...]                            # (L, B1)    f32 (1.0 / 0.0)

    # normalize(hidden) then mask-fill with zeros (same as the reference).
    nsq = jnp.sum(hid * hid, axis=-1, keepdims=True)
    hid = hid * lax.rsqrt(jnp.maximum(nsq, 1e-24))
    hid = hid * m[..., None]

    x = hid[:, 0, :]                             # (L, H)   sequence 0 == x
    y = hid[:, 1:, :]                            # (L, By, H)
    y_score = jnp.sum(y, axis=0)                 # (By, H)  sum over seq dim

    # Attention 'general': score[j, l] = <W x[l] + b, y_score[j]>
    x_w = jnp.dot(x.astype(jnp.bfloat16), w_attn_ref[...],
                  preferred_element_type=jnp.float32) + b_attn_ref[...]
    score = lax.dot_general(y_score, x_w, (((1,), (1,)), ((), ())),
                            preferred_element_type=jnp.float32)     # (By, L)
    score = score * (1.0 / temperature)
    xm = xmask_ref[...]                          # (1, L)
    score = jnp.where(xm > 0.0, score, jnp.float32(-1e8))

    # softmax over the sequence dim (EUP reciprocal for the denominator)
    smax = jnp.max(score, axis=-1, keepdims=True)
    e = jnp.exp(score - smax)
    attn = e * pl.reciprocal(jnp.sum(e, axis=-1, keepdims=True), approx=True)

    # x_embed[j, h] = sum_l attn[j, l] * x[l, h]
    x_embed = jnp.dot(attn, x, preferred_element_type=jnp.float32)  # (By, H)
    x_last = x[L - 1:L, :]                                           # (1, H)
    y_embed = hid[L - 1, 1:, :]                                      # (By, H)

    # cat=True: normalize(concat(x_embed, x_last)) -- factored so the concat
    # is never built:  ||cat||^2 = ||x_embed||^2 + ||x_last||^2, and the W1
    # matmul is split into three row blocks of the pre-transposed weight.
    nsq2 = (jnp.sum(x_embed * x_embed, axis=-1, keepdims=True)
            + jnp.sum(x_last * x_last, axis=-1, keepdims=True))      # (By, 1)
    inv_n = lax.rsqrt(jnp.maximum(nsq2, 1e-24))

    w1 = w1_ref[...]                             # (3H, 3H) bf16, transposed
    pre = (jnp.dot(x_embed.astype(jnp.bfloat16), w1[:H],
                   preferred_element_type=jnp.float32)
           + jnp.dot(x_last.astype(jnp.bfloat16), w1[H:2 * H],
                     preferred_element_type=jnp.float32)) * inv_n
    hp = jnp.tanh(pre
                  + jnp.dot(y_embed.astype(jnp.bfloat16), w1[2 * H:],
                            preferred_element_type=jnp.float32)
                  + b1_ref[...])
    sim = jnp.sum(hp * w2_ref[...], axis=-1, keepdims=True) + b2_ref[...]

    attn_out_ref[...] = attn
    sim_out_ref[...] = sim


def fused_token_attn_pallas(emb, mask_lb, xmask, lstm_packed,
                            attn_params, sim_params, temperature):
    """emb: (Bx, L*B1, E) bf16 -> (attn (Bx, By, L), sim (Bx, By, 1))."""
    Bx, LB1, E = emb.shape
    _, L, B1 = mask_lb.shape
    By = B1 - 1
    l1_wih, l1_whh, l1_b, l2_wih, l2_whh, l2_b = lstm_packed
    Hd = l1_whh.shape[1]
    G = 4 * Hd
    H = 2 * Hd
    TH = 3 * H
    w_attn_t, b_attn = attn_params
    w1_t, b1, w2, b2 = sim_params

    kernel = functools.partial(fused_token_attn_kernel, L=L, B1=B1, Hd=Hd,
                               temperature=float(temperature))
    attn_out, sim_out = pl.pallas_call(
        kernel,
        out_shape=(jax.ShapeDtypeStruct((Bx, By, L), jnp.float32),
                   jax.ShapeDtypeStruct((Bx, By, 1), jnp.float32)),
        grid_spec=pltpu.PrefetchScalarGridSpec(
            num_scalar_prefetch=0,
            grid=(Bx,),
            in_specs=[
                pl.BlockSpec((None, LB1, E), lambda b: (b, 0, 0)),
                pl.BlockSpec((None, L, B1), lambda b: (b, 0, 0)),
                pl.BlockSpec((None, 1, L), lambda b: (b, 0, 0)),
                pl.BlockSpec((2, E, G), lambda b: (0, 0, 0)),
                pl.BlockSpec((2, Hd, G), lambda b: (0, 0, 0)),
                pl.BlockSpec((2, 1, G), lambda b: (0, 0, 0)),
                pl.BlockSpec((2, H, G), lambda b: (0, 0, 0)),
                pl.BlockSpec((2, Hd, G), lambda b: (0, 0, 0)),
                pl.BlockSpec((2, 1, G), lambda b: (0, 0, 0)),
                pl.BlockSpec((H, H), lambda b: (0, 0)),
                pl.BlockSpec((1, H), lambda b: (0, 0)),
                pl.BlockSpec((TH, TH), lambda b: (0, 0)),
                pl.BlockSpec((1, TH), lambda b: (0, 0)),
                pl.BlockSpec((1, TH), lambda b: (0, 0)),
                pl.BlockSpec((1, 1), lambda b: (0, 0)),
            ],
            out_specs=[
                pl.BlockSpec((None, By, L), lambda b: (b, 0, 0)),
                pl.BlockSpec((None, By, 1), lambda b: (b, 0, 0)),
            ],
            scratch_shapes=[
                pltpu.VMEM((LB1, H), jnp.float32),     # layer-1 output
                pltpu.VMEM((L, B1, H), jnp.float32),   # layer-2 output
            ],
        ),
        compiler_params=pltpu.CompilerParams(
            dimension_semantics=("parallel",)),
    )(emb, mask_lb, xmask, l1_wih, l1_whh, l1_b, l2_wih, l2_whh, l2_b,
      w_attn_t, b_attn, w1_t, b1, w2, b2)
    return attn_out, sim_out


# ----------------------------------------------------------------------------
# Full forward (glue around the single fused Pallas kernel)
# ----------------------------------------------------------------------------
def forward(emb_table, lstm_packed, attn_params, sim_params,
            input_ids_x, input_ids_y, y_label, x_mask, y_mask,
            temperature=1.0):
    Bx, L = input_ids_x.shape
    By = input_ids_y.shape[1]
    B1 = 1 + By
    E = emb_table.shape[1]

    input_ids = jnp.concatenate([input_ids_x[:, None, :], input_ids_y], axis=1)
    input_mask = jnp.concatenate([x_mask[:, None, :], y_mask], axis=1)

    # Gather embeddings directly into the kernel's time-major (Bx, L*B1, E)
    # layout and cast to bf16 (MXU-native input).
    ids_t = jnp.transpose(input_ids, (0, 2, 1))           # (Bx, L, B1)
    emb = jnp.take(emb_table, ids_t, axis=0)              # (Bx, L, B1, E)
    emb = emb.reshape(Bx, L * B1, E).astype(jnp.bfloat16)
    # TODO(synk): at word2vec scale (E~300, large vocab) gather the rows inside
    # the Pallas pipeline (scalar-prefetched ids) instead of materializing emb.

    mask_f = input_mask.astype(jnp.float32)               # (Bx, B1, L)
    mask_lb = jnp.transpose(mask_f, (0, 2, 1))            # (Bx, L, B1)
    xmask = mask_f[:, 0:1, :]                             # (Bx, 1, L)

    attn, sim3 = fused_token_attn_pallas(
        emb, mask_lb, xmask, lstm_packed, attn_params, sim_params, temperature)
    sim = sim3.reshape(Bx, By)

    mse_loss = (sim - y_label) ** 2
    # NOTE: the reference overwrites the pos-weighted mean with the plain mean.
    mse = jnp.mean(mse_loss)
    pos_wrong = jnp.sum((y_label == 1.0) & (sim < 0))
    neg_wrong = jnp.sum((y_label == -1.0) & (sim > 0))
    pos_count = jnp.sum(y_label == 1.0)
    neg_count = jnp.sum(y_label == -1.0)
    return mse, (attn, sim, y_label, pos_wrong, neg_wrong, pos_count, neg_count)


# ----------------------------------------------------------------------------
# Parameter construction (PyTorch layout -> packed kernel layout, bf16 weights)
# ----------------------------------------------------------------------------
def _uniform(key, shape, bound):
    return jax.random.uniform(key, shape, jnp.float32, -bound, bound)


def _reorder_gates(w, Hd):
    # PyTorch gate order (i, f, g, o) -> kernel order (i, f, o, g)
    i = w[0 * Hd:1 * Hd]
    f = w[1 * Hd:2 * Hd]
    g = w[2 * Hd:3 * Hd]
    o = w[3 * Hd:4 * Hd]
    return jnp.concatenate([i, f, o, g], axis=0)


def pack_bilstm_layer(fwd, bwd, Hd):
    """fwd/bwd: (W_ih, W_hh, b_ih, b_hh) in PyTorch nn.LSTM layout."""
    def prep(W_ih, W_hh, b_ih, b_hh):
        wih = _reorder_gates(W_ih, Hd).T.astype(jnp.bfloat16)   # (in_dim, 4Hd)
        whh = _reorder_gates(W_hh, Hd).T.astype(jnp.bfloat16)   # (Hd, 4Hd)
        b = _reorder_gates((b_ih + b_hh)[:, None], Hd).T        # (1, 4Hd) f32
        return wih, whh, b
    wf, hf, bf = prep(*fwd)
    wb, hb, bb = prep(*bwd)
    return (jnp.stack([wf, wb]), jnp.stack([hf, hb]), jnp.stack([bf, bb]))


def torch_lstm_layer(key, in_dim, Hd):
    dirs = []
    for _ in range(2):
        key, k1, k2, k3, k4 = jax.random.split(key, 5)
        bound = 1.0 / np.sqrt(Hd)
        W_ih = _uniform(k1, (4 * Hd, in_dim), bound)
        W_hh = _uniform(k2, (4 * Hd, Hd), bound)
        b_ih = _uniform(k3, (4 * Hd,), bound)
        b_hh = _uniform(k4, (4 * Hd,), bound)
        dirs.append((W_ih, W_hh, b_ih, b_hh))
    return key, tuple(dirs)


if __name__ == "__main__":
    # Small shapes implied by the forward: batch_x=2, batch_y=3, seq=8,
    # embedding dim=16, lstm_hidden_dim=32 (=> per-direction hidden 16).
    Bx, By, L = 2, 3, 8
    V, E = 50, 16
    H = 32
    Hd = H // 2
    TH = 3 * H
    temperature = 1.0

    key = jax.random.PRNGKey(0)
    (k_emb, k_lstm, k_a1, k_a2, k_s1, k_s2, k_s3, k_s4,
     k_idx, k_idy, k_lab) = jax.random.split(key, 11)

    # TODO(synk): word2vec table is loaded from disk in the original module;
    # here it is synthesized deterministically.
    emb_table = jax.random.normal(k_emb, (V, E), jnp.float32) * 0.1

    k = k_lstm
    k, layer1 = torch_lstm_layer(k, E, Hd)
    k, layer2 = torch_lstm_layer(k, 2 * Hd, Hd)
    l1_wih, l1_whh, l1_b = pack_bilstm_layer(*layer1, Hd=Hd)
    l2_wih, l2_whh, l2_b = pack_bilstm_layer(*layer2, Hd=Hd)
    lstm_packed = (l1_wih, l1_whh, l1_b, l2_wih, l2_whh, l2_b)

    # Attention 'general' linear: H -> H
    ba = 1.0 / np.sqrt(H)
    W_attn = _uniform(k_a1, (H, H), ba)
    b_attn = _uniform(k_a2, (H,), ba)[None, :]
    attn_params = (W_attn.T.astype(jnp.bfloat16), b_attn)

    # Similarity 'perceptron': Linear(3H, 3H) + Linear(3H, 1)
    bs = 1.0 / np.sqrt(TH)
    W1 = _uniform(k_s1, (TH, TH), bs)
    b1 = _uniform(k_s2, (TH,), bs)[None, :]
    W2 = _uniform(k_s3, (1, TH), bs)
    b2 = _uniform(k_s4, (1,), bs)[None, :]                  # (1, 1)
    sim_params = (W1.T.astype(jnp.bfloat16), b1, W2, b2)

    # Inputs
    input_ids_x = jax.random.randint(k_idx, (Bx, L), 0, V)
    input_ids_y = jax.random.randint(k_idy, (Bx, By, L), 0, V)
    y_label = jnp.where(jax.random.bernoulli(k_lab, 0.5, (Bx, By)),
                        1.0, -1.0).astype(jnp.float32)
    x_len = jnp.array([L, L - 2], jnp.int32)
    x_mask = jnp.arange(L)[None, :] < x_len[:, None]
    y_len = jnp.array([[L, L - 1, L - 3], [L - 2, L, L - 4]], jnp.int32)
    y_mask = jnp.arange(L)[None, None, :] < y_len[..., None]

    mse, (attn, sim, yl, pw, nw, pc, nc) = forward(
        emb_table, lstm_packed, attn_params, sim_params,
        input_ids_x, input_ids_y, y_label, x_mask, y_mask, temperature)

    jax.block_until_ready((mse, attn, sim, pw, nw, pc, nc))
    assert attn.shape == (Bx, By, L) and sim.shape == (Bx, By)
    assert bool(jnp.isfinite(mse))
    assert bool(jnp.all(jnp.isfinite(attn))) and bool(jnp.all(jnp.isfinite(sim)))
    print("KERNEL_OK")
</pallas_src>

<mosaic_0001>
module attributes {stable_mosaic.version = 11 : i64} {
  func.func @fused_token_attn_kernel(%arg0: i32, %arg1: memref<1x32x16xbf16, #tpu.memory_space<vmem>>, %arg2: memref<1x8x4xf32, #tpu.memory_space<vmem>>, %arg3: memref<1x1x8xf32, #tpu.memory_space<vmem>>, %arg4: memref<2x16x64xbf16, #tpu.memory_space<vmem>>, %arg5: memref<2x16x64xbf16, #tpu.memory_space<vmem>>, %arg6: memref<2x1x64xf32, #tpu.memory_space<vmem>>, %arg7: memref<2x32x64xbf16, #tpu.memory_space<vmem>>, %arg8: memref<2x16x64xbf16, #tpu.memory_space<vmem>>, %arg9: memref<2x1x64xf32, #tpu.memory_space<vmem>>, %arg10: memref<32x32xbf16, #tpu.memory_space<vmem>>, %arg11: memref<1x32xf32, #tpu.memory_space<vmem>>, %arg12: memref<96x96xbf16, #tpu.memory_space<vmem>>, %arg13: memref<1x96xf32, #tpu.memory_space<vmem>>, %arg14: memref<1x96xf32, #tpu.memory_space<vmem>>, %arg15: memref<1x1xf32, #tpu.memory_space<vmem>>, %arg16: memref<1x3x8xf32, #tpu.memory_space<vmem>>, %arg17: memref<1x3x1xf32, #tpu.memory_space<vmem>>, %arg18: memref<32x32xf32, #tpu.memory_space<vmem>>, %arg19: memref<8x4x32xf32, #tpu.memory_space<vmem>>) attributes {dimension_semantics = [#tpu.dimension_semantics<parallel>], iteration_bounds = array<i64: 2>, scalar_prefetch = 0 : i64, scratch_operands = 2 : i64, tpu.core_type = #tpu.core_type<tc>, window_params = [{transform_indices = @transform_0, window_bounds = array<i64: 1, 32, 16>}, {transform_indices = @transform_1, window_bounds = array<i64: 1, 8, 4>}, {transform_indices = @transform_2, window_bounds = array<i64: 1, 1, 8>}, {pipeline_mode = #tpu.pipeline_mode<synchronous>, transform_indices = @transform_3, window_bounds = array<i64: 2, 16, 64>}, {pipeline_mode = #tpu.pipeline_mode<synchronous>, transform_indices = @transform_4, window_bounds = array<i64: 2, 16, 64>}, {pipeline_mode = #tpu.pipeline_mode<synchronous>, transform_indices = @transform_5, window_bounds = array<i64: 2, 1, 64>}, {pipeline_mode = #tpu.pipeline_mode<synchronous>, transform_indices = @transform_6, window_bounds = array<i64: 2, 32, 64>}, {pipeline_mode = #tpu.pipeline_mode<synchronous>, transform_indices = @transform_7, window_bounds = array<i64: 2, 16, 64>}, {pipeline_mode = #tpu.pipeline_mode<synchronous>, transform_indices = @transform_8, window_bounds = array<i64: 2, 1, 64>}, {pipeline_mode = #tpu.pipeline_mode<synchronous>, transform_indices = @transform_9, window_bounds = array<i64: 32, 32>}, {pipeline_mode = #tpu.pipeline_mode<synchronous>, transform_indices = @transform_10, window_bounds = array<i64: 1, 32>}, {pipeline_mode = #tpu.pipeline_mode<synchronous>, transform_indices = @transform_11, window_bounds = array<i64: 96, 96>}, {pipeline_mode = #tpu.pipeline_mode<synchronous>, transform_indices = @transform_12, window_bounds = array<i64: 1, 96>}, {pipeline_mode = #tpu.pipeline_mode<synchronous>, transform_indices = @transform_13, window_bounds = array<i64: 1, 96>}, {pipeline_mode = #tpu.pipeline_mode<synchronous>, transform_indices = @transform_14, window_bounds = array<i64: 1, 1>}, {transform_indices = @transform_15, window_bounds = array<i64: 1, 3, 8>}, {transform_indices = @transform_16, window_bounds = array<i64: 1, 3, 1>}]} {
    %c0 = arith.constant 0 : index
    %c0_0 = arith.constant 0 : index
    %c0_1 = arith.constant 0 : index
    %0 = vector.load %arg1[%c0, %c0_0, %c0_1] : memref<1x32x16xbf16, #tpu.memory_space<vmem>>, vector<1x32x16xbf16>
    %1 = vector.shape_cast %0 : vector<1x32x16xbf16> to vector<32x16xbf16>
    %cst = arith.constant 0.000000e+00 : f32
    %2 = vector.broadcast %cst : f32 to vector<4x16xf32>
    %c0_2 = arith.constant 0 : index
    %c0_3 = arith.constant 0 : index
    %c0_4 = arith.constant 0 : index
    %3 = vector.load %arg4[%c0_2, %c0_3, %c0_4] : memref<2x16x64xbf16, #tpu.memory_space<vmem>>, vector<1x16x64xbf16>
    %4 = vector.shape_cast %3 : vector<1x16x64xbf16> to vector<16x64xbf16>
    %cst_5 = arith.constant dense<0.000000e+00> : vector<32x64xf32>
    %5 = tpu.matmul %1, %4, %cst_5 {dimension_numbers = #tpu.dot_dimension_numbers<[1], [0], [0], [1], [0, 0, 1, 1], [], []>} : vector<32x16xbf16>, vector<16x64xbf16>, vector<32x64xf32> -> vector<32x64xf32>
    %c0_6 = arith.constant 0 : index
    %c0_7 = arith.constant 0 : index
    %c0_8 = arith.constant 0 : index
    %6 = vector.load %arg6[%c0_6, %c0_7, %c0_8] : memref<2x1x64xf32, #tpu.memory_space<vmem>>, vector<1x1x64xf32>
    %7 = vector.shape_cast %6 : vector<1x1x64xf32> to vector<1x64xf32>
    %8 = vector.broadcast %7 : vector<1x64xf32> to vector<32x64xf32>
    %9 = arith.addf %5, %8 : vector<32x64xf32>
    %c1 = arith.constant 1 : index
    %c0_9 = arith.constant 0 : index
    %c0_10 = arith.constant 0 : index
    %10 = vector.load %arg4[%c1, %c0_9, %c0_10] : memref<2x16x64xbf16, #tpu.memory_space<vmem>>, vector<1x16x64xbf16>
    %11 = vector.shape_cast %10 : vector<1x16x64xbf16> to vector<16x64xbf16>
    %cst_11 = arith.constant dense<0.000000e+00> : vector<32x64xf32>
    %12 = tpu.matmul %1, %11, %cst_11 {dimension_numbers = #tpu.dot_dimension_numbers<[1], [0], [0], [1], [0, 0, 1, 1], [], []>} : vector<32x16xbf16>, vector<16x64xbf16>, vector<32x64xf32> -> vector<32x64xf32>
    %c1_12 = arith.constant 1 : index
    %c0_13 = arith.constant 0 : index
    %c0_14 = arith.constant 0 : index
    %13 = vector.load %arg6[%c1_12, %c0_13, %c0_14] : memref<2x1x64xf32, #tpu.memory_space<vmem>>, vector<1x1x64xf32>
    %14 = vector.shape_cast %13 : vector<1x1x64xf32> to vector<1x64xf32>
    %15 = vector.broadcast %14 : vector<1x64xf32> to vector<32x64xf32>
    %16 = arith.addf %12, %15 : vector<32x64xf32>
    %c0_15 = arith.constant 0 : index
    %c0_16 = arith.constant 0 : index
    %c0_17 = arith.constant 0 : index
    %17 = vector.load %arg5[%c0_15, %c0_16, %c0_17] : memref<2x16x64xbf16, #tpu.memory_space<vmem>>, vector<1x16x64xbf16>
    %18 = vector.shape_cast %17 : vector<1x16x64xbf16> to vector<16x64xbf16>
    %c1_18 = arith.constant 1 : index
    %c0_19 = arith.constant 0 : index
    %c0_20 = arith.constant 0 : index
    %19 = vector.load %arg5[%c1_18, %c0_19, %c0_20] : memref<2x16x64xbf16, #tpu.memory_space<vmem>>, vector<1x16x64xbf16>
    %20 = vector.shape_cast %19 : vector<1x16x64xbf16> to vector<16x64xbf16>
    %21 = vector.extract_strided_slice %9 {offsets = [0, 0], sizes = [4, 64], strides = [1, 1]} : vector<32x64xf32> to vector<4x64xf32>
    %22 = arith.truncf %2 : vector<4x16xf32> to vector<4x16xbf16>
    %cst_21 = arith.constant dense<0.000000e+00> : vector<4x64xf32>
    %23 = tpu.matmul %22, %18, %cst_21 {dimension_numbers = #tpu.dot_dimension_numbers<[1], [0], [0], [1], [0, 0, 1, 1], [], []>} : vector<4x16xbf16>, vector<16x64xbf16>, vector<4x64xf32> -> vector<4x64xf32>
    %24 = arith.addf %21, %23 : vector<4x64xf32>
    %25 = vector.extract_strided_slice %24 {offsets = [0, 0], sizes = [4, 48], strides = [1, 1]} : vector<4x64xf32> to vector<4x48xf32>
    %26 = arith.negf %25 : vector<4x48xf32>
    %27 = math.exp %26 : vector<4x48xf32>
    %cst_22 = arith.constant 1.000000e+00 : f32
    %28 = vector.broadcast %cst_22 : f32 to vector<4x48xf32>
    %29 = arith.addf %28, %27 : vector<4x48xf32>
    %30 = arith.divf %28, %29 : vector<4x48xf32>
    %31 = vector.extract_strided_slice %24 {offsets = [0, 48], sizes = [4, 16], strides = [1, 1]} : vector<4x64xf32> to vector<4x16xf32>
    %32 = math.tanh %31 : vector<4x16xf32>
    %33 = vector.extract_strided_slice %30 {offsets = [0, 0], sizes = [4, 16], strides = [1, 1]} : vector<4x48xf32> to vector<4x16xf32>
    %34 = vector.extract_strided_slice %30 {offsets = [0, 16], sizes = [4, 16], strides = [1, 1]} : vector<4x48xf32> to vector<4x16xf32>
    %35 = vector.extract_strided_slice %30 {offsets = [0, 32], sizes = [4, 16], strides = [1, 1]} : vector<4x48xf32> to vector<4x16xf32>
    %36 = arith.mulf %34, %2 : vector<4x16xf32>
    %37 = arith.mulf %33, %32 : vector<4x16xf32>
    %38 = arith.addf %36, %37 : vector<4x16xf32>
    %39 = math.tanh %38 : vector<4x16xf32>
    %40 = arith.mulf %35, %39 : vector<4x16xf32>
    %41 = vector.extract_strided_slice %16 {offsets = [28, 0], sizes = [4, 64], strides = [1, 1]} : vector<32x64xf32> to vector<4x64xf32>
    %42 = arith.truncf %2 : vector<4x16xf32> to vector<4x16xbf16>
    %cst_23 = arith.constant dense<0.000000e+00> : vector<4x64xf32>
    %43 = tpu.matmul %42, %20, %cst_23 {dimension_numbers = #tpu.dot_dimension_numbers<[1], [0], [0], [1], [0, 0, 1, 1], [], []>} : vector<4x16xbf16>, vector<16x64xbf16>, vector<4x64xf32> -> vector<4x64xf32>
    %44 = arith.addf %41, %43 : vector<4x64xf32>
    %45 = vector.extract_strided_slice %44 {offsets = [0, 0], sizes = [4, 48], strides = [1, 1]} : vector<4x64xf32> to vector<4x48xf32>
    %46 = arith.negf %45 : vector<4x48xf32>
    %47 = math.exp %46 : vector<4x48xf32>
    %cst_24 = arith.constant 1.000000e+00 : f32
    %48 = vector.broadcast %cst_24 : f32 to vector<4x48xf32>
    %49 = arith.addf %48, %47 : vector<4x48xf32>
    %50 = arith.divf %48, %49 : vector<4x48xf32>
    %51 = vector.extract_strided_slice %44 {offsets = [0, 48], sizes = [4, 16], strides = [1, 1]} : vector<4x64xf32> to vector<4x16xf32>
    %52 = math.tanh %51 : vector<4x16xf32>
    %53 = vector.extract_strided_slice %50 {offsets = [0, 0], sizes = [4, 16], strides = [1, 1]} : vector<4x48xf32> to vector<4x16xf32>
    %54 = vector.extract_strided_slice %50 {offsets = [0, 16], sizes = [4, 16], strides = [1, 1]} : vector<4x48xf32> to vector<4x16xf32>
    %55 = vector.extract_strided_slice %50 {offsets = [0, 32], sizes = [4, 16], strides = [1, 1]} : vector<4x48xf32> to vector<4x16xf32>
    %56 = arith.mulf %54, %2 : vector<4x16xf32>
    %57 = arith.mulf %53, %52 : vector<4x16xf32>
    %58 = arith.addf %56, %57 : vector<4x16xf32>
    %59 = math.tanh %58 : vector<4x16xf32>
    %60 = arith.mulf %55, %59 : vector<4x16xf32>
    %c0_25 = arith.constant 0 : index
    %c0_26 = arith.constant 0 : index
    %61 = vector.load %arg18[%c0_25, %c0_26] : memref<32x32xf32, #tpu.memory_space<vmem>>, vector<4x16xf32>
    tpu.vector_store %arg18[%c0_25, %c0_26], %40 {strides = array<i32>} : memref<32x32xf32, #tpu.memory_space<vmem>>, vector<4x16xf32>,
    %c28 = arith.constant 28 : index
    %c16 = arith.constant 16 : index
    %62 = vector.load %arg18[%c28, %c16] : memref<32x32xf32, #tpu.memory_space<vmem>>, vector<4x16xf32>
    tpu.vector_store %arg18[%c28, %c16], %60 {strides = array<i32>} : memref<32x32xf32, #tpu.memory_space<vmem>>, vector<4x16xf32>,
    %63 = vector.extract_strided_slice %9 {offsets = [4, 0], sizes = [4, 64], strides = [1, 1]} : vector<32x64xf32> to vector<4x64xf32>
    %64 = arith.truncf %40 : vector<4x16xf32> to vector<4x16xbf16>
    %cst_27 = arith.constant dense<0.000000e+00> : vector<4x64xf32>
    %65 = tpu.matmul %64, %18, %cst_27 {dimension_numbers = #tpu.dot_dimension_numbers<[1], [0], [0], [1], [0, 0, 1, 1], [], []>} : vector<4x16xbf16>, vector<16x64xbf16>, vector<4x64xf32> -> vector<4x64xf32>
    %66 = arith.addf %63, %65 : vector<4x64xf32>
    %67 = vector.extract_strided_slice %66 {offsets = [0, 0], sizes = [4, 48], strides = [1, 1]} : vector<4x64xf32> to vector<4x48xf32>
    %68 = arith.negf %67 : vector<4x48xf32>
    %69 = math.exp %68 : vector<4x48xf32>
    %cst_28 = arith.constant 1.000000e+00 : f32
    %70 = vector.broadcast %cst_28 : f32 to vector<4x48xf32>
    %71 = arith.addf %70, %69 : vector<4x48xf32>
    %72 = arith.divf %70, %71 : vector<4x48xf32>
    %73 = vector.extract_strided_slice %66 {offsets = [0, 48], sizes = [4, 16], strides = [1, 1]} : vector<4x64xf32> to vector<4x16xf32>
    %74 = math.tanh %73 : vector<4x16xf32>
    %75 = vector.extract_strided_slice %72 {offsets = [0, 0], sizes = [4, 16], strides = [1, 1]} : vector<4x48xf32> to vector<4x16xf32>
    %76 = vector.extract_strided_slice %72 {offsets = [0, 16], sizes = [4, 16], strides = [1, 1]} : vector<4x48xf32> to vector<4x16xf32>
    %77 = vector.extract_strided_slice %72 {offsets = [0, 32], sizes = [4, 16], strides = [1, 1]} : vector<4x48xf32> to vector<4x16xf32>
    %78 = arith.mulf %76, %38 : vector<4x16xf32>
    %79 = arith.mulf %75, %74 : vector<4x16xf32>
    %80 = arith.addf %78, %79 : vector<4x16xf32>
    %81 = math.tanh %80 : vector<4x16xf32>
    %82 = arith.mulf %77, %81 : vector<4x16xf32>
    %83 = vector.extract_strided_slice %16 {offsets = [24, 0], sizes = [4, 64], strides = [1, 1]} : vector<32x64xf32> to vector<4x64xf32>
    %84 = arith.truncf %60 : vector<4x16xf32> to vector<4x16xbf16>
    %cst_29 = arith.constant dense<0.000000e+00> : vector<4x64xf32>
    %85 = tpu.matmul %84, %20, %cst_29 {dimension_numbers = #tpu.dot_dimension_numbers<[1], [0], [0], [1], [0, 0, 1, 1], [], []>} : vector<4x16xbf16>, vector<16x64xbf16>, vector<4x64xf32> -> vector<4x64xf32>
    %86 = arith.addf %83, %85 : vector<4x64xf32>
    %87 = vector.extract_strided_slice %86 {offsets = [0, 0], sizes = [4, 48], strides = [1, 1]} : vector<4x64xf32> to vector<4x48xf32>
    %88 = arith.negf %87 : vector<4x48xf32>
    %89 = math.exp %88 : vector<4x48xf32>
    %cst_30 = arith.constant 1.000000e+00 : f32
    %90 = vector.broadcast %cst_30 : f32 to vector<4x48xf32>
    %91 = arith.addf %90, %89 : vector<4x48xf32>
    %92 = arith.divf %90, %91 : vector<4x48xf32>
    %93 = vector.extract_strided_slice %86 {offsets = [0, 48], sizes = [4, 16], strides = [1, 1]} : vector<4x64xf32> to vector<4x16xf32>
    %94 = math.tanh %93 : vector<4x16xf32>
    %95 = vector.extract_strided_slice %92 {offsets = [0, 0], sizes = [4, 16], strides = [1, 1]} : vector<4x48xf32> to vector<4x16xf32>
    %96 = vector.extract_strided_slice %92 {offsets = [0, 16], sizes = [4, 16], strides = [1, 1]} : vector<4x48xf32> to vector<4x16xf32>
    %97 = vector.extract_strided_slice %92 {offsets = [0, 32], sizes = [4, 16], strides = [1, 1]} : vector<4x48xf32> to vector<4x16xf32>
    %98 = arith.mulf %96, %58 : vector<4x16xf32>
    %99 = arith.mulf %95, %94 : vector<4x16xf32>
    %100 = arith.addf %98, %99 : vector<4x16xf32>
    %101 = math.tanh %100 : vector<4x16xf32>
    %102 = arith.mulf %97, %101 : vector<4x16xf32>
    %c4 = arith.constant 4 : index
    %c0_31 = arith.constant 0 : index
    %103 = vector.load %arg18[%c4, %c0_31] : memref<32x32xf32, #tpu.memory_space<vmem>>, vector<4x16xf32>
    tpu.vector_store %arg18[%c4, %c0_31], %82 {strides = array<i32>} : memref<32x32xf32, #tpu.memory_space<vmem>>, vector<4x16xf32>,
    %c24 = arith.constant 24 : index
    %c16_32 = arith.constant 16 : index
    %104 = vector.load %arg18[%c24, %c16_32] : memref<32x32xf32, #tpu.memory_space<vmem>>, vector<4x16xf32>
    tpu.vector_store %arg18[%c24, %c16_32], %102 {strides = array<i32>} : memref<32x32xf32, #tpu.memory_space<vmem>>, vector<4x16xf32>,
    %105 = vector.extract_strided_slice %9 {offsets = [8, 0], sizes = [4, 64], strides = [1, 1]} : vector<32x64xf32> to vector<4x64xf32>
    %106 = arith.truncf %82 : vector<4x16xf32> to vector<4x16xbf16>
    %cst_33 = arith.constant dense<0.000000e+00> : vector<4x64xf32>
    %107 = tpu.matmul %106, %18, %cst_33 {dimension_numbers = #tpu.dot_dimension_numbers<[1], [0], [0], [1], [0, 0, 1, 1], [], []>} : vector<4x16xbf16>, vector<16x64xbf16>, vector<4x64xf32> -> vector<4x64xf32>
    %108 = arith.addf %105, %107 : vector<4x64xf32>
    %109 = vector.extract_strided_slice %108 {offsets = [0, 0], sizes = [4, 48], strides = [1, 1]} : vector<4x64xf32> to vector<4x48xf32>
    %110 = arith.negf %109 : vector<4x48xf32>
    %111 = math.exp %110 : vector<4x48xf32>
    %cst_34 = arith.constant 1.000000e+00 : f32
    %112 = vector.broadcast %cst_34 : f32 to vector<4x48xf32>
    %113 = arith.addf %112, %111 : vector<4x48xf32>
    %114 = arith.divf %112, %113 : vector<4x48xf32>
    %115 = vector.extract_strided_slice %108 {offsets = [0, 48], sizes = [4, 16], strides = [1, 1]} : vector<4x64xf32> to vector<4x16xf32>
    %116 = math.tanh %115 : vector<4x16xf32>
    %117 = vector.extract_strided_slice %114 {offsets = [0, 0], sizes = [4, 16], strides = [1, 1]} : vector<4x48xf32> to vector<4x16xf32>
    %118 = vector.extract_strided_slice %114 {offsets = [0, 16], sizes = [4, 16], strides = [1, 1]} : vector<4x48xf32> to vector<4x16xf32>
    %119 = vector.extract_strided_slice %114 {offsets = [0, 32], sizes = [4, 16], strides = [1, 1]} : vector<4x48xf32> to vector<4x16xf32>
    %120 = arith.mulf %118, %80 : vector<4x16xf32>
    %121 = arith.mulf %117, %116 : vector<4x16xf32>
    %122 = arith.addf %120, %121 : vector<4x16xf32>
    %123 = math.tanh %122 : vector<4x16xf32>
    %124 = arith.mulf %119, %123 : vector<4x16xf32>
    %125 = vector.extract_strided_slice %16 {offsets = [20, 0], sizes = [4, 64], strides = [1, 1]} : vector<32x64xf32> to vector<4x64xf32>
    %126 = arith.truncf %102 : vector<4x16xf32> to vector<4x16xbf16>
    %cst_35 = arith.constant dense<0.000000e+00> : vector<4x64xf32>
    %127 = tpu.matmul %126, %20, %cst_35 {dimension_numbers = #tpu.dot_dimension_numbers<[1], [0], [0], [1], [0, 0, 1, 1], [], []>} : vector<4x16xbf16>, vector<16x64xbf16>, vector<4x64xf32> -> vector<4x64xf32>
    %128 = arith.addf %125, %127 : vector<4x64xf32>
    %129 = vector.extract_strided_slice %128 {offsets = [0, 0], sizes = [4, 48], strides = [1, 1]} : vector<4x64xf32> to vector<4x48xf32>
    %130 = arith.negf %129 : vector<4x48xf32>
    %131 = math.exp %130 : vector<4x48xf32>
    %cst_36 = arith.constant 1.000000e+00 : f32
    %132 = vector.broadcast %cst_36 : f32 to vector<4x48xf32>
    %133 = arith.addf %132, %131 : vector<4x48xf32>
    %134 = arith.divf %132, %133 : vector<4x48xf32>
    %135 = vector.extract_strided_slice %128 {offsets = [0, 48], sizes = [4, 16], strides = [1, 1]} : vector<4x64xf32> to vector<4x16xf32>
    %136 = math.tanh %135 : vector<4x16xf32>
    %137 = vector.extract_strided_slice %134 {offsets = [0, 0], sizes = [4, 16], strides = [1, 1]} : vector<4x48xf32> to vector<4x16xf32>
    %138 = vector.extract_strided_slice %134 {offsets = [0, 16], sizes = [4, 16], strides = [1, 1]} : vector<4x48xf32> to vector<4x16xf32>
    %139 = vector.extract_strided_slice %134 {offsets = [0, 32], sizes = [4, 16], strides = [1, 1]} : vector<4x48xf32> to vector<4x16xf32>
    %140 = arith.mulf %138, %100 : vector<4x16xf32>
    %141 = arith.mulf %137, %136 : vector<4x16xf32>
    %142 = arith.addf %140, %141 : vector<4x16xf32>
    %143 = math.tanh %142 : vector<4x16xf32>
    %144 = arith.mulf %139, %143 : vector<4x16xf32>
    %c8 = arith.constant 8 : index
    %c0_37 = arith.constant 0 : index
    %145 = vector.load %arg18[%c8, %c0_37] : memref<32x32xf32, #tpu.memory_space<vmem>>, vector<4x16xf32>
    tpu.vector_store %arg18[%c8, %c0_37], %124 {strides = array<i32>} : memref<32x32xf32, #tpu.memory_space<vmem>>, vector<4x16xf32>,
    %c20 = arith.constant 20 : index
    %c16_38 = arith.constant 16 : index
    %146 = vector.load %arg18[%c20, %c16_38] : memref<32x32xf32, #tpu.memory_space<vmem>>, vector<4x16xf32>
    tpu.vector_store %arg18[%c20, %c16_38], %144 {strides = array<i32>} : memref<32x32xf32, #tpu.memory_space<vmem>>, vector<4x16xf32>,
    %147 = vector.extract_strided_slice %9 {offsets = [12, 0], sizes = [4, 64], strides = [1, 1]} : vector<32x64xf32> to vector<4x64xf32>
    %148 = arith.truncf %124 : vector<4x16xf32> to vector<4x16xbf16>
    %cst_39 = arith.constant dense<0.000000e+00> : vector<4x64xf32>
    %149 = tpu.matmul %148, %18, %cst_39 {dimension_numbers = #tpu.dot_dimension_numbers<[1], [0], [0], [1], [0, 0, 1, 1], [], []>} : vector<4x16xbf16>, vector<16x64xbf16>, vector<4x64xf32> -> vector<4x64xf32>
    %150 = arith.addf %147, %149 : vector<4x64xf32>
    %151 = vector.extract_strided_slice %150 {offsets = [0, 0], sizes = [4, 48], strides = [1, 1]} : vector<4x64xf32> to vector<4x48xf32>
    %152 = arith.negf %151 : vector<4x48xf32>
    %153 = math.exp %152 : vector<4x48xf32>
    %cst_40 = arith.constant 1.000000e+00 : f32
    %154 = vector.broadcast %cst_40 : f32 to vector<4x48xf32>
    %155 = arith.addf %154, %153 : vector<4x48xf32>
    %156 = arith.divf %154, %155 : vector<4x48xf32>
    %157 = vector.extract_strided_slice %150 {offsets = [0, 48], sizes = [4, 16], strides = [1, 1]} : vector<4x64xf32> to vector<4x16xf32>
    %158 = math.tanh %157 : vector<4x16xf32>
    %159 = vector.extract_strided_slice %156 {offsets = [0, 0], sizes = [4, 16], strides = [1, 1]} : vector<4x48xf32> to vector<4x16xf32>
    %160 = vector.extract_strided_slice %156 {offsets = [0, 16], sizes = [4, 16], strides = [1, 1]} : vector<4x48xf32> to vector<4x16xf32>
    %161 = vector.extract_strided_slice %156 {offsets = [0, 32], sizes = [4, 16], strides = [1, 1]} : vector<4x48xf32> to vector<4x16xf32>
    %162 = arith.mulf %160, %122 : vector<4x16xf32>
    %163 = arith.mulf %159, %158 : vector<4x16xf32>
    %164 = arith.addf %162, %163 : vector<4x16xf32>
    %165 = math.tanh %164 : vector<4x16xf32>
    %166 = arith.mulf %161, %165 : vector<4x16xf32>
    %167 = vector.extract_strided_slice %16 {offsets = [16, 0], sizes = [4, 64], strides = [1, 1]} : vector<32x64xf32> to vector<4x64xf32>
    %168 = arith.truncf %144 : vector<4x16xf32> to vector<4x16xbf16>
    %cst_41 = arith.constant dense<0.000000e+00> : vector<4x64xf32>
    %169 = tpu.matmul %168, %20, %cst_41 {dimension_numbers = #tpu.dot_dimension_numbers<[1], [0], [0], [1], [0, 0, 1, 1], [], []>} : vector<4x16xbf16>, vector<16x64xbf16>, vector<4x64xf32> -> vector<4x64xf32>
    %170 = arith.addf %167, %169 : vector<4x64xf32>
    %171 = vector.extract_strided_slice %170 {offsets = [0, 0], sizes = [4, 48], strides = [1, 1]} : vector<4x64xf32> to vector<4x48xf32>
    %172 = arith.negf %171 : vector<4x48xf32>
    %173 = math.exp %172 : vector<4x48xf32>
    %cst_42 = arith.constant 1.000000e+00 : f32
    %174 = vector.broadcast %cst_42 : f32 to vector<4x48xf32>
    %175 = arith.addf %174, %173 : vector<4x48xf32>
    %176 = arith.divf %174, %175 : vector<4x48xf32>
    %177 = vector.extract_strided_slice %170 {offsets = [0, 48], sizes = [4, 16], strides = [1, 1]} : vector<4x64xf32> to vector<4x16xf32>
    %178 = math.tanh %177 : vector<4x16xf32>
    %179 = vector.extract_strided_slice %176 {offsets = [0, 0], sizes = [4, 16], strides = [1, 1]} : vector<4x48xf32> to vector<4x16xf32>
    %180 = vector.extract_strided_slice %176 {offsets = [0, 16], sizes = [4, 16], strides = [1, 1]} : vector<4x48xf32> to vector<4x16xf32>
    %181 = vector.extract_strided_slice %176 {offsets = [0, 32], sizes = [4, 16], strides = [1, 1]} : vector<4x48xf32> to vector<4x16xf32>
    %182 = arith.mulf %180, %142 : vector<4x16xf32>
    %183 = arith.mulf %179, %178 : vector<4x16xf32>
    %184 = arith.addf %182, %183 : vector<4x16xf32>
    %185 = math.tanh %184 : vector<4x16xf32>
    %186 = arith.mulf %181, %185 : vector<4x16xf32>
    %c12 = arith.constant 12 : index
    %c0_43 = arith.constant 0 : index
    %187 = vector.load %arg18[%c12, %c0_43] : memref<32x32xf32, #tpu.memory_space<vmem>>, vector<4x16xf32>
    tpu.vector_store %arg18[%c12, %c0_43], %166 {strides = array<i32>} : memref<32x32xf32, #tpu.memory_space<vmem>>, vector<4x16xf32>,
    %c16_44 = arith.constant 16 : index
    %c16_45 = arith.constant 16 : index
    %188 = vector.load %arg18[%c16_44, %c16_45] : memref<32x32xf32, #tpu.memory_space<vmem>>, vector<4x16xf32>
    tpu.vector_store %arg18[%c16_44, %c16_45], %186 {strides = array<i32>} : memref<32x32xf32, #tpu.memory_space<vmem>>, vector<4x16xf32>,
    %189 = vector.extract_strided_slice %9 {offsets = [16, 0], sizes = [4, 64], strides = [1, 1]} : vector<32x64xf32> to vector<4x64xf32>
    %190 = arith.truncf %166 : vector<4x16xf32> to vector<4x16xbf16>
    %cst_46 = arith.constant dense<0.000000e+00> : vector<4x64xf32>
    %191 = tpu.matmul %190, %18, %cst_46 {dimension_numbers = #tpu.dot_dimension_numbers<[1], [0], [0], [1], [0, 0, 1, 1], [], []>} : vector<4x16xbf16>, vector<16x64xbf16>, vector<4x64xf32> -> vector<4x64xf32>
    %192 = arith.addf %189, %191 : vector<4x64xf32>
    %193 = vector.extract_strided_slice %192 {offsets = [0, 0], sizes = [4, 48], strides = [1, 1]} : vector<4x64xf32> to vector<4x48xf32>
    %194 = arith.negf %193 : vector<4x48xf32>
    %195 = math.exp %194 : vector<4x48xf32>
    %cst_47 = arith.constant 1.000000e+00 : f32
    %196 = vector.broadcast %cst_47 : f32 to vector<4x48xf32>
    %197 = arith.addf %196, %195 : vector<4x48xf32>
    %198 = arith.divf %196, %197 : vector<4x48xf32>
    %199 = vector.extract_strided_slice %192 {offsets = [0, 48], sizes = [4, 16], strides = [1, 1]} : vector<4x64xf32> to vector<4x16xf32>
    %200 = math.tanh %199 : vector<4x16xf32>
    %201 = vector.extract_strided_slice %198 {offsets = [0, 0], sizes = [4, 16], strides = [1, 1]} : vector<4x48xf32> to vector<4x16xf32>
    %202 = vector.extract_strided_slice %198 {offsets = [0, 16], sizes = [4, 16], strides = [1, 1]} : vector<4x48xf32> to vector<4x16xf32>
    %203 = vector.extract_strided_slice %198 {offsets = [0, 32], sizes = [4, 16], strides = [1, 1]} : vector<4x48xf32> to vector<4x16xf32>
    %204 = arith.mulf %202, %164 : vector<4x16xf32>
    %205 = arith.mulf %201, %200 : vector<4x16xf32>
    %206 = arith.addf %204, %205 : vector<4x16xf32>
    %207 = math.tanh %206 : vector<4x16xf32>
    %208 = arith.mulf %203, %207 : vector<4x16xf32>
    %209 = vector.extract_strided_slice %16 {offsets = [12, 0], sizes = [4, 64], strides = [1, 1]} : vector<32x64xf32> to vector<4x64xf32>
    %210 = arith.truncf %186 : vector<4x16xf32> to vector<4x16xbf16>
    %cst_48 = arith.constant dense<0.000000e+00> : vector<4x64xf32>
    %211 = tpu.matmul %210, %20, %cst_48 {dimension_numbers = #tpu.dot_dimension_numbers<[1], [0], [0], [1], [0, 0, 1, 1], [], []>} : vector<4x16xbf16>, vector<16x64xbf16>, vector<4x64xf32> -> vector<4x64xf32>
    %212 = arith.addf %209, %211 : vector<4x64xf32>
    %213 = vector.extract_strided_slice %212 {offsets = [0, 0], sizes = [4, 48], strides = [1, 1]} : vector<4x64xf32> to vector<4x48xf32>
    %214 = arith.negf %213 : vector<4x48xf32>
    %215 = math.exp %214 : vector<4x48xf32>
    %cst_49 = arith.constant 1.000000e+00 : f32
    %216 = vector.broadcast %cst_49 : f32 to vector<4x48xf32>
    %217 = arith.addf %216, %215 : vector<4x48xf32>
    %218 = arith.divf %216, %217 : vector<4x48xf32>
    %219 = vector.extract_strided_slice %212 {offsets = [0, 48], sizes = [4, 16], strides = [1, 1]} : vector<4x64xf32> to vector<4x16xf32>
    %220 = math.tanh %219 : vector<4x16xf32>
    %221 = vector.extract_strided_slice %218 {offsets = [0, 0], sizes = [4, 16], strides = [1, 1]} : vector<4x48xf32> to vector<4x16xf32>
    %222 = vector.extract_strided_slice %218 {offsets = [0, 16], sizes = [4, 16], strides = [1, 1]} : vector<4x48xf32> to vector<4x16xf32>
    %223 = vector.extract_strided_slice %218 {offsets = [0, 32], sizes = [4, 16], strides = [1, 1]} : vector<4x48xf32> to vector<4x16xf32>
    %224 = arith.mulf %222, %184 : vector<4x16xf32>
    %225 = arith.mulf %221, %220 : vector<4x16xf32>
    %226 = arith.addf %224, %225 : vector<4x16xf32>
    %227 = math.tanh %226 : vector<4x16xf32>
    %228 = arith.mulf %223, %227 : vector<4x16xf32>
    %c16_50 = arith.constant 16 : index
    %c0_51 = arith.constant 0 : index
    %229 = vector.load %arg18[%c16_50, %c0_51] : memref<32x32xf32, #tpu.memory_space<vmem>>, vector<4x16xf32>
    tpu.vector_store %arg18[%c16_50, %c0_51], %208 {strides = array<i32>} : memref<32x32xf32, #tpu.memory_space<vmem>>, vector<4x16xf32>,
    %c12_52 = arith.constant 12 : index
    %c16_53 = arith.constant 16 : index
    %230 = vector.load %arg18[%c12_52, %c16_53] : memref<32x32xf32, #tpu.memory_space<vmem>>, vector<4x16xf32>
    tpu.vector_store %arg18[%c12_52, %c16_53], %228 {strides = array<i32>} : memref<32x32xf32, #tpu.memory_space<vmem>>, vector<4x16xf32>,
    %231 = vector.extract_strided_slice %9 {offsets = [20, 0], sizes = [4, 64], strides = [1, 1]} : vector<32x64xf32> to vector<4x64xf32>
    %232 = arith.truncf %208 : vector<4x16xf32> to vector<4x16xbf16>
    %cst_54 = arith.constant dense<0.000000e+00> : vector<4x64xf32>
    %233 = tpu.matmul %232, %18, %cst_54 {dimension_numbers = #tpu.dot_dimension_numbers<[1], [0], [0], [1], [0, 0, 1, 1], [], []>} : vector<4x16xbf16>, vector<16x64xbf16>, vector<4x64xf32> -> vector<4x64xf32>
    %234 = arith.addf %231, %233 : vector<4x64xf32>
    %235 = vector.extract_strided_slice %234 {offsets = [0, 0], sizes = [4, 48], strides = [1, 1]} : vector<4x64xf32> to vector<4x48xf32>
    %236 = arith.negf %235 : vector<4x48xf32>
    %237 = math.exp %236 : vector<4x48xf32>
    %cst_55 = arith.constant 1.000000e+00 : f32
    %238 = vector.broadcast %cst_55 : f32 to vector<4x48xf32>
    %239 = arith.addf %238, %237 : vector<4x48xf32>
    %240 = arith.divf %238, %239 : vector<4x48xf32>
    %241 = vector.extract_strided_slice %234 {offsets = [0, 48], sizes = [4, 16], strides = [1, 1]} : vector<4x64xf32> to vector<4x16xf32>
    %242 = math.tanh %241 : vector<4x16xf32>
    %243 = vector.extract_strided_slice %240 {offsets = [0, 0], sizes = [4, 16], strides = [1, 1]} : vector<4x48xf32> to vector<4x16xf32>
    %244 = vector.extract_strided_slice %240 {offsets = [0, 16], sizes = [4, 16], strides = [1, 1]} : vector<4x48xf32> to vector<4x16xf32>
    %245 = vector.extract_strided_slice %240 {offsets = [0, 32], sizes = [4, 16], strides = [1, 1]} : vector<4x48xf32> to vector<4x16xf32>
    %246 = arith.mulf %244, %206 : vector<4x16xf32>
    %247 = arith.mulf %243, %242 : vector<4x16xf32>
    %248 = arith.addf %246, %247 : vector<4x16xf32>
    %249 = math.tanh %248 : vector<4x16xf32>
    %250 = arith.mulf %245, %249 : vector<4x16xf32>
    %251 = vector.extract_strided_slice %16 {offsets = [8, 0], sizes = [4, 64], strides = [1, 1]} : vector<32x64xf32> to vector<4x64xf32>
    %252 = arith.truncf %228 : vector<4x16xf32> to vector<4x16xbf16>
    %cst_56 = arith.constant dense<0.000000e+00> : vector<4x64xf32>
    %253 = tpu.matmul %252, %20, %cst_56 {dimension_numbers = #tpu.dot_dimension_numbers<[1], [0], [0], [1], [0, 0, 1, 1], [], []>} : vector<4x16xbf16>, vector<16x64xbf16>, vector<4x64xf32> -> vector<4x64xf32>
    %254 = arith.addf %251, %253 : vector<4x64xf32>
    %255 = vector.extract_strided_slice %254 {offsets = [0, 0], sizes = [4, 48], strides = [1, 1]} : vector<4x64xf32> to vector<4x48xf32>
    %256 = arith.negf %255 : vector<4x48xf32>
    %257 = math.exp %256 : vector<4x48xf32>
    %cst_57 = arith.constant 1.000000e+00 : f32
    %258 = vector.broadcast %cst_57 : f32 to vector<4x48xf32>
    %259 = arith.addf %258, %257 : vector<4x48xf32>
    %260 = arith.divf %258, %259 : vector<4x48xf32>
    %261 = vector.extract_strided_slice %254 {offsets = [0, 48], sizes = [4, 16], strides = [1, 1]} : vector<4x64xf32> to vector<4x16xf32>
    %262 = math.tanh %261 : vector<4x16xf32>
    %263 = vector.extract_strided_slice %260 {offsets = [0, 0], sizes = [4, 16], strides = [1, 1]} : vector<4x48xf32> to vector<4x16xf32>
    %264 = vector.extract_strided_slice %260 {offsets = [0, 16], sizes = [4, 16], strides = [1, 1]} : vector<4x48xf32> to vector<4x16xf32>
    %265 = vector.extract_strided_slice %260 {offsets = [0, 32], sizes = [4, 16], strides = [1, 1]} : vector<4x48xf32> to vector<4x16xf32>
    %266 = arith.mulf %264, %226 : vector<4x16xf32>
    %267 = arith.mulf %263, %262 : vector<4x16xf32>
    %268 = arith.addf %266, %267 : vector<4x16xf32>
    %269 = math.tanh %268 : vector<4x16xf32>
    %270 = arith.mulf %265, %269 : vector<4x16xf32>
    %c20_58 = arith.constant 20 : index
    %c0_59 = arith.constant 0 : index
    %271 = vector.load %arg18[%c20_58, %c0_59] : memref<32x32xf32, #tpu.memory_space<vmem>>, vector<4x16xf32>
    tpu.vector_store %arg18[%c20_58, %c0_59], %250 {strides = array<i32>} : memref<32x32xf32, #tpu.memory_space<vmem>>, vector<4x16xf32>,
    %c8_60 = arith.constant 8 : index
    %c16_61 = arith.constant 16 : index
    %272 = vector.load %arg18[%c8_60, %c16_61] : memref<32x32xf32, #tpu.memory_space<vmem>>, vector<4x16xf32>
    tpu.vector_store %arg18[%c8_60, %c16_61], %270 {strides = array<i32>} : memref<32x32xf32, #tpu.memory_space<vmem>>, vector<4x16xf32>,
    %273 = vector.extract_strided_slice %9 {offsets = [24, 0], sizes = [4, 64], strides = [1, 1]} : vector<32x64xf32> to vector<4x64xf32>
    %274 = arith.truncf %250 : vector<4x16xf32> to vector<4x16xbf16>
    %cst_62 = arith.constant dense<0.000000e+00> : vector<4x64xf32>
    %275 = tpu.matmul %274, %18, %cst_62 {dimension_numbers = #tpu.dot_dimension_numbers<[1], [0], [0], [1], [0, 0, 1, 1], [], []>} : vector<4x16xbf16>, vector<16x64xbf16>, vector<4x64xf32> -> vector<4x64xf32>
    %276 = arith.addf %273, %275 : vector<4x64xf32>
    %277 = vector.extract_strided_slice %276 {offsets = [0, 0], sizes = [4, 48], strides = [1, 1]} : vector<4x64xf32> to vector<4x48xf32>
    %278 = arith.negf %277 : vector<4x48xf32>
    %279 = math.exp %278 : vector<4x48xf32>
    %cst_63 = arith.constant 1.000000e+00 : f32
    %280 = vector.broadcast %cst_63 : f32 to vector<4x48xf32>
    %281 = arith.addf %280, %279 : vector<4x48xf32>
    %282 = arith.divf %280, %281 : vector<4x48xf32>
    %283 = vector.extract_strided_slice %276 {offsets = [0, 48], sizes = [4, 16], strides = [1, 1]} : vector<4x64xf32> to vector<4x16xf32>
    %284 = math.tanh %283 : vector<4x16xf32>
    %285 = vector.extract_strided_slice %282 {offsets = [0, 0], sizes = [4, 16], strides = [1, 1]} : vector<4x48xf32> to vector<4x16xf32>
    %286 = vector.extract_strided_slice %282 {offsets = [0, 16], sizes = [4, 16], strides = [1, 1]} : vector<4x48xf32> to vector<4x16xf32>
    %287 = vector.extract_strided_slice %282 {offsets = [0, 32], sizes = [4, 16], strides = [1, 1]} : vector<4x48xf32> to vector<4x16xf32>
    %288 = arith.mulf %286, %248 : vector<4x16xf32>
    %289 = arith.mulf %285, %284 : vector<4x16xf32>
    %290 = arith.addf %288, %289 : vector<4x16xf32>
    %291 = math.tanh %290 : vector<4x16xf32>
    %292 = arith.mulf %287, %291 : vector<4x16xf32>
    %293 = vector.extract_strided_slice %16 {offsets = [4, 0], sizes = [4, 64], strides = [1, 1]} : vector<32x64xf32> to vector<4x64xf32>
    %294 = arith.truncf %270 : vector<4x16xf32> to vector<4x16xbf16>
    %cst_64 = arith.constant dense<0.000000e+00> : vector<4x64xf32>
    %295 = tpu.matmul %294, %20, %cst_64 {dimension_numbers = #tpu.dot_dimension_numbers<[1], [0], [0], [1], [0, 0, 1, 1], [], []>} : vector<4x16xbf16>, vector<16x64xbf16>, vector<4x64xf32> -> vector<4x64xf32>
    %296 = arith.addf %293, %295 : vector<4x64xf32>
    %297 = vector.extract_strided_slice %296 {offsets = [0, 0], sizes = [4, 48], strides = [1, 1]} : vector<4x64xf32> to vector<4x48xf32>
    %298 = arith.negf %297 : vector<4x48xf32>
    %299 = math.exp %298 : vector<4x48xf32>
    %cst_65 = arith.constant 1.000000e+00 : f32
    %300 = vector.broadcast %cst_65 : f32 to vector<4x48xf32>
    %301 = arith.addf %300, %299 : vector<4x48xf32>
    %302 = arith.divf %300, %301 : vector<4x48xf32>
    %303 = vector.extract_strided_slice %296 {offsets = [0, 48], sizes = [4, 16], strides = [1, 1]} : vector<4x64xf32> to vector<4x16xf32>
    %304 = math.tanh %303 : vector<4x16xf32>
    %305 = vector.extract_strided_slice %302 {offsets = [0, 0], sizes = [4, 16], strides = [1, 1]} : vector<4x48xf32> to vector<4x16xf32>
    %306 = vector.extract_strided_slice %302 {offsets = [0, 16], sizes = [4, 16], strides = [1, 1]} : vector<4x48xf32> to vector<4x16xf32>
    %307 = vector.extract_strided_slice %302 {offsets = [0, 32], sizes = [4, 16], strides = [1, 1]} : vector<4x48xf32> to vector<4x16xf32>
    %308 = arith.mulf %306, %268 : vector<4x16xf32>
    %309 = arith.mulf %305, %304 : vector<4x16xf32>
    %310 = arith.addf %308, %309 : vector<4x16xf32>
    %311 = math.tanh %310 : vector<4x16xf32>
    %312 = arith.mulf %307, %311 : vector<4x16xf32>
    %c24_66 = arith.constant 24 : index
    %c0_67 = arith.constant 0 : index
    %313 = vector.load %arg18[%c24_66, %c0_67] : memref<32x32xf32, #tpu.memory_space<vmem>>, vector<4x16xf32>
    tpu.vector_store %arg18[%c24_66, %c0_67], %292 {strides = array<i32>} : memref<32x32xf32, #tpu.memory_space<vmem>>, vector<4x16xf32>,
    %c4_68 = arith.constant 4 : index
    %c16_69 = arith.constant 16 : index
    %314 = vector.load %arg18[%c4_68, %c16_69] : memref<32x32xf32, #tpu.memory_space<vmem>>, vector<4x16xf32>
    tpu.vector_store %arg18[%c4_68, %c16_69], %312 {strides = array<i32>} : memref<32x32xf32, #tpu.memory_space<vmem>>, vector<4x16xf32>,
    %315 = vector.extract_strided_slice %9 {offsets = [28, 0], sizes = [4, 64], strides = [1, 1]} : vector<32x64xf32> to vector<4x64xf32>
    %316 = arith.truncf %292 : vector<4x16xf32> to vector<4x16xbf16>
    %cst_70 = arith.constant dense<0.000000e+00> : vector<4x64xf32>
    %317 = tpu.matmul %316, %18, %cst_70 {dimension_numbers = #tpu.dot_dimension_numbers<[1], [0], [0], [1], [0, 0, 1, 1], [], []>} : vector<4x16xbf16>, vector<16x64xbf16>, vector<4x64xf32> -> vector<4x64xf32>
    %318 = arith.addf %315, %317 : vector<4x64xf32>
    %319 = vector.extract_strided_slice %318 {offsets = [0, 0], sizes = [4, 48], strides = [1, 1]} : vector<4x64xf32> to vector<4x48xf32>
    %320 = arith.negf %319 : vector<4x48xf32>
    %321 = math.exp %320 : vector<4x48xf32>
    %cst_71 = arith.constant 1.000000e+00 : f32
    %322 = vector.broadcast %cst_71 : f32 to vector<4x48xf32>
    %323 = arith.addf %322, %321 : vector<4x48xf32>
    %324 = arith.divf %322, %323 : vector<4x48xf32>
    %325 = vector.extract_strided_slice %318 {offsets = [0, 48], sizes = [4, 16], strides = [1, 1]} : vector<4x64xf32> to vector<4x16xf32>
    %326 = math.tanh %325 : vector<4x16xf32>
    %327 = vector.extract_strided_slice %324 {offsets = [0, 0], sizes = [4, 16], strides = [1, 1]} : vector<4x48xf32> to vector<4x16xf32>
    %328 = vector.extract_strided_slice %324 {offsets = [0, 16], sizes = [4, 16], strides = [1, 1]} : vector<4x48xf32> to vector<4x16xf32>
    %329 = vector.extract_strided_slice %324 {offsets = [0, 32], sizes = [4, 16], strides = [1, 1]} : vector<4x48xf32> to vector<4x16xf32>
    %330 = arith.mulf %328, %290 : vector<4x16xf32>
    %331 = arith.mulf %327, %326 : vector<4x16xf32>
    %332 = arith.addf %330, %331 : vector<4x16xf32>
    %333 = math.tanh %332 : vector<4x16xf32>
    %334 = arith.mulf %329, %333 : vector<4x16xf32>
    %335 = vector.extract_strided_slice %16 {offsets = [0, 0], sizes = [4, 64], strides = [1, 1]} : vector<32x64xf32> to vector<4x64xf32>
    %336 = arith.truncf %312 : vector<4x16xf32> to vector<4x16xbf16>
    %cst_72 = arith.constant dense<0.000000e+00> : vector<4x64xf32>
    %337 = tpu.matmul %336, %20, %cst_72 {dimension_numbers = #tpu.dot_dimension_numbers<[1], [0], [0], [1], [0, 0, 1, 1], [], []>} : vector<4x16xbf16>, vector<16x64xbf16>, vector<4x64xf32> -> vector<4x64xf32>
    %338 = arith.addf %335, %337 : vector<4x64xf32>
    %339 = vector.extract_strided_slice %338 {offsets = [0, 0], sizes = [4, 48], strides = [1, 1]} : vector<4x64xf32> to vector<4x48xf32>
    %340 = arith.negf %339 : vector<4x48xf32>
    %341 = math.exp %340 : vector<4x48xf32>
    %cst_73 = arith.constant 1.000000e+00 : f32
    %342 = vector.broadcast %cst_73 : f32 to vector<4x48xf32>
    %343 = arith.addf %342, %341 : vector<4x48xf32>
    %344 = arith.divf %342, %343 : vector<4x48xf32>
    %345 = vector.extract_strided_slice %338 {offsets = [0, 48], sizes = [4, 16], strides = [1, 1]} : vector<4x64xf32> to vector<4x16xf32>
    %346 = math.tanh %345 : vector<4x16xf32>
    %347 = vector.extract_strided_slice %344 {offsets = [0, 0], sizes = [4, 16], strides = [1, 1]} : vector<4x48xf32> to vector<4x16xf32>
    %348 = vector.extract_strided_slice %344 {offsets = [0, 16], sizes = [4, 16], strides = [1, 1]} : vector<4x48xf32> to vector<4x16xf32>
    %349 = vector.extract_strided_slice %344 {offsets = [0, 32], sizes = [4, 16], strides = [1, 1]} : vector<4x48xf32> to vector<4x16xf32>
    %350 = arith.mulf %348, %310 : vector<4x16xf32>
    %351 = arith.mulf %347, %346 : vector<4x16xf32>
    %352 = arith.addf %350, %351 : vector<4x16xf32>
    %353 = math.tanh %352 : vector<4x16xf32>
    %354 = arith.mulf %349, %353 : vector<4x16xf32>
    %c28_74 = arith.constant 28 : index
    %c0_75 = arith.constant 0 : index
    %355 = vector.load %arg18[%c28_74, %c0_75] : memref<32x32xf32, #tpu.memory_space<vmem>>, vector<4x16xf32>
    tpu.vector_store %arg18[%c28_74, %c0_75], %334 {strides = array<i32>} : memref<32x32xf32, #tpu.memory_space<vmem>>, vector<4x16xf32>,
    %c0_76 = arith.constant 0 : index
    %c16_77 = arith.constant 16 : index
    %356 = vector.load %arg18[%c0_76, %c16_77] : memref<32x32xf32, #tpu.memory_space<vmem>>, vector<4x16xf32>
    tpu.vector_store %arg18[%c0_76, %c16_77], %354 {strides = array<i32>} : memref<32x32xf32, #tpu.memory_space<vmem>>, vector<4x16xf32>,
    %c0_78 = arith.constant 0 : index
    %c0_79 = arith.constant 0 : index
    %357 = vector.load %arg18[%c0_78, %c0_79] : memref<32x32xf32, #tpu.memory_space<vmem>>, vector<32x32xf32>
    %358 = arith.truncf %357 : vector<32x32xf32> to vector<32x32xbf16>
    %c0_80 = arith.constant 0 : index
    %c0_81 = arith.constant 0 : index
    %c0_82 = arith.constant 0 : index
    %359 = vector.load %arg7[%c0_80, %c0_81, %c0_82] : memref<2x32x64xbf16, #tpu.memory_space<vmem>>, vector<1x32x64xbf16>
    %360 = vector.shape_cast %359 : vector<1x32x64xbf16> to vector<32x64xbf16>
    %cst_83 = arith.constant dense<0.000000e+00> : vector<32x64xf32>
    %361 = tpu.matmul %358, %360, %cst_83 {dimension_numbers = #tpu.dot_dimension_numbers<[1], [0], [0], [1], [0, 0, 1, 1], [], []>} : vector<32x32xbf16>, vector<32x64xbf16>, vector<32x64xf32> -> vector<32x64xf32>
    %c0_84 = arith.constant 0 : index
    %c0_85 = arith.constant 0 : index
    %c0_86 = arith.constant 0 : index
    %362 = vector.load %arg9[%c0_84, %c0_85, %c0_86] : memref<2x1x64xf32, #tpu.memory_space<vmem>>, vector<1x1x64xf32>
    %363 = vector.shape_cast %362 : vector<1x1x64xf32> to vector<1x64xf32>
    %364 = vector.broadcast %363 : vector<1x64xf32> to vector<32x64xf32>
    %365 = arith.addf %361, %364 : vector<32x64xf32>
    %c1_87 = arith.constant 1 : index
    %c0_88 = arith.constant 0 : index
    %c0_89 = arith.constant 0 : index
    %366 = vector.load %arg7[%c1_87, %c0_88, %c0_89] : memref<2x32x64xbf16, #tpu.memory_space<vmem>>, vector<1x32x64xbf16>
    %367 = vector.shape_cast %366 : vector<1x32x64xbf16> to vector<32x64xbf16>
    %cst_90 = arith.constant dense<0.000000e+00> : vector<32x64xf32>
    %368 = tpu.matmul %358, %367, %cst_90 {dimension_numbers = #tpu.dot_dimension_numbers<[1], [0], [0], [1], [0, 0, 1, 1], [], []>} : vector<32x32xbf16>, vector<32x64xbf16>, vector<32x64xf32> -> vector<32x64xf32>
    %c1_91 = arith.constant 1 : index
    %c0_92 = arith.constant 0 : index
    %c0_93 = arith.constant 0 : index
    %369 = vector.load %arg9[%c1_91, %c0_92, %c0_93] : memref<2x1x64xf32, #tpu.memory_space<vmem>>, vector<1x1x64xf32>
    %370 = vector.shape_cast %369 : vector<1x1x64xf32> to vector<1x64xf32>
    %371 = vector.broadcast %370 : vector<1x64xf32> to vector<32x64xf32>
    %372 = arith.addf %368, %371 : vector<32x64xf32>
    %c0_94 = arith.constant 0 : index
    %c0_95 = arith.constant 0 : index
    %c0_96 = arith.constant 0 : index
    %373 = vector.load %arg8[%c0_94, %c0_95, %c0_96] : memref<2x16x64xbf16, #tpu.memory_space<vmem>>, vector<1x16x64xbf16>
    %374 = vector.shape_cast %373 : vector<1x16x64xbf16> to vector<16x64xbf16>
    %c1_97 = arith.constant 1 : index
    %c0_98 = arith.constant 0 : index
    %c0_99 = arith.constant 0 : index
    %375 = vector.load %arg8[%c1_97, %c0_98, %c0_99] : memref<2x16x64xbf16, #tpu.memory_space<vmem>>, vector<1x16x64xbf16>
    %376 = vector.shape_cast %375 : vector<1x16x64xbf16> to vector<16x64xbf16>
    %377 = vector.extract_strided_slice %365 {offsets = [0, 0], sizes = [4, 64], strides = [1, 1]} : vector<32x64xf32> to vector<4x64xf32>
    %378 = arith.truncf %2 : vector<4x16xf32> to vector<4x16xbf16>
    %cst_100 = arith.constant dense<0.000000e+00> : vector<4x64xf32>
    %379 = tpu.matmul %378, %374, %cst_100 {dimension_numbers = #tpu.dot_dimension_numbers<[1], [0], [0], [1], [0, 0, 1, 1], [], []>} : vector<4x16xbf16>, vector<16x64xbf16>, vector<4x64xf32> -> vector<4x64xf32>
    %380 = arith.addf %377, %379 : vector<4x64xf32>
    %381 = vector.extract_strided_slice %380 {offsets = [0, 0], sizes = [4, 48], strides = [1, 1]} : vector<4x64xf32> to vector<4x48xf32>
    %382 = arith.negf %381 : vector<4x48xf32>
    %383 = math.exp %382 : vector<4x48xf32>
    %cst_101 = arith.constant 1.000000e+00 : f32
    %384 = vector.broadcast %cst_101 : f32 to vector<4x48xf32>
    %385 = arith.addf %384, %383 : vector<4x48xf32>
    %386 = arith.divf %384, %385 : vector<4x48xf32>
    %387 = vector.extract_strided_slice %380 {offsets = [0, 48], sizes = [4, 16], strides = [1, 1]} : vector<4x64xf32> to vector<4x16xf32>
    %388 = math.tanh %387 : vector<4x16xf32>
    %389 = vector.extract_strided_slice %386 {offsets = [0, 0], sizes = [4, 16], strides = [1, 1]} : vector<4x48xf32> to vector<4x16xf32>
    %390 = vector.extract_strided_slice %386 {offsets = [0, 16], sizes = [4, 16], strides = [1, 1]} : vector<4x48xf32> to vector<4x16xf32>
    %391 = vector.extract_strided_slice %386 {offsets = [0, 32], sizes = [4, 16], strides = [1, 1]} : vector<4x48xf32> to vector<4x16xf32>
    %392 = arith.mulf %390, %2 : vector<4x16xf32>
    %393 = arith.mulf %389, %388 : vector<4x16xf32>
    %394 = arith.addf %392, %393 : vector<4x16xf32>
    %395 = math.tanh %394 : vector<4x16xf32>
    %396 = arith.mulf %391, %395 : vector<4x16xf32>
    %397 = vector.extract_strided_slice %372 {offsets = [28, 0], sizes = [4, 64], strides = [1, 1]} : vector<32x64xf32> to vector<4x64xf32>
    %398 = arith.truncf %2 : vector<4x16xf32> to vector<4x16xbf16>
    %cst_102 = arith.constant dense<0.000000e+00> : vector<4x64xf32>
    %399 = tpu.matmul %398, %376, %cst_102 {dimension_numbers = #tpu.dot_dimension_numbers<[1], [0], [0], [1], [0, 0, 1, 1], [], []>} : vector<4x16xbf16>, vector<16x64xbf16>, vector<4x64xf32> -> vector<4x64xf32>
    %400 = arith.addf %397, %399 : vector<4x64xf32>
    %401 = vector.extract_strided_slice %400 {offsets = [0, 0], sizes = [4, 48], strides = [1, 1]} : vector<4x64xf32> to vector<4x48xf32>
    %402 = arith.negf %401 : vector<4x48xf32>
    %403 = math.exp %402 : vector<4x48xf32>
    %cst_103 = arith.constant 1.000000e+00 : f32
    %404 = vector.broadcast %cst_103 : f32 to vector<4x48xf32>
    %405 = arith.addf %404, %403 : vector<4x48xf32>
    %406 = arith.divf %404, %405 : vector<4x48xf32>
    %407 = vector.extract_strided_slice %400 {offsets = [0, 48], sizes = [4, 16], strides = [1, 1]} : vector<4x64xf32> to vector<4x16xf32>
    %408 = math.tanh %407 : vector<4x16xf32>
    %409 = vector.extract_strided_slice %406 {offsets = [0, 0], sizes = [4, 16], strides = [1, 1]} : vector<4x48xf32> to vector<4x16xf32>
    %410 = vector.extract_strided_slice %406 {offsets = [0, 16], sizes = [4, 16], strides = [1, 1]} : vector<4x48xf32> to vector<4x16xf32>
    %411 = vector.extract_strided_slice %406 {offsets = [0, 32], sizes = [4, 16], strides = [1, 1]} : vector<4x48xf32> to vector<4x16xf32>
    %412 = arith.mulf %410, %2 : vector<4x16xf32>
    %413 = arith.mulf %409, %408 : vector<4x16xf32>
    %414 = arith.addf %412, %413 : vector<4x16xf32>
    %415 = math.tanh %414 : vector<4x16xf32>
    %416 = arith.mulf %411, %415 : vector<4x16xf32>
    %c0_104 = arith.constant 0 : index
    %c0_105 = arith.constant 0 : index
    %c0_106 = arith.constant 0 : index
    %417 = vector.load %arg19[%c0_104, %c0_105, %c0_106] : memref<8x4x32xf32, #tpu.memory_space<vmem>>, vector<1x4x16xf32>
    %418 = vector.shape_cast %417 : vector<1x4x16xf32> to vector<4x16xf32>
    %419 = vector.shape_cast %396 : vector<4x16xf32> to vector<1x4x16xf32>
    tpu.vector_store %arg19[%c0_104, %c0_105, %c0_106], %419 {strides = array<i32>} : memref<8x4x32xf32, #tpu.memory_space<vmem>>, vector<1x4x16xf32>,
    %c7 = arith.constant 7 : index
    %c0_107 = arith.constant 0 : index
    %c16_108 = arith.constant 16 : index
    %420 = vector.load %arg19[%c7, %c0_107, %c16_108] : memref<8x4x32xf32, #tpu.memory_space<vmem>>, vector<1x4x16xf32>
    %421 = vector.shape_cast %420 : vector<1x4x16xf32> to vector<4x16xf32>
    %422 = vector.shape_cast %416 : vector<4x16xf32> to vector<1x4x16xf32>
    tpu.vector_store %arg19[%c7, %c0_107, %c16_108], %422 {strides = array<i32>} : memref<8x4x32xf32, #tpu.memory_space<vmem>>, vector<1x4x16xf32>,
    %423 = vector.extract_strided_slice %365 {offsets = [4, 0], sizes = [4, 64], strides = [1, 1]} : vector<32x64xf32> to vector<4x64xf32>
    %424 = arith.truncf %396 : vector<4x16xf32> to vector<4x16xbf16>
    %cst_109 = arith.constant dense<0.000000e+00> : vector<4x64xf32>
    %425 = tpu.matmul %424, %374, %cst_109 {dimension_numbers = #tpu.dot_dimension_numbers<[1], [0], [0], [1], [0, 0, 1, 1], [], []>} : vector<4x16xbf16>, vector<16x64xbf16>, vector<4x64xf32> -> vector<4x64xf32>
    %426 = arith.addf %423, %425 : vector<4x64xf32>
    %427 = vector.extract_strided_slice %426 {offsets = [0, 0], sizes = [4, 48], strides = [1, 1]} : vector<4x64xf32> to vector<4x48xf32>
    %428 = arith.negf %427 : vector<4x48xf32>
    %429 = math.exp %428 : vector<4x48xf32>
    %cst_110 = arith.constant 1.000000e+00 : f32
    %430 = vector.broadcast %cst_110 : f32 to vector<4x48xf32>
    %431 = arith.addf %430, %429 : vector<4x48xf32>
    %432 = arith.divf %430, %431 : vector<4x48xf32>
    %433 = vector.extract_strided_slice %426 {offsets = [0, 48], sizes = [4, 16], strides = [1, 1]} : vector<4x64xf32> to vector<4x16xf32>
    %434 = math.tanh %433 : vector<4x16xf32>
    %435 = vector.extract_strided_slice %432 {offsets = [0, 0], sizes = [4, 16], strides = [1, 1]} : vector<4x48xf32> to vector<4x16xf32>
    %436 = vector.extract_strided_slice %432 {offsets = [0, 16], sizes = [4, 16], strides = [1, 1]} : vector<4x48xf32> to vector<4x16xf32>
    %437 = vector.extract_strided_slice %432 {offsets = [0, 32], sizes = [4, 16], strides = [1, 1]} : vector<4x48xf32> to vector<4x16xf32>
    %438 = arith.mulf %436, %394 : vector<4x16xf32>
    %439 = arith.mulf %435, %434 : vector<4x16xf32>
    %440 = arith.addf %438, %439 : vector<4x16xf32>
    %441 = math.tanh %440 : vector<4x16xf32>
    %442 = arith.mulf %437, %441 : vector<4x16xf32>
    %443 = vector.extract_strided_slice %372 {offsets = [24, 0], sizes = [4, 64], strides = [1, 1]} : vector<32x64xf32> to vector<4x64xf32>
    %444 = arith.truncf %416 : vector<4x16xf32> to vector<4x16xbf16>
    %cst_111 = arith.constant dense<0.000000e+00> : vector<4x64xf32>
    %445 = tpu.matmul %444, %376, %cst_111 {dimension_numbers = #tpu.dot_dimension_numbers<[1], [0], [0], [1], [0, 0, 1, 1], [], []>} : vector<4x16xbf16>, vector<16x64xbf16>, vector<4x64xf32> -> vector<4x64xf32>
    %446 = arith.addf %443, %445 : vector<4x64xf32>
    %447 = vector.extract_strided_slice %446 {offsets = [0, 0], sizes = [4, 48], strides = [1, 1]} : vector<4x64xf32> to vector<4x48xf32>
    %448 = arith.negf %447 : vector<4x48xf32>
    %449 = math.exp %448 : vector<4x48xf32>
    %cst_112 = arith.constant 1.000000e+00 : f32
    %450 = vector.broadcast %cst_112 : f32 to vector<4x48xf32>
    %451 = arith.addf %450, %449 : vector<4x48xf32>
    %452 = arith.divf %450, %451 : vector<4x48xf32>
    %453 = vector.extract_strided_slice %446 {offsets = [0, 48], sizes = [4, 16], strides = [1, 1]} : vector<4x64xf32> to vector<4x16xf32>
    %454 = math.tanh %453 : vector<4x16xf32>
    %455 = vector.extract_strided_slice %452 {offsets = [0, 0], sizes = [4, 16], strides = [1, 1]} : vector<4x48xf32> to vector<4x16xf32>
    %456 = vector.extract_strided_slice %452 {offsets = [0, 16], sizes = [4, 16], strides = [1, 1]} : vector<4x48xf32> to vector<4x16xf32>
    %457 = vector.extract_strided_slice %452 {offsets = [0, 32], sizes = [4, 16], strides = [1, 1]} : vector<4x48xf32> to vector<4x16xf32>
    %458 = arith.mulf %456, %414 : vector<4x16xf32>
    %459 = arith.mulf %455, %454 : vector<4x16xf32>
    %460 = arith.addf %458, %459 : vector<4x16xf32>
    %461 = math.tanh %460 : vector<4x16xf32>
    %462 = arith.mulf %457, %461 : vector<4x16xf32>
    %c1_113 = arith.constant 1 : index
    %c0_114 = arith.constant 0 : index
    %c0_115 = arith.constant 0 : index
    %463 = vector.load %arg19[%c1_113, %c0_114, %c0_115] : memref<8x4x32xf32, #tpu.memory_space<vmem>>, vector<1x4x16xf32>
    %464 = vector.shape_cast %463 : vector<1x4x16xf32> to vector<4x16xf32>
    %465 = vector.shape_cast %442 : vector<4x16xf32> to vector<1x4x16xf32>
    tpu.vector_store %arg19[%c1_113, %c0_114, %c0_115], %465 {strides = array<i32>} : memref<8x4x32xf32, #tpu.memory_space<vmem>>, vector<1x4x16xf32>,
    %c6 = arith.constant 6 : index
    %c0_116 = arith.constant 0 : index
    %c16_117 = arith.constant 16 : index
    %466 = vector.load %arg19[%c6, %c0_116, %c16_117] : memref<8x4x32xf32, #tpu.memory_space<vmem>>, vector<1x4x16xf32>
    %467 = vector.shape_cast %466 : vector<1x4x16xf32> to vector<4x16xf32>
    %468 = vector.shape_cast %462 : vector<4x16xf32> to vector<1x4x16xf32>
    tpu.vector_store %arg19[%c6, %c0_116, %c16_117], %468 {strides = array<i32>} : memref<8x4x32xf32, #tpu.memory_space<vmem>>, vector<1x4x16xf32>,
    %469 = vector.extract_strided_slice %365 {offsets = [8, 0], sizes = [4, 64], strides = [1, 1]} : vector<32x64xf32> to vector<4x64xf32>
    %470 = arith.truncf %442 : vector<4x16xf32> to vector<4x16xbf16>
    %cst_118 = arith.constant dense<0.000000e+00> : vector<4x64xf32>
    %471 = tpu.matmul %470, %374, %cst_118 {dimension_numbers = #tpu.dot_dimension_numbers<[1], [0], [0], [1], [0, 0, 1, 1], [], []>} : vector<4x16xbf16>, vector<16x64xbf16>, vector<4x64xf32> -> vector<4x64xf32>
    %472 = arith.addf %469, %471 : vector<4x64xf32>
    %473 = vector.extract_strided_slice %472 {offsets = [0, 0], sizes = [4, 48], strides = [1, 1]} : vector<4x64xf32> to vector<4x48xf32>
    %474 = arith.negf %473 : vector<4x48xf32>
    %475 = math.exp %474 : vector<4x48xf32>
    %cst_119 = arith.constant 1.000000e+00 : f32
    %476 = vector.broadcast %cst_119 : f32 to vector<4x48xf32>
    %477 = arith.addf %476, %475 : vector<4x48xf32>
    %478 = arith.divf %476, %477 : vector<4x48xf32>
    %479 = vector.extract_strided_slice %472 {offsets = [0, 48], sizes = [4, 16], strides = [1, 1]} : vector<4x64xf32> to vector<4x16xf32>
    %480 = math.tanh %479 : vector<4x16xf32>
    %481 = vector.extract_strided_slice %478 {offsets = [0, 0], sizes = [4, 16], strides = [1, 1]} : vector<4x48xf32> to vector<4x16xf32>
    %482 = vector.extract_strided_slice %478 {offsets = [0, 16], sizes = [4, 16], strides = [1, 1]} : vector<4x48xf32> to vector<4x16xf32>
    %483 = vector.extract_strided_slice %478 {offsets = [0, 32], sizes = [4, 16], strides = [1, 1]} : vector<4x48xf32> to vector<4x16xf32>
    %484 = arith.mulf %482, %440 : vector<4x16xf32>
    %485 = arith.mulf %481, %480 : vector<4x16xf32>
    %486 = arith.addf %484, %485 : vector<4x16xf32>
    %487 = math.tanh %486 : vector<4x16xf32>
    %488 = arith.mulf %483, %487 : vector<4x16xf32>
    %489 = vector.extract_strided_slice %372 {offsets = [20, 0], sizes = [4, 64], strides = [1, 1]} : vector<32x64xf32> to vector<4x64xf32>
    %490 = arith.truncf %462 : vector<4x16xf32> to vector<4x16xbf16>
    %cst_120 = arith.constant dense<0.000000e+00> : vector<4x64xf32>
    %491 = tpu.matmul %490, %376, %cst_120 {dimension_numbers = #tpu.dot_dimension_numbers<[1], [0], [0], [1], [0, 0, 1, 1], [], []>} : vector<4x16xbf16>, vector<16x64xbf16>, vector<4x64xf32> -> vector<4x64xf32>
    %492 = arith.addf %489, %491 : vector<4x64xf32>
    %493 = vector.extract_strided_slice %492 {offsets = [0, 0], sizes = [4, 48], strides = [1, 1]} : vector<4x64xf32> to vector<4x48xf32>
    %494 = arith.negf %493 : vector<4x48xf32>
    %495 = math.exp %494 : vector<4x48xf32>
    %cst_121 = arith.constant 1.000000e+00 : f32
    %496 = vector.broadcast %cst_121 : f32 to vector<4x48xf32>
    %497 = arith.addf %496, %495 : vector<4x48xf32>
    %498 = arith.divf %496, %497 : vector<4x48xf32>
    %499 = vector.extract_strided_slice %492 {offsets = [0, 48], sizes = [4, 16], strides = [1, 1]} : vector<4x64xf32> to vector<4x16xf32>
    %500 = math.tanh %499 : vector<4x16xf32>
    %501 = vector.extract_strided_slice %498 {offsets = [0, 0], sizes = [4, 16], strides = [1, 1]} : vector<4x48xf32> to vector<4x16xf32>
    %502 = vector.extract_strided_slice %498 {offsets = [0, 16], sizes = [4, 16], strides = [1, 1]} : vector<4x48xf32> to vector<4x16xf32>
    %503 = vector.extract_strided_slice %498 {offsets = [0, 32], sizes = [4, 16], strides = [1, 1]} : vector<4x48xf32> to vector<4x16xf32>
    %504 = arith.mulf %502, %460 : vector<4x16xf32>
    %505 = arith.mulf %501, %500 : vector<4x16xf32>
    %506 = arith.addf %504, %505 : vector<4x16xf32>
    %507 = math.tanh %506 : vector<4x16xf32>
    %508 = arith.mulf %503, %507 : vector<4x16xf32>
    %c2 = arith.constant 2 : index
    %c0_122 = arith.constant 0 : index
    %c0_123 = arith.constant 0 : index
    %509 = vector.load %arg19[%c2, %c0_122, %c0_123] : memref<8x4x32xf32, #tpu.memory_space<vmem>>, vector<1x4x16xf32>
    %510 = vector.shape_cast %509 : vector<1x4x16xf32> to vector<4x16xf32>
    %511 = vector.shape_cast %488 : vector<4x16xf32> to vector<1x4x16xf32>
    tpu.vector_store %arg19[%c2, %c0_122, %c0_123], %511 {strides = array<i32>} : memref<8x4x32xf32, #tpu.memory_space<vmem>>, vector<1x4x16xf32>,
    %c5 = arith.constant 5 : index
    %c0_124 = arith.constant 0 : index
    %c16_125 = arith.constant 16 : index
    %512 = vector.load %arg19[%c5, %c0_124, %c16_125] : memref<8x4x32xf32, #tpu.memory_space<vmem>>, vector<1x4x16xf32>
    %513 = vector.shape_cast %512 : vector<1x4x16xf32> to vector<4x16xf32>
    %514 = vector.shape_cast %508 : vector<4x16xf32> to vector<1x4x16xf32>
    tpu.vector_store %arg19[%c5, %c0_124, %c16_125], %514 {strides = array<i32>} : memref<8x4x32xf32, #tpu.memory_space<vmem>>, vector<1x4x16xf32>,
    %515 = vector.extract_strided_slice %365 {offsets = [12, 0], sizes = [4, 64], strides = [1, 1]} : vector<32x64xf32> to vector<4x64xf32>
    %516 = arith.truncf %488 : vector<4x16xf32> to vector<4x16xbf16>
    %cst_126 = arith.constant dense<0.000000e+00> : vector<4x64xf32>
    %517 = tpu.matmul %516, %374, %cst_126 {dimension_numbers = #tpu.dot_dimension_numbers<[1], [0], [0], [1], [0, 0, 1, 1], [], []>} : vector<4x16xbf16>, vector<16x64xbf16>, vector<4x64xf32> -> vector<4x64xf32>
    %518 = arith.addf %515, %517 : vector<4x64xf32>
    %519 = vector.extract_strided_slice %518 {offsets = [0, 0], sizes = [4, 48], strides = [1, 1]} : vector<4x64xf32> to vector<4x48xf32>
    %520 = arith.negf %519 : vector<4x48xf32>
    %521 = math.exp %520 : vector<4x48xf32>
    %cst_127 = arith.constant 1.000000e+00 : f32
    %522 = vector.broadcast %cst_127 : f32 to vector<4x48xf32>
    %523 = arith.addf %522, %521 : vector<4x48xf32>
    %524 = arith.divf %522, %523 : vector<4x48xf32>
    %525 = vector.extract_strided_slice %518 {offsets = [0, 48], sizes = [4, 16], strides = [1, 1]} : vector<4x64xf32> to vector<4x16xf32>
    %526 = math.tanh %525 : vector<4x16xf32>
    %527 = vector.extract_strided_slice %524 {offsets = [0, 0], sizes = [4, 16], strides = [1, 1]} : vector<4x48xf32> to vector<4x16xf32>
    %528 = vector.extract_strided_slice %524 {offsets = [0, 16], sizes = [4, 16], strides = [1, 1]} : vector<4x48xf32> to vector<4x16xf32>
    %529 = vector.extract_strided_slice %524 {offsets = [0, 32], sizes = [4, 16], strides = [1, 1]} : vector<4x48xf32> to vector<4x16xf32>
    %530 = arith.mulf %528, %486 : vector<4x16xf32>
    %531 = arith.mulf %527, %526 : vector<4x16xf32>
    %532 = arith.addf %530, %531 : vector<4x16xf32>
    %533 = math.tanh %532 : vector<4x16xf32>
    %534 = arith.mulf %529, %533 : vector<4x16xf32>
    %535 = vector.extract_strided_slice %372 {offsets = [16, 0], sizes = [4, 64], strides = [1, 1]} : vector<32x64xf32> to vector<4x64xf32>
    %536 = arith.truncf %508 : vector<4x16xf32> to vector<4x16xbf16>
    %cst_128 = arith.constant dense<0.000000e+00> : vector<4x64xf32>
    %537 = tpu.matmul %536, %376, %cst_128 {dimension_numbers = #tpu.dot_dimension_numbers<[1], [0], [0], [1], [0, 0, 1, 1], [], []>} : vector<4x16xbf16>, vector<16x64xbf16>, vector<4x64xf32> -> vector<4x64xf32>
    %538 = arith.addf %535, %537 : vector<4x64xf32>
    %539 = vector.extract_strided_slice %538 {offsets = [0, 0], sizes = [4, 48], strides = [1, 1]} : vector<4x64xf32> to vector<4x48xf32>
    %540 = arith.negf %539 : vector<4x48xf32>
    %541 = math.exp %540 : vector<4x48xf32>
    %cst_129 = arith.constant 1.000000e+00 : f32
    %542 = vector.broadcast %cst_129 : f32 to vector<4x48xf32>
    %543 = arith.addf %542, %541 : vector<4x48xf32>
    %544 = arith.divf %542, %543 : vector<4x48xf32>
    %545 = vector.extract_strided_slice %538 {offsets = [0, 48], sizes = [4, 16], strides = [1, 1]} : vector<4x64xf32> to vector<4x16xf32>
    %546 = math.tanh %545 : vector<4x16xf32>
    %547 = vector.extract_strided_slice %544 {offsets = [0, 0], sizes = [4, 16], strides = [1, 1]} : vector<4x48xf32> to vector<4x16xf32>
    %548 = vector.extract_strided_slice %544 {offsets = [0, 16], sizes = [4, 16], strides = [1, 1]} : vector<4x48xf32> to vector<4x16xf32>
    %549 = vector.extract_strided_slice %544 {offsets = [0, 32], sizes = [4, 16], strides = [1, 1]} : vector<4x48xf32> to vector<4x16xf32>
    %550 = arith.mulf %548, %506 : vector<4x16xf32>
    %551 = arith.mulf %547, %546 : vector<4x16xf32>
    %552 = arith.addf %550, %551 : vector<4x16xf32>
    %553 = math.tanh %552 : vector<4x16xf32>
    %554 = arith.mulf %549, %553 : vector<4x16xf32>
    %c3 = arith.constant 3 : index
    %c0_130 = arith.constant 0 : index
    %c0_131 = arith.constant 0 : index
    %555 = vector.load %arg19[%c3, %c0_130, %c0_131] : memref<8x4x32xf32, #tpu.memory_space<vmem>>, vector<1x4x16xf32>
    %556 = vector.shape_cast %555 : vector<1x4x16xf32> to vector<4x16xf32>
    %557 = vector.shape_cast %534 : vector<4x16xf32> to vector<1x4x16xf32>
    tpu.vector_store %arg19[%c3, %c0_130, %c0_131], %557 {strides = array<i32>} : memref<8x4x32xf32, #tpu.memory_space<vmem>>, vector<1x4x16xf32>,
    %c4_132 = arith.constant 4 : index
    %c0_133 = arith.constant 0 : index
    %c16_134 = arith.constant 16 : index
    %558 = vector.load %arg19[%c4_132, %c0_133, %c16_134] : memref<8x4x32xf32, #tpu.memory_space<vmem>>, vector<1x4x16xf32>
    %559 = vector.shape_cast %558 : vector<1x4x16xf32> to vector<4x16xf32>
    %560 = vector.shape_cast %554 : vector<4x16xf32> to vector<1x4x16xf32>
    tpu.vector_store %arg19[%c4_132, %c0_133, %c16_134], %560 {strides = array<i32>} : memref<8x4x32xf32, #tpu.memory_space<vmem>>, vector<1x4x16xf32>,
    %561 = vector.extract_strided_slice %365 {offsets = [16, 0], sizes = [4, 64], strides = [1, 1]} : vector<32x64xf32> to vector<4x64xf32>
    %562 = arith.truncf %534 : vector<4x16xf32> to vector<4x16xbf16>
    %cst_135 = arith.constant dense<0.000000e+00> : vector<4x64xf32>
    %563 = tpu.matmul %562, %374, %cst_135 {dimension_numbers = #tpu.dot_dimension_numbers<[1], [0], [0], [1], [0, 0, 1, 1], [], []>} : vector<4x16xbf16>, vector<16x64xbf16>, vector<4x64xf32> -> vector<4x64xf32>
    %564 = arith.addf %561, %563 : vector<4x64xf32>
    %565 = vector.extract_strided_slice %564 {offsets = [0, 0], sizes = [4, 48], strides = [1, 1]} : vector<4x64xf32> to vector<4x48xf32>
    %566 = arith.negf %565 : vector<4x48xf32>
    %567 = math.exp %566 : vector<4x48xf32>
    %cst_136 = arith.constant 1.000000e+00 : f32
    %568 = vector.broadcast %cst_136 : f32 to vector<4x48xf32>
    %569 = arith.addf %568, %567 : vector<4x48xf32>
    %570 = arith.divf %568, %569 : vector<4x48xf32>
    %571 = vector.extract_strided_slice %564 {offsets = [0, 48], sizes = [4, 16], strides = [1, 1]} : vector<4x64xf32> to vector<4x16xf32>
    %572 = math.tanh %571 : vector<4x16xf32>
    %573 = vector.extract_strided_slice %570 {offsets = [0, 0], sizes = [4, 16], strides = [1, 1]} : vector<4x48xf32> to vector<4x16xf32>
    %574 = vector.extract_strided_slice %570 {offsets = [0, 16], sizes = [4, 16], strides = [1, 1]} : vector<4x48xf32> to vector<4x16xf32>
    %575 = vector.extract_strided_slice %570 {offsets = [0, 32], sizes = [4, 16], strides = [1, 1]} : vector<4x48xf32> to vector<4x16xf32>
    %576 = arith.mulf %574, %532 : vector<4x16xf32>
    %577 = arith.mulf %573, %572 : vector<4x16xf32>
    %578 = arith.addf %576, %577 : vector<4x16xf32>
    %579 = math.tanh %578 : vector<4x16xf32>
    %580 = arith.mulf %575, %579 : vector<4x16xf32>
    %581 = vector.extract_strided_slice %372 {offsets = [12, 0], sizes = [4, 64], strides = [1, 1]} : vector<32x64xf32> to vector<4x64xf32>
    %582 = arith.truncf %554 : vector<4x16xf32> to vector<4x16xbf16>
    %cst_137 = arith.constant dense<0.000000e+00> : vector<4x64xf32>
    %583 = tpu.matmul %582, %376, %cst_137 {dimension_numbers = #tpu.dot_dimension_numbers<[1], [0], [0], [1], [0, 0, 1, 1], [], []>} : vector<4x16xbf16>, vector<16x64xbf16>, vector<4x64xf32> -> vector<4x64xf32>
    %584 = arith.addf %581, %583 : vector<4x64xf32>
    %585 = vector.extract_strided_slice %584 {offsets = [0, 0], sizes = [4, 48], strides = [1, 1]} : vector<4x64xf32> to vector<4x48xf32>
    %586 = arith.negf %585 : vector<4x48xf32>
    %587 = math.exp %586 : vector<4x48xf32>
    %cst_138 = arith.constant 1.000000e+00 : f32
    %588 = vector.broadcast %cst_138 : f32 to vector<4x48xf32>
    %589 = arith.addf %588, %587 : vector<4x48xf32>
    %590 = arith.divf %588, %589 : vector<4x48xf32>
    %591 = vector.extract_strided_slice %584 {offsets = [0, 48], sizes = [4, 16], strides = [1, 1]} : vector<4x64xf32> to vector<4x16xf32>
    %592 = math.tanh %591 : vector<4x16xf32>
    %593 = vector.extract_strided_slice %590 {offsets = [0, 0], sizes = [4, 16], strides = [1, 1]} : vector<4x48xf32> to vector<4x16xf32>
    %594 = vector.extract_strided_slice %590 {offsets = [0, 16], sizes = [4, 16], strides = [1, 1]} : vector<4x48xf32> to vector<4x16xf32>
    %595 = vector.extract_strided_slice %590 {offsets = [0, 32], sizes = [4, 16], strides = [1, 1]} : vector<4x48xf32> to vector<4x16xf32>
    %596 = arith.mulf %594, %552 : vector<4x16xf32>
    %597 = arith.mulf %593, %592 : vector<4x16xf32>
    %598 = arith.addf %596, %597 : vector<4x16xf32>
    %599 = math.tanh %598 : vector<4x16xf32>
    %600 = arith.mulf %595, %599 : vector<4x16xf32>
    %c4_139 = arith.constant 4 : index
    %c0_140 = arith.constant 0 : index
    %c0_141 = arith.constant 0 : index
    %601 = vector.load %arg19[%c4_139, %c0_140, %c0_141] : memref<8x4x32xf32, #tpu.memory_space<vmem>>, vector<1x4x16xf32>
    %602 = vector.shape_cast %601 : vector<1x4x16xf32> to vector<4x16xf32>
    %603 = vector.shape_cast %580 : vector<4x16xf32> to vector<1x4x16xf32>
    tpu.vector_store %arg19[%c4_139, %c0_140, %c0_141], %603 {strides = array<i32>} : memref<8x4x32xf32, #tpu.memory_space<vmem>>, vector<1x4x16xf32>,
    %c3_142 = arith.constant 3 : index
    %c0_143 = arith.constant 0 : index
    %c16_144 = arith.constant 16 : index
    %604 = vector.load %arg19[%c3_142, %c0_143, %c16_144] : memref<8x4x32xf32, #tpu.memory_space<vmem>>, vector<1x4x16xf32>
    %605 = vector.shape_cast %604 : vector<1x4x16xf32> to vector<4x16xf32>
    %606 = vector.shape_cast %600 : vector<4x16xf32> to vector<1x4x16xf32>
    tpu.vector_store %arg19[%c3_142, %c0_143, %c16_144], %606 {strides = array<i32>} : memref<8x4x32xf32, #tpu.memory_space<vmem>>, vector<1x4x16xf32>,
    %607 = vector.extract_strided_slice %365 {offsets = [20, 0], sizes = [4, 64], strides = [1, 1]} : vector<32x64xf32> to vector<4x64xf32>
    %608 = arith.truncf %580 : vector<4x16xf32> to vector<4x16xbf16>
    %cst_145 = arith.constant dense<0.000000e+00> : vector<4x64xf32>
    %609 = tpu.matmul %608, %374, %cst_145 {dimension_numbers = #tpu.dot_dimension_numbers<[1], [0], [0], [1], [0, 0, 1, 1], [], []>} : vector<4x16xbf16>, vector<16x64xbf16>, vector<4x64xf32> -> vector<4x64xf32>
    %610 = arith.addf %607, %609 : vector<4x64xf32>
    %611 = vector.extract_strided_slice %610 {offsets = [0, 0], sizes = [4, 48], strides = [1, 1]} : vector<4x64xf32> to vector<4x48xf32>
    %612 = arith.negf %611 : vector<4x48xf32>
    %613 = math.exp %612 : vector<4x48xf32>
    %cst_146 = arith.constant 1.000000e+00 : f32
    %614 = vector.broadcast %cst_146 : f32 to vector<4x48xf32>
    %615 = arith.addf %614, %613 : vector<4x48xf32>
    %616 = arith.divf %614, %615 : vector<4x48xf32>
    %617 = vector.extract_strided_slice %610 {offsets = [0, 48], sizes = [4, 16], strides = [1, 1]} : vector<4x64xf32> to vector<4x16xf32>
    %618 = math.tanh %617 : vector<4x16xf32>
    %619 = vector.extract_strided_slice %616 {offsets = [0, 0], sizes = [4, 16], strides = [1, 1]} : vector<4x48xf32> to vector<4x16xf32>
    %620 = vector.extract_strided_slice %616 {offsets = [0, 16], sizes = [4, 16], strides = [1, 1]} : vector<4x48xf32> to vector<4x16xf32>
    %621 = vector.extract_strided_slice %616 {offsets = [0, 32], sizes = [4, 16], strides = [1, 1]} : vector<4x48xf32> to vector<4x16xf32>
    %622 = arith.mulf %620, %578 : vector<4x16xf32>
    %623 = arith.mulf %619, %618 : vector<4x16xf32>
    %624 = arith.addf %622, %623 : vector<4x16xf32>
    %625 = math.tanh %624 : vector<4x16xf32>
    %626 = arith.mulf %621, %625 : vector<4x16xf32>
    %627 = vector.extract_strided_slice %372 {offsets = [8, 0], sizes = [4, 64], strides = [1, 1]} : vector<32x64xf32> to vector<4x64xf32>
    %628 = arith.truncf %600 : vector<4x16xf32> to vector<4x16xbf16>
    %cst_147 = arith.constant dense<0.000000e+00> : vector<4x64xf32>
    %629 = tpu.matmul %628, %376, %cst_147 {dimension_numbers = #tpu.dot_dimension_numbers<[1], [0], [0], [1], [0, 0, 1, 1], [], []>} : vector<4x16xbf16>, vector<16x64xbf16>, vector<4x64xf32> -> vector<4x64xf32>
    %630 = arith.addf %627, %629 : vector<4x64xf32>
    %631 = vector.extract_strided_slice %630 {offsets = [0, 0], sizes = [4, 48], strides = [1, 1]} : vector<4x64xf32> to vector<4x48xf32>
    %632 = arith.negf %631 : vector<4x48xf32>
    %633 = math.exp %632 : vector<4x48xf32>
    %cst_148 = arith.constant 1.000000e+00 : f32
    %634 = vector.broadcast %cst_148 : f32 to vector<4x48xf32>
    %635 = arith.addf %634, %633 : vector<4x48xf32>
    %636 = arith.divf %634, %635 : vector<4x48xf32>
    %637 = vector.extract_strided_slice %630 {offsets = [0, 48], sizes = [4, 16], strides = [1, 1]} : vector<4x64xf32> to vector<4x16xf32>
    %638 = math.tanh %637 : vector<4x16xf32>
    %639 = vector.extract_strided_slice %636 {offsets = [0, 0], sizes = [4, 16], strides = [1, 1]} : vector<4x48xf32> to vector<4x16xf32>
    %640 = vector.extract_strided_slice %636 {offsets = [0, 16], sizes = [4, 16], strides = [1, 1]} : vector<4x48xf32> to vector<4x16xf32>
    %641 = vector.extract_strided_slice %636 {offsets = [0, 32], sizes = [4, 16], strides = [1, 1]} : vector<4x48xf32> to vector<4x16xf32>
    %642 = arith.mulf %640, %598 : vector<4x16xf32>
    %643 = arith.mulf %639, %638 : vector<4x16xf32>
    %644 = arith.addf %642, %643 : vector<4x16xf32>
    %645 = math.tanh %644 : vector<4x16xf32>
    %646 = arith.mulf %641, %645 : vector<4x16xf32>
    %c5_149 = arith.constant 5 : index
    %c0_150 = arith.constant 0 : index
    %c0_151 = arith.constant 0 : index
    %647 = vector.load %arg19[%c5_149, %c0_150, %c0_151] : memref<8x4x32xf32, #tpu.memory_space<vmem>>, vector<1x4x16xf32>
    %648 = vector.shape_cast %647 : vector<1x4x16xf32> to vector<4x16xf32>
    %649 = vector.shape_cast %626 : vector<4x16xf32> to vector<1x4x16xf32>
    tpu.vector_store %arg19[%c5_149, %c0_150, %c0_151], %649 {strides = array<i32>} : memref<8x4x32xf32, #tpu.memory_space<vmem>>, vector<1x4x16xf32>,
    %c2_152 = arith.constant 2 : index
    %c0_153 = arith.constant 0 : index
    %c16_154 = arith.constant 16 : index
    %650 = vector.load %arg19[%c2_152, %c0_153, %c16_154] : memref<8x4x32xf32, #tpu.memory_space<vmem>>, vector<1x4x16xf32>
    %651 = vector.shape_cast %650 : vector<1x4x16xf32> to vector<4x16xf32>
    %652 = vector.shape_cast %646 : vector<4x16xf32> to vector<1x4x16xf32>
    tpu.vector_store %arg19[%c2_152, %c0_153, %c16_154], %652 {strides = array<i32>} : memref<8x4x32xf32, #tpu.memory_space<vmem>>, vector<1x4x16xf32>,
    %653 = vector.extract_strided_slice %365 {offsets = [24, 0], sizes = [4, 64], strides = [1, 1]} : vector<32x64xf32> to vector<4x64xf32>
    %654 = arith.truncf %626 : vector<4x16xf32> to vector<4x16xbf16>
    %cst_155 = arith.constant dense<0.000000e+00> : vector<4x64xf32>
    %655 = tpu.matmul %654, %374, %cst_155 {dimension_numbers = #tpu.dot_dimension_numbers<[1], [0], [0], [1], [0, 0, 1, 1], [], []>} : vector<4x16xbf16>, vector<16x64xbf16>, vector<4x64xf32> -> vector<4x64xf32>
    %656 = arith.addf %653, %655 : vector<4x64xf32>
    %657 = vector.extract_strided_slice %656 {offsets = [0, 0], sizes = [4, 48], strides = [1, 1]} : vector<4x64xf32> to vector<4x48xf32>
    %658 = arith.negf %657 : vector<4x48xf32>
    %659 = math.exp %658 : vector<4x48xf32>
    %cst_156 = arith.constant 1.000000e+00 : f32
    %660 = vector.broadcast %cst_156 : f32 to vector<4x48xf32>
    %661 = arith.addf %660, %659 : vector<4x48xf32>
    %662 = arith.divf %660, %661 : vector<4x48xf32>
    %663 = vector.extract_strided_slice %656 {offsets = [0, 48], sizes = [4, 16], strides = [1, 1]} : vector<4x64xf32> to vector<4x16xf32>
    %664 = math.tanh %663 : vector<4x16xf32>
    %665 = vector.extract_strided_slice %662 {offsets = [0, 0], sizes = [4, 16], strides = [1, 1]} : vector<4x48xf32> to vector<4x16xf32>
    %666 = vector.extract_strided_slice %662 {offsets = [0, 16], sizes = [4, 16], strides = [1, 1]} : vector<4x48xf32> to vector<4x16xf32>
    %667 = vector.extract_strided_slice %662 {offsets = [0, 32], sizes = [4, 16], strides = [1, 1]} : vector<4x48xf32> to vector<4x16xf32>
    %668 = arith.mulf %666, %624 : vector<4x16xf32>
    %669 = arith.mulf %665, %664 : vector<4x16xf32>
    %670 = arith.addf %668, %669 : vector<4x16xf32>
    %671 = math.tanh %670 : vector<4x16xf32>
    %672 = arith.mulf %667, %671 : vector<4x16xf32>
    %673 = vector.extract_strided_slice %372 {offsets = [4, 0], sizes = [4, 64], strides = [1, 1]} : vector<32x64xf32> to vector<4x64xf32>
    %674 = arith.truncf %646 : vector<4x16xf32> to vector<4x16xbf16>
    %cst_157 = arith.constant dense<0.000000e+00> : vector<4x64xf32>
    %675 = tpu.matmul %674, %376, %cst_157 {dimension_numbers = #tpu.dot_dimension_numbers<[1], [0], [0], [1], [0, 0, 1, 1], [], []>} : vector<4x16xbf16>, vector<16x64xbf16>, vector<4x64xf32> -> vector<4x64xf32>
    %676 = arith.addf %673, %675 : vector<4x64xf32>
    %677 = vector.extract_strided_slice %676 {offsets = [0, 0], sizes = [4, 48], strides = [1, 1]} : vector<4x64xf32> to vector<4x48xf32>
    %678 = arith.negf %677 : vector<4x48xf32>
    %679 = math.exp %678 : vector<4x48xf32>
    %cst_158 = arith.constant 1.000000e+00 : f32
    %680 = vector.broadcast %cst_158 : f32 to vector<4x48xf32>
    %681 = arith.addf %680, %679 : vector<4x48xf32>
    %682 = arith.divf %680, %681 : vector<4x48xf32>
    %683 = vector.extract_strided_slice %676 {offsets = [0, 48], sizes = [4, 16], strides = [1, 1]} : vector<4x64xf32> to vector<4x16xf32>
    %684 = math.tanh %683 : vector<4x16xf32>
    %685 = vector.extract_strided_slice %682 {offsets = [0, 0], sizes = [4, 16], strides = [1, 1]} : vector<4x48xf32> to vector<4x16xf32>
    %686 = vector.extract_strided_slice %682 {offsets = [0, 16], sizes = [4, 16], strides = [1, 1]} : vector<4x48xf32> to vector<4x16xf32>
    %687 = vector.extract_strided_slice %682 {offsets = [0, 32], sizes = [4, 16], strides = [1, 1]} : vector<4x48xf32> to vector<4x16xf32>
    %688 = arith.mulf %686, %644 : vector<4x16xf32>
    %689 = arith.mulf %685, %684 : vector<4x16xf32>
    %690 = arith.addf %688, %689 : vector<4x16xf32>
    %691 = math.tanh %690 : vector<4x16xf32>
    %692 = arith.mulf %687, %691 : vector<4x16xf32>
    %c6_159 = arith.constant 6 : index
    %c0_160 = arith.constant 0 : index
    %c0_161 = arith.constant 0 : index
    %693 = vector.load %arg19[%c6_159, %c0_160, %c0_161] : memref<8x4x32xf32, #tpu.memory_space<vmem>>, vector<1x4x16xf32>
    %694 = vector.shape_cast %693 : vector<1x4x16xf32> to vector<4x16xf32>
    %695 = vector.shape_cast %672 : vector<4x16xf32> to vector<1x4x16xf32>
    tpu.vector_store %arg19[%c6_159, %c0_160, %c0_161], %695 {strides = array<i32>} : memref<8x4x32xf32, #tpu.memory_space<vmem>>, vector<1x4x16xf32>,
    %c1_162 = arith.constant 1 : index
    %c0_163 = arith.constant 0 : index
    %c16_164 = arith.constant 16 : index
    %696 = vector.load %arg19[%c1_162, %c0_163, %c16_164] : memref<8x4x32xf32, #tpu.memory_space<vmem>>, vector<1x4x16xf32>
    %697 = vector.shape_cast %696 : vector<1x4x16xf32> to vector<4x16xf32>
    %698 = vector.shape_cast %692 : vector<4x16xf32> to vector<1x4x16xf32>
    tpu.vector_store %arg19[%c1_162, %c0_163, %c16_164], %698 {strides = array<i32>} : memref<8x4x32xf32, #tpu.memory_space<vmem>>, vector<1x4x16xf32>,
    %699 = vector.extract_strided_slice %365 {offsets = [28, 0], sizes = [4, 64], strides = [1, 1]} : vector<32x64xf32> to vector<4x64xf32>
    %700 = arith.truncf %672 : vector<4x16xf32> to vector<4x16xbf16>
    %cst_165 = arith.constant dense<0.000000e+00> : vector<4x64xf32>
    %701 = tpu.matmul %700, %374, %cst_165 {dimension_numbers = #tpu.dot_dimension_numbers<[1], [0], [0], [1], [0, 0, 1, 1], [], []>} : vector<4x16xbf16>, vector<16x64xbf16>, vector<4x64xf32> -> vector<4x64xf32>
    %702 = arith.addf %699, %701 : vector<4x64xf32>
    %703 = vector.extract_strided_slice %702 {offsets = [0, 0], sizes = [4, 48], strides = [1, 1]} : vector<4x64xf32> to vector<4x48xf32>
    %704 = arith.negf %703 : vector<4x48xf32>
    %705 = math.exp %704 : vector<4x48xf32>
    %cst_166 = arith.constant 1.000000e+00 : f32
    %706 = vector.broadcast %cst_166 : f32 to vector<4x48xf32>
    %707 = arith.addf %706, %705 : vector<4x48xf32>
    %708 = arith.divf %706, %707 : vector<4x48xf32>
    %709 = vector.extract_strided_slice %702 {offsets = [0, 48], sizes = [4, 16], strides = [1, 1]} : vector<4x64xf32> to vector<4x16xf32>
    %710 = math.tanh %709 : vector<4x16xf32>
    %711 = vector.extract_strided_slice %708 {offsets = [0, 0], sizes = [4, 16], strides = [1, 1]} : vector<4x48xf32> to vector<4x16xf32>
    %712 = vector.extract_strided_slice %708 {offsets = [0, 16], sizes = [4, 16], strides = [1, 1]} : vector<4x48xf32> to vector<4x16xf32>
    %713 = vector.extract_strided_slice %708 {offsets = [0, 32], sizes = [4, 16], strides = [1, 1]} : vector<4x48xf32> to vector<4x16xf32>
    %714 = arith.mulf %712, %670 : vector<4x16xf32>
    %715 = arith.mulf %711, %710 : vector<4x16xf32>
    %716 = arith.addf %714, %715 : vector<4x16xf32>
    %717 = math.tanh %716 : vector<4x16xf32>
    %718 = arith.mulf %713, %717 : vector<4x16xf32>
    %719 = vector.extract_strided_slice %372 {offsets = [0, 0], sizes = [4, 64], strides = [1, 1]} : vector<32x64xf32> to vector<4x64xf32>
    %720 = arith.truncf %692 : vector<4x16xf32> to vector<4x16xbf16>
    %cst_167 = arith.constant dense<0.000000e+00> : vector<4x64xf32>
    %721 = tpu.matmul %720, %376, %cst_167 {dimension_numbers = #tpu.dot_dimension_numbers<[1], [0], [0], [1], [0, 0, 1, 1], [], []>} : vector<4x16xbf16>, vector<16x64xbf16>, vector<4x64xf32> -> vector<4x64xf32>
    %722 = arith.addf %719, %721 : vector<4x64xf32>
    %723 = vector.extract_strided_slice %722 {offsets = [0, 0], sizes = [4, 48], strides = [1, 1]} : vector<4x64xf32> to vector<4x48xf32>
    %724 = arith.negf %723 : vector<4x48xf32>
    %725 = math.exp %724 : vector<4x48xf32>
    %cst_168 = arith.constant 1.000000e+00 : f32
    %726 = vector.broadcast %cst_168 : f32 to vector<4x48xf32>
    %727 = arith.addf %726, %725 : vector<4x48xf32>
    %728 = arith.divf %726, %727 : vector<4x48xf32>
    %729 = vector.extract_strided_slice %722 {offsets = [0, 48], sizes = [4, 16], strides = [1, 1]} : vector<4x64xf32> to vector<4x16xf32>
    %730 = math.tanh %729 : vector<4x16xf32>
    %731 = vector.extract_strided_slice %728 {offsets = [0, 0], sizes = [4, 16], strides = [1, 1]} : vector<4x48xf32> to vector<4x16xf32>
    %732 = vector.extract_strided_slice %728 {offsets = [0, 16], sizes = [4, 16], strides = [1, 1]} : vector<4x48xf32> to vector<4x16xf32>
    %733 = vector.extract_strided_slice %728 {offsets = [0, 32], sizes = [4, 16], strides = [1, 1]} : vector<4x48xf32> to vector<4x16xf32>
    %734 = arith.mulf %732, %690 : vector<4x16xf32>
    %735 = arith.mulf %731, %730 : vector<4x16xf32>
    %736 = arith.addf %734, %735 : vector<4x16xf32>
    %737 = math.tanh %736 : vector<4x16xf32>
    %738 = arith.mulf %733, %737 : vector<4x16xf32>
    %c7_169 = arith.constant 7 : index
    %c0_170 = arith.constant 0 : index
    %c0_171 = arith.constant 0 : index
    %739 = vector.load %arg19[%c7_169, %c0_170, %c0_171] : memref<8x4x32xf32, #tpu.memory_space<vmem>>, vector<1x4x16xf32>
    %740 = vector.shape_cast %739 : vector<1x4x16xf32> to vector<4x16xf32>
    %741 = vector.shape_cast %718 : vector<4x16xf32> to vector<1x4x16xf32>
    tpu.vector_store %arg19[%c7_169, %c0_170, %c0_171], %741 {strides = array<i32>} : memref<8x4x32xf32, #tpu.memory_space<vmem>>, vector<1x4x16xf32>,
    %c0_172 = arith.constant 0 : index
    %c0_173 = arith.constant 0 : index
    %c16_174 = arith.constant 16 : index
    %742 = vector.load %arg19[%c0_172, %c0_173, %c16_174] : memref<8x4x32xf32, #tpu.memory_space<vmem>>, vector<1x4x16xf32>
    %743 = vector.shape_cast %742 : vector<1x4x16xf32> to vector<4x16xf32>
    %744 = vector.shape_cast %738 : vector<4x16xf32> to vector<1x4x16xf32>
    tpu.vector_store %arg19[%c0_172, %c0_173, %c16_174], %744 {strides = array<i32>} : memref<8x4x32xf32, #tpu.memory_space<vmem>>, vector<1x4x16xf32>,
    %c0_175 = arith.constant 0 : index
    %c0_176 = arith.constant 0 : index
    %c0_177 = arith.constant 0 : index
    %745 = vector.load %arg19[%c0_175, %c0_176, %c0_177] : memref<8x4x32xf32, #tpu.memory_space<vmem>>, vector<8x4x32xf32>
    %c0_178 = arith.constant 0 : index
    %c0_179 = arith.constant 0 : index
    %c0_180 = arith.constant 0 : index
    %746 = vector.load %arg2[%c0_178, %c0_179, %c0_180] : memref<1x8x4xf32, #tpu.memory_space<vmem>>, vector<1x8x4xf32>
    %747 = vector.shape_cast %746 : vector<1x8x4xf32> to vector<8x4xf32>
    %748 = arith.mulf %745, %745 : vector<8x4x32xf32>
    %cst_181 = arith.constant dense<0.000000e+00> : vector<8x4xf32>
    %749 = vector.multi_reduction <add>, %748, %cst_181 [2] : vector<8x4x32xf32> to vector<8x4xf32>
    %750 = vector.shape_cast %749 : vector<8x4xf32> to vector<8x4x1xf32>
    %cst_182 = arith.constant 1.000000e-24 : f32
    %751 = vector.broadcast %cst_182 : f32 to vector<8x4x1xf32>
    %752 = arith.maximumf %750, %751 : vector<8x4x1xf32>
    %753 = math.rsqrt %752 : vector<8x4x1xf32>
    %754 = vector.broadcast %753 : vector<8x4x1xf32> to vector<8x4x32xf32>
    %755 = arith.mulf %745, %754 : vector<8x4x32xf32>
    %756 = vector.shape_cast %747 : vector<8x4xf32> to vector<8x4x1xf32>
    %757 = vector.broadcast %756 : vector<8x4x1xf32> to vector<8x4x32xf32>
    %758 = arith.mulf %755, %757 : vector<8x4x32xf32>
    %759 = vector.extract_strided_slice %758 {offsets = [0, 0, 0], sizes = [8, 1, 32], strides = [1, 1, 1]} : vector<8x4x32xf32> to vector<8x1x32xf32>
    %760 = vector.shape_cast %759 : vector<8x1x32xf32> to vector<8x32xf32>
    %761 = vector.extract_strided_slice %758 {offsets = [0, 1, 0], sizes = [8, 3, 32], strides = [1, 1, 1]} : vector<8x4x32xf32> to vector<8x3x32xf32>
    %cst_183 = arith.constant dense<0.000000e+00> : vector<3x32xf32>
    %762 = vector.multi_reduction <add>, %761, %cst_183 [0] : vector<8x3x32xf32> to vector<3x32xf32>
    %763 = arith.truncf %760 : vector<8x32xf32> to vector<8x32xbf16>
    %c0_184 = arith.constant 0 : index
    %c0_185 = arith.constant 0 : index
    %764 = vector.load %arg10[%c0_184, %c0_185] : memref<32x32xbf16, #tpu.memory_space<vmem>>, vector<32x32xbf16>
    %cst_186 = arith.constant dense<0.000000e+00> : vector<8x32xf32>
    %765 = tpu.matmul %763, %764, %cst_186 {dimension_numbers = #tpu.dot_dimension_numbers<[1], [0], [0], [1], [0, 0, 1, 1], [], []>} : vector<8x32xbf16>, vector<32x32xbf16>, vector<8x32xf32> -> vector<8x32xf32>
    %c0_187 = arith.constant 0 : index
    %c0_188 = arith.constant 0 : index
    %766 = vector.load %arg11[%c0_187, %c0_188] : memref<1x32xf32, #tpu.memory_space<vmem>>, vector<1x32xf32>
    %767 = vector.broadcast %766 : vector<1x32xf32> to vector<8x32xf32>
    %768 = arith.addf %765, %767 : vector<8x32xf32>
    %cst_189 = arith.constant dense<0.000000e+00> : vector<3x8xf32>
    %769 = tpu.matmul %762, %768, %cst_189 {dimension_numbers = #tpu.dot_dimension_numbers<[1], [1], [0], [0], [0, 0, 1, 0], [], []>} : vector<3x32xf32>, vector<8x32xf32>, vector<3x8xf32> -> vector<3x8xf32>
    %cst_190 = arith.constant 1.000000e+00 : f32
    %770 = vector.broadcast %cst_190 : f32 to vector<3x8xf32>
    %771 = arith.mulf %769, %770 : vector<3x8xf32>
    %c0_191 = arith.constant 0 : index
    %c0_192 = arith.constant 0 : index
    %c0_193 = arith.constant 0 : index
    %772 = vector.load %arg3[%c0_191, %c0_192, %c0_193] : memref<1x1x8xf32, #tpu.memory_space<vmem>>, vector<1x1x8xf32>
    %773 = vector.shape_cast %772 : vector<1x1x8xf32> to vector<1x8xf32>
    %cst_194 = arith.constant 0.000000e+00 : f32
    %774 = vector.broadcast %cst_194 : f32 to vector<1x8xf32>
    %775 = arith.cmpf ogt, %773, %774 : vector<1x8xf32>
    %cst_195 = arith.constant -1.000000e+08 : f32
    %776 = vector.shape_cast %775 : vector<1x8xi1> to vector<1x8xi1>
    %777 = vector.broadcast %776 : vector<1x8xi1> to vector<3x8xi1>
    %778 = vector.broadcast %cst_195 : f32 to vector<3x8xf32>
    %779 = arith.select %777, %771, %778 : vector<3x8xi1>, vector<3x8xf32>
    %cst_196 = arith.constant dense<0xFF800000> : vector<3xf32>
    %780 = vector.multi_reduction <maximumf>, %779, %cst_196 [1] : vector<3x8xf32> to vector<3xf32>
    %781 = vector.shape_cast %780 : vector<3xf32> to vector<3x1xf32>
    %782 = vector.broadcast %781 : vector<3x1xf32> to vector<3x8xf32>
    %783 = arith.subf %779, %782 : vector<3x8xf32>
    %784 = math.exp %783 : vector<3x8xf32>
    %cst_197 = arith.constant dense<0.000000e+00> : vector<3xf32>
    %785 = vector.multi_reduction <add>, %784, %cst_197 [1] : vector<3x8xf32> to vector<3xf32>
    %786 = vector.shape_cast %785 : vector<3xf32> to vector<3x1xf32>
    %787 = tpu.reciprocal %786 {approx = true} : vector<3x1xf32> -> vector<3x1xf32>
    %788 = vector.broadcast %787 : vector<3x1xf32> to vector<3x8xf32>
    %789 = arith.mulf %784, %788 : vector<3x8xf32>
    %cst_198 = arith.constant dense<0.000000e+00> : vector<3x32xf32>
    %790 = tpu.matmul %789, %760, %cst_198 {dimension_numbers = #tpu.dot_dimension_numbers<[1], [0], [0], [1], [0, 0, 1, 1], [], []>} : vector<3x8xf32>, vector<8x32xf32>, vector<3x32xf32> -> vector<3x32xf32>
    %791 = vector.extract_strided_slice %760 {offsets = [7, 0], sizes = [1, 32], strides = [1, 1]} : vector<8x32xf32> to vector<1x32xf32>
    %792 = vector.extract_strided_slice %758 {offsets = [7, 1, 0], sizes = [1, 3, 32], strides = [1, 1, 1]} : vector<8x4x32xf32> to vector<1x3x32xf32>
    %793 = vector.shape_cast %792 : vector<1x3x32xf32> to vector<3x32xf32>
    %794 = arith.mulf %790, %790 : vector<3x32xf32>
    %cst_199 = arith.constant dense<0.000000e+00> : vector<3xf32>
    %795 = vector.multi_reduction <add>, %794, %cst_199 [1] : vector<3x32xf32> to vector<3xf32>
    %796 = vector.shape_cast %795 : vector<3xf32> to vector<3x1xf32>
    %797 = arith.mulf %791, %791 : vector<1x32xf32>
    %cst_200 = arith.constant dense<0.000000e+00> : vector<1xf32>
    %798 = vector.multi_reduction <add>, %797, %cst_200 [1] : vector<1x32xf32> to vector<1xf32>
    %799 = vector.shape_cast %798 : vector<1xf32> to vector<1x1xf32>
    %800 = vector.broadcast %799 : vector<1x1xf32> to vector<3x1xf32>
    %801 = arith.addf %796, %800 : vector<3x1xf32>
    %cst_201 = arith.constant 1.000000e-24 : f32
    %802 = vector.broadcast %cst_201 : f32 to vector<3x1xf32>
    %803 = arith.maximumf %801, %802 : vector<3x1xf32>
    %804 = math.rsqrt %803 : vector<3x1xf32>
    %c0_202 = arith.constant 0 : index
    %c0_203 = arith.constant 0 : index
    %805 = vector.load %arg12[%c0_202, %c0_203] : memref<96x96xbf16, #tpu.memory_space<vmem>>, vector<96x96xbf16>
    %806 = arith.truncf %790 : vector<3x32xf32> to vector<3x32xbf16>
    %807 = vector.extract_strided_slice %805 {offsets = [0, 0], sizes = [32, 96], strides = [1, 1]} : vector<96x96xbf16> to vector<32x96xbf16>
    %cst_204 = arith.constant dense<0.000000e+00> : vector<3x96xf32>
    %808 = tpu.matmul %806, %807, %cst_204 {dimension_numbers = #tpu.dot_dimension_numbers<[1], [0], [0], [1], [0, 0, 1, 1], [], []>} : vector<3x32xbf16>, vector<32x96xbf16>, vector<3x96xf32> -> vector<3x96xf32>
    %809 = arith.truncf %791 : vector<1x32xf32> to vector<1x32xbf16>
    %810 = vector.extract_strided_slice %805 {offsets = [32, 0], sizes = [32, 96], strides = [1, 1]} : vector<96x96xbf16> to vector<32x96xbf16>
    %cst_205 = arith.constant dense<0.000000e+00> : vector<1x96xf32>
    %811 = tpu.matmul %809, %810, %cst_205 {dimension_numbers = #tpu.dot_dimension_numbers<[1], [0], [0], [1], [0, 0, 1, 1], [], []>} : vector<1x32xbf16>, vector<32x96xbf16>, vector<1x96xf32> -> vector<1x96xf32>
    %812 = vector.broadcast %811 : vector<1x96xf32> to vector<3x96xf32>
    %813 = arith.addf %808, %812 : vector<3x96xf32>
    %814 = vector.broadcast %804 : vector<3x1xf32> to vector<3x96xf32>
    %815 = arith.mulf %813, %814 : vector<3x96xf32>
    %816 = arith.truncf %793 : vector<3x32xf32> to vector<3x32xbf16>
    %817 = vector.extract_strided_slice %805 {offsets = [64, 0], sizes = [32, 96], strides = [1, 1]} : vector<96x96xbf16> to vector<32x96xbf16>
    %cst_206 = arith.constant dense<0.000000e+00> : vector<3x96xf32>
    %818 = tpu.matmul %816, %817, %cst_206 {dimension_numbers = #tpu.dot_dimension_numbers<[1], [0], [0], [1], [0, 0, 1, 1], [], []>} : vector<3x32xbf16>, vector<32x96xbf16>, vector<3x96xf32> -> vector<3x96xf32>
    %819 = arith.addf %815, %818 : vector<3x96xf32>
    %c0_207 = arith.constant 0 : index
    %c0_208 = arith.constant 0 : index
    %820 = vector.load %arg13[%c0_207, %c0_208] : memref<1x96xf32, #tpu.memory_space<vmem>>, vector<1x96xf32>
    %821 = vector.broadcast %820 : vector<1x96xf32> to vector<3x96xf32>
    %822 = arith.addf %819, %821 : vector<3x96xf32>
    %823 = math.tanh %822 : vector<3x96xf32>
    %c0_209 = arith.constant 0 : index
    %c0_210 = arith.constant 0 : index
    %824 = vector.load %arg14[%c0_209, %c0_210] : memref<1x96xf32, #tpu.memory_space<vmem>>, vector<1x96xf32>
    %825 = vector.broadcast %824 : vector<1x96xf32> to vector<3x96xf32>
    %826 = arith.mulf %823, %825 : vector<3x96xf32>
    %cst_211 = arith.constant dense<0.000000e+00> : vector<3xf32>
    %827 = vector.multi_reduction <add>, %826, %cst_211 [1] : vector<3x96xf32> to vector<3xf32>
    %828 = vector.shape_cast %827 : vector<3xf32> to vector<3x1xf32>
    %c0_212 = arith.constant 0 : index
    %c0_213 = arith.constant 0 : index
    %829 = vector.load %arg15[%c0_212, %c0_213] : memref<1x1xf32, #tpu.memory_space<vmem>>, vector<1x1xf32>
    %830 = vector.broadcast %829 : vector<1x1xf32> to vector<3x1xf32>
    %831 = arith.addf %828, %830 : vector<3x1xf32>
    %c0_214 = arith.constant 0 : index
    %c0_215 = arith.constant 0 : index
    %c0_216 = arith.constant 0 : index
    %832 = vector.load %arg16[%c0_214, %c0_215, %c0_216] : memref<1x3x8xf32, #tpu.memory_space<vmem>>, vector<1x3x8xf32>
    %833 = vector.shape_cast %832 : vector<1x3x8xf32> to vector<3x8xf32>
    %834 = vector.shape_cast %789 : vector<3x8xf32> to vector<1x3x8xf32>
    tpu.vector_store %arg16[%c0_214, %c0_215, %c0_216], %834 {strides = array<i32>} : memref<1x3x8xf32, #tpu.memory_space<vmem>>, vector<1x3x8xf32>,
    %c0_217 = arith.constant 0 : index
    %c0_218 = arith.constant 0 : index
    %c0_219 = arith.constant 0 : index
    %835 = vector.load %arg17[%c0_217, %c0_218, %c0_219] : memref<1x3x1xf32, #tpu.memory_space<vmem>>, vector<1x3x1xf32>
    %836 = vector.shape_cast %835 : vector<1x3x1xf32> to vector<3x1xf32>
    %837 = vector.shape_cast %831 : vector<3x1xf32> to vector<1x3x1xf32>
    tpu.vector_store %arg17[%c0_217, %c0_218, %c0_219], %837 {strides = array<i32>} : memref<1x3x1xf32, #tpu.memory_space<vmem>>, vector<1x3x1xf32>,
    return
  }
  func.func @transform_0(%arg0: i32) -> (i32, i32, i32) {
    %c0_i32 = arith.constant 0 : i32
    %c0_i32_0 = arith.constant 0 : i32
    %c0_i32_1 = arith.constant 0 : i32
    return %arg0, %c0_i32, %c0_i32_0 : i32, i32, i32
  }
  func.func @transform_1(%arg0: i32) -> (i32, i32, i32) {
    %c0_i32 = arith.constant 0 : i32
    %c0_i32_0 = arith.constant 0 : i32
    %c0_i32_1 = arith.constant 0 : i32
    return %arg0, %c0_i32, %c0_i32_0 : i32, i32, i32
  }
  func.func @transform_2(%arg0: i32) -> (i32, i32, i32) {
    %c0_i32 = arith.constant 0 : i32
    %c0_i32_0 = arith.constant 0 : i32
    %c0_i32_1 = arith.constant 0 : i32
    return %arg0, %c0_i32, %c0_i32_0 : i32, i32, i32
  }
  func.func @transform_3(%arg0: i32) -> (i32, i32, i32) {
    %c0_i32 = arith.constant 0 : i32
    %c0_i32_0 = arith.constant 0 : i32
    %c0_i32_1 = arith.constant 0 : i32
    %c0_i32_2 = arith.constant 0 : i32
    return %c0_i32, %c0_i32_0, %c0_i32_1 : i32, i32, i32
  }
  func.func @transform_4(%arg0: i32) -> (i32, i32, i32) {
    %c0_i32 = arith.constant 0 : i32
    %c0_i32_0 = arith.constant 0 : i32
    %c0_i32_1 = arith.constant 0 : i32
    %c0_i32_2 = arith.constant 0 : i32
    return %c0_i32, %c0_i32_0, %c0_i32_1 : i32, i32, i32
  }
  func.func @transform_5(%arg0: i32) -> (i32, i32, i32) {
    %c0_i32 = arith.constant 0 : i32
    %c0_i32_0 = arith.constant 0 : i32
    %c0_i32_1 = arith.constant 0 : i32
    %c0_i32_2 = arith.constant 0 : i32
    return %c0_i32, %c0_i32_0, %c0_i32_1 : i32, i32, i32
  }
  func.func @transform_6(%arg0: i32) -> (i32, i32, i32) {
    %c0_i32 = arith.constant 0 : i32
    %c0_i32_0 = arith.constant 0 : i32
    %c0_i32_1 = arith.constant 0 : i32
    %c0_i32_2 = arith.constant 0 : i32
    return %c0_i32, %c0_i32_0, %c0_i32_1 : i32, i32, i32
  }
  func.func @transform_7(%arg0: i32) -> (i32, i32, i32) {
    %c0_i32 = arith.constant 0 : i32
    %c0_i32_0 = arith.constant 0 : i32
    %c0_i32_1 = arith.constant 0 : i32
    %c0_i32_2 = arith.constant 0 : i32
    return %c0_i32, %c0_i32_0, %c0_i32_1 : i32, i32, i32
  }
  func.func @transform_8(%arg0: i32) -> (i32, i32, i32) {
    %c0_i32 = arith.constant 0 : i32
    %c0_i32_0 = arith.constant 0 : i32
    %c0_i32_1 = arith.constant 0 : i32
    %c0_i32_2 = arith.constant 0 : i32
    return %c0_i32, %c0_i32_0, %c0_i32_1 : i32, i32, i32
  }
  func.func @transform_9(%arg0: i32) -> (i32, i32) {
    %c0_i32 = arith.constant 0 : i32
    %c0_i32_0 = arith.constant 0 : i32
    %c0_i32_1 = arith.constant 0 : i32
    return %c0_i32, %c0_i32_0 : i32, i32
  }
  func.func @transform_10(%arg0: i32) -> (i32, i32) {
    %c0_i32 = arith.constant 0 : i32
    %c0_i32_0 = arith.constant 0 : i32
    %c0_i32_1 = arith.constant 0 : i32
    return %c0_i32, %c0_i32_0 : i32, i32
  }
  func.func @transform_11(%arg0: i32) -> (i32, i32) {
    %c0_i32 = arith.constant 0 : i32
    %c0_i32_0 = arith.constant 0 : i32
    %c0_i32_1 = arith.constant 0 : i32
    return %c0_i32, %c0_i32_0 : i32, i32
  }
  func.func @transform_12(%arg0: i32) -> (i32, i32) {
    %c0_i32 = arith.constant 0 : i32
    %c0_i32_0 = arith.constant 0 : i32
    %c0_i32_1 = arith.constant 0 : i32
    return %c0_i32, %c0_i32_0 : i32, i32
  }
  func.func @transform_13(%arg0: i32) -> (i32, i32) {
    %c0_i32 = arith.constant 0 : i32
    %c0_i32_0 = arith.constant 0 : i32
    %c0_i32_1 = arith.constant 0 : i32
    return %c0_i32, %c0_i32_0 : i32, i32
  }
  func.func @transform_14(%arg0: i32) -> (i32, i32) {
    %c0_i32 = arith.constant 0 : i32
    %c0_i32_0 = arith.constant 0 : i32
    %c0_i32_1 = arith.constant 0 : i32
    return %c0_i32, %c0_i32_0 : i32, i32
  }
  func.func @transform_15(%arg0: i32) -> (i32, i32, i32) {
    %c0_i32 = arith.constant 0 : i32
    %c0_i32_0 = arith.constant 0 : i32
    %c0_i32_1 = arith.constant 0 : i32
    return %arg0, %c0_i32, %c0_i32_0 : i32, i32, i32
  }
  func.func @transform_16(%arg0: i32) -> (i32, i32, i32) {
    %c0_i32 = arith.constant 0 : i32
    %c0_i32_0 = arith.constant 0 : i32
    %c0_i32_1 = arith.constant 0 : i32
    return %arg0, %c0_i32, %c0_i32_0 : i32, i32, i32
  }
}

</mosaic_0001>

<llo_original>
// kernel: tpu_custom_call.1
$region0: #{tpu_custom_call.1}
  #allocation0 [shape = 'u32[]', space=smem, size = 0x4, offset = 0x4, fixed_abs, tag = 'smem constant byte address 0x4 - core index']
  #allocation1 [shape = 'u32[144,128]{1,0:T(1,128)}', space=vmem, size = 0x12000, scoped, tag = 'internal scratch']
  #allocation2 [shape = 'f32[32,32]{1,0:T(8,128)}', space=vmem, size = 0x4000, scoped, tag = 'scratch operand']
  #allocation3 [shape = 'f32[8,4,32]{2,1,0:T(4,128)}', space=vmem, size = 0x4000, scoped, tag = 'scratch operand']
  #allocation4 [shape = 'f32[1,1]{1,0:T(1,128)S(1)}', space=vmem, size = 0x200, scoped, tag = 'scoped memory for tpu_custom_call.1']
  %s0 = inlined_call_operand.vmem [shape: bf16[2,32,16], index: 0, kind: input, shape index: {}]
  %s1 = inlined_call_operand.vmem [shape: f32[2,8,4], index: 1, kind: input, shape index: {}]
  %s2 = inlined_call_operand.vmem [shape: f32[2,1,8], index: 2, kind: input, shape index: {}]
  %s3 = inlined_call_operand.hbm [shape: bf16[2,16,64], index: 3, kind: input, shape index: {}]
  %s4 = inlined_call_operand.hbm [shape: bf16[2,16,64], index: 4, kind: input, shape index: {}]
  %s5 = inlined_call_operand.vmem [shape: f32[2,1,64], index: 5, kind: input, shape index: {}]
  %s6 = inlined_call_operand.vmem [shape: bf16[2,32,64], index: 6, kind: input, shape index: {}]
  %s7 = inlined_call_operand.hbm [shape: bf16[2,16,64], index: 7, kind: input, shape index: {}]
  %s8 = inlined_call_operand.vmem [shape: f32[2,1,64], index: 8, kind: input, shape index: {}]
  %s9 = inlined_call_operand.hbm [shape: bf16[32,32], index: 9, kind: input, shape index: {}]
  %s10 = inlined_call_operand.vmem [shape: f32[1,32], index: 10, kind: input, shape index: {}]
  %s11 = inlined_call_operand.vmem [shape: bf16[96,96], index: 11, kind: input, shape index: {}]
  %s12 = inlined_call_operand.vmem [shape: f32[1,96], index: 12, kind: input, shape index: {}]
  %s13 = inlined_call_operand.vmem [shape: f32[1,96], index: 13, kind: input, shape index: {}]
  %s14 = inlined_call_operand.<no memory space> [shape: f32[1,1], index: 14, kind: input, shape index: {}]
  %s15 = inlined_call_operand.vmem [shape: f32[2,3,8], index: 15, kind: output, shape index: {0}]
  %s16 = inlined_call_operand.vmem [shape: f32[2,3,1], index: 16, kind: output, shape index: {1}]
  %17 = xla_tuple %s15, %s16
  %s18 = sld [smem:[#allocation0]]
  $region117: #{tpu_custom_call.1} parent=0
    _
  %s20 = ssub.s32 1, %s18
  %s21 = scalar_select 0, %s20, %s18
  %v22 = vstv %s14
  %23 = vst [vmem:[#allocation4] sm:$0x1] %v22
  $region1: #{tpu_custom_call.1} parent=0
    #allocation5 [shape = 'u8[8192]{0}', space=vmem, size = 0x2000, scoped, tag = 'input window, operand 3, single buffered']
    #allocation6 [shape = 's32[2]{0}', space=sflag, size = 0x8, scoped, tag = 'scoped memory for tpu_custom_call.1']
    #allocation7 [shape = 'u8[8192]{0}', space=vmem, size = 0x2000, scoped, tag = 'input window, operand 4, single buffered']
    #allocation8 [shape = 's32[1]{0}', space=sflag, size = 0x4, scoped, tag = 'scoped memory for tpu_custom_call.1']
    #allocation9 [shape = 'u8[8192]{0}', space=vmem, size = 0x2000, scoped, tag = 'input window, operand 7, single buffered']
    #allocation10 [shape = 'u8[8192]{0}', space=vmem, size = 0x2000, scoped, tag = 'input window, operand 9, single buffered']
    #allocation11 [shape = 's32[1]{0}', space=sflag, size = 0x4, scoped, tag = 'scoped memory for tpu_custom_call.1']
    %24 = vsyncpa [#allocation6], 0
    %25 = vsyncpa [#allocation8], 0
    %26 = vsyncpa [#allocation11], 0
    loop: start=0, step=1, limit=4
    $region2: #{tpu_custom_call.1} parent=1 // loop_pre_header
      _
    $region3: #{tpu_custom_call.1} parent=1 // loop_header
      %s28 = sphi 0, %s32
      %p29 = scmp.ge.s32.totalorder %s28, 4
      %s38 = sphi 0, %s40
      %s41 = sphi 0, %s38
      %s42 = sphi 0, %s41
      %s58 = sphi 0, %s42
      %s64 = sphi 0, %s66
      %s67 = sphi 0, %s64
      %s68 = sphi 0, %s67
      %s84 = sphi 0, %s68
      %s90 = sphi 0, %s92
      %s93 = sphi 0, %s90
      %s94 = sphi 0, %s93
      %s110 = sphi 0, %s94
      %s114 = sphi 0, %s114
      %s116 = sphi 0, %s114
      %s117 = sphi 0, %s116
      %s131 = sphi 0, %s117
      %s135 = sphi 0, %s135
      %s137 = sphi 0, %s135
      %s138 = sphi 0, %s137
      %s152 = sphi 0, %s138
      %s156 = sphi 0, %s156
      %s158 = sphi 0, %s156
      %s159 = sphi 0, %s158
      %s173 = sphi 0, %s159
      %s177 = sphi 0, %s177
      %s179 = sphi 0, %s177
      %s180 = sphi 0, %s179
      %s194 = sphi 0, %s180
      %s198 = sphi 0, %s198
      %s200 = sphi 0, %s198
      %s201 = sphi 0, %s200
      %s215 = sphi 0, %s201
      %s219 = sphi 0, %s219
      %s221 = sphi 0, %s219
      %s222 = sphi 0, %s221
      %s236 = sphi 0, %s222
      %s240 = sphi 0, %s240
      %s242 = sphi 0, %s240
      %s243 = sphi 0, %s242
      %s257 = sphi 0, %s243
      %s261 = sphi 0, %s261
      %s263 = sphi 0, %s261
      %s264 = sphi 0, %s263
      %s278 = sphi 0, %s264
      %s282 = sphi 0, %s282
      %s284 = sphi 0, %s282
      %s285 = sphi 0, %s284
      %s299 = sphi 0, %s285
      %s303 = sphi 0, %s303
      %s305 = sphi 0, %s303
      %s306 = sphi 0, %s305
      %s320 = sphi 0, %s306
      %s324 = sphi 0, %s324
      %s326 = sphi 0, %s324
      %s327 = sphi 0, %s326
      %s341 = sphi 0, %s327
      %s345 = sphi 0, %s345
      %s347 = sphi 0, %s345
      %s348 = sphi 0, %s347
      %s362 = sphi 0, %s348
      %s368 = sphi 0, %s370
      %s371 = sphi 0, %s368
      %s372 = sphi 0, %s371
      %s388 = sphi 0, %s372
      %s394 = sphi 0, %s396
      %s397 = sphi 0, %s394
      %s398 = sphi 0, %s397
      %s414 = sphi 0, %s398
    $region4: #{tpu_custom_call.1} parent=1 // loop_header_branch
      %31 = sbr.rel (%p29) target = $region8
    $region5: #{tpu_custom_call.1} parent=1 // loop_body
      %s33 = ssub.s32 %s28, 1
      %s34 = ssub.s32 %s28, 2
      %s35 = sadd.s32 %s28, 1
      %s36 = ssub.s32 %s28, %s35
      %p37 = scmp.eq.s32.totalorder %s36, 0
      %s39 = sadd.s32 %s38, 1
      %s40 = scalar_select %p37, %s38, %s39
      %p43 = pneg %p37
      %p44 = scmp.eq.s32.totalorder %s28, 1
      %p45 = por %p43, %p44
      %p46 = scmp.ne.s32.totalorder %s38, %s41
      %p47 = scmp.eq.s32.totalorder %s28, 0
      %p48 = por %p46, %p47
      %p49 = scmp.ne.s32.totalorder %s38, %s41
      %p50 = scmp.eq.s32.totalorder %s33, 1
      %p51 = por %p49, %p50
      %p52 = scmp.ne.s32.totalorder %s41, %s42
      %p53 = scmp.eq.s32.totalorder %s33, 0
      %p54 = por %p52, %p53
      %p55 = scmp.ne.s32.totalorder %s41, %s42
      %p56 = scmp.eq.s32.totalorder %s34, 1
      %p57 = por %p55, %p56
      %p59 = scmp.ne.s32.totalorder %s42, %s58
      %p60 = scmp.eq.s32.totalorder %s34, 0
      %p61 = por %p59, %p60
      %s62 = ssub.s32 %s28, %s35
      %p63 = scmp.eq.s32.totalorder %s62, 0
      %s65 = sadd.s32 %s64, 1
      %s66 = scalar_select %p63, %s64, %s65
      %p69 = pneg %p63
      %p70 = scmp.eq.s32.totalorder %s28, 1
      %p71 = por %p69, %p70
      %p72 = scmp.ne.s32.totalorder %s64, %s67
      %p73 = scmp.eq.s32.totalorder %s28, 0
      %p74 = por %p72, %p73
      %p75 = scmp.ne.s32.totalorder %s64, %s67
      %p76 = scmp.eq.s32.totalorder %s33, 1
      %p77 = por %p75, %p76
      %p78 = scmp.ne.s32.totalorder %s67, %s68
      %p79 = scmp.eq.s32.totalorder %s33, 0
      %p80 = por %p78, %p79
      %p81 = scmp.ne.s32.totalorder %s67, %s68
      %p82 = scmp.eq.s32.totalorder %s34, 1
      %p83 = por %p81, %p82
      %p85 = scmp.ne.s32.totalorder %s68, %s84
      %p86 = scmp.eq.s32.totalorder %s34, 0
      %p87 = por %p85, %p86
      %s88 = ssub.s32 %s28, %s35
      %p89 = scmp.eq.s32.totalorder %s88, 0
      %s91 = sadd.s32 %s90, 1
      %s92 = scalar_select %p89, %s90, %s91
      %p95 = pneg %p89
      %p96 = scmp.eq.s32.totalorder %s28, 1
      %p97 = por %p95, %p96
      %p98 = scmp.ne.s32.totalorder %s90, %s93
      %p99 = scmp.eq.s32.totalorder %s28, 0
      %p100 = por %p98, %p99
      %p101 = scmp.ne.s32.totalorder %s90, %s93
      %p102 = scmp.eq.s32.totalorder %s33, 1
      %p103 = por %p101, %p102
      %p104 = scmp.ne.s32.totalorder %s93, %s94
      %p105 = scmp.eq.s32.totalorder %s33, 0
      %p106 = por %p104, %p105
      %p107 = scmp.ne.s32.totalorder %s93, %s94
      %p108 = scmp.eq.s32.totalorder %s34, 1
      %p109 = por %p107, %p108
      %p111 = scmp.ne.s32.totalorder %s94, %s110
      %p112 = scmp.eq.s32.totalorder %s34, 0
      %p113 = por %p111, %p112
      %s115 = sadd.s32 %s114, 1
      %p118 = scmp.eq.s32.totalorder %s28, 1
      %p119 = scmp.ne.s32.totalorder %s114, %s116
      %p120 = scmp.eq.s32.totalorder %s28, 0
      %p121 = por %p119, %p120
      %p122 = scmp.ne.s32.totalorder %s114, %s116
      %p123 = scmp.eq.s32.totalorder %s33, 1
      %p124 = por %p122, %p123
      %p125 = scmp.ne.s32.totalorder %s116, %s117
      %p126 = scmp.eq.s32.totalorder %s33, 0
      %p127 = por %p125, %p126
      %p128 = scmp.ne.s32.totalorder %s116, %s117
      %p129 = scmp.eq.s32.totalorder %s34, 1
      %p130 = por %p128, %p129
      %p132 = scmp.ne.s32.totalorder %s117, %s131
      %p133 = scmp.eq.s32.totalorder %s34, 0
      %p134 = por %p132, %p133
      %s136 = sadd.s32 %s135, 1
      %p139 = scmp.eq.s32.totalorder %s28, 1
      %p140 = scmp.ne.s32.totalorder %s135, %s137
      %p141 = scmp.eq.s32.totalorder %s28, 0
      %p142 = por %p140, %p141
      %p143 = scmp.ne.s32.totalorder %s135, %s137
      %p144 = scmp.eq.s32.totalorder %s33, 1
      %p145 = por %p143, %p144
      %p146 = scmp.ne.s32.totalorder %s137, %s138
      %p147 = scmp.eq.s32.totalorder %s33, 0
      %p148 = por %p146, %p147
      %p149 = scmp.ne.s32.totalorder %s137, %s138
      %p150 = scmp.eq.s32.totalorder %s34, 1
      %p151 = por %p149, %p150
      %p153 = scmp.ne.s32.totalorder %s138, %s152
      %p154 = scmp.eq.s32.totalorder %s34, 0
      %p155 = por %p153, %p154
      %s157 = sadd.s32 %s156, 1
      %p160 = scmp.eq.s32.totalorder %s28, 1
      %p161 = scmp.ne.s32.totalorder %s156, %s158
      %p162 = scmp.eq.s32.totalorder %s28, 0
      %p163 = por %p161, %p162
      %p164 = scmp.ne.s32.totalorder %s156, %s158
      %p165 = scmp.eq.s32.totalorder %s33, 1
      %p166 = por %p164, %p165
      %p167 = scmp.ne.s32.totalorder %s158, %s159
      %p168 = scmp.eq.s32.totalorder %s33, 0
      %p169 = por %p167, %p168
      %p170 = scmp.ne.s32.totalorder %s158, %s159
      %p171 = scmp.eq.s32.totalorder %s34, 1
      %p172 = por %p170, %p171
      %p174 = scmp.ne.s32.totalorder %s159, %s173
      %p175 = scmp.eq.s32.totalorder %s34, 0
      %p176 = por %p174, %p175
      %s178 = sadd.s32 %s177, 1
      %p181 = scmp.eq.s32.totalorder %s28, 1
      %p182 = scmp.ne.s32.totalorder %s177, %s179
      %p183 = scmp.eq.s32.totalorder %s28, 0
      %p184 = por %p182, %p183
      %p185 = scmp.ne.s32.totalorder %s177, %s179
      %p186 = scmp.eq.s32.totalorder %s33, 1
      %p187 = por %p185, %p186
      %p188 = scmp.ne.s32.totalorder %s179, %s180
      %p189 = scmp.eq.s32.totalorder %s33, 0
      %p190 = por %p188, %p189
      %p191 = scmp.ne.s32.totalorder %s179, %s180
      %p192 = scmp.eq.s32.totalorder %s34, 1
      %p193 = por %p191, %p192
      %p195 = scmp.ne.s32.totalorder %s180, %s194
      %p196 = scmp.eq.s32.totalorder %s34, 0
      %p197 = por %p195, %p196
      %s199 = sadd.s32 %s198, 1
      %p202 = scmp.eq.s32.totalorder %s28, 1
      %p203 = scmp.ne.s32.totalorder %s198, %s200
      %p204 = scmp.eq.s32.totalorder %s28, 0
      %p205 = por %p203, %p204
      %p206 = scmp.ne.s32.totalorder %s198, %s200
      %p207 = scmp.eq.s32.totalorder %s33, 1
      %p208 = por %p206, %p207
      %p209 = scmp.ne.s32.totalorder %s200, %s201
      %p210 = scmp.eq.s32.totalorder %s33, 0
      %p211 = por %p209, %p210
      %p212 = scmp.ne.s32.totalorder %s200, %s201
      %p213 = scmp.eq.s32.totalorder %s34, 1
      %p214 = por %p212, %p213
      %p216 = scmp.ne.s32.totalorder %s201, %s215
      %p217 = scmp.eq.s32.totalorder %s34, 0
      %p218 = por %p216, %p217
      %s220 = sadd.s32 %s219, 1
      %p223 = scmp.eq.s32.totalorder %s28, 1
      %p224 = scmp.ne.s32.totalorder %s219, %s221
      %p225 = scmp.eq.s32.totalorder %s28, 0
      %p226 = por %p224, %p225
      %p227 = scmp.ne.s32.totalorder %s219, %s221
      %p228 = scmp.eq.s32.totalorder %s33, 1
      %p229 = por %p227, %p228
      %p230 = scmp.ne.s32.totalorder %s221, %s222
      %p231 = scmp.eq.s32.totalorder %s33, 0
      %p232 = por %p230, %p231
      %p233 = scmp.ne.s32.totalorder %s221, %s222
      %p234 = scmp.eq.s32.totalorder %s34, 1
      %p235 = por %p233, %p234
      %p237 = scmp.ne.s32.totalorder %s222, %s236
      %p238 = scmp.eq.s32.totalorder %s34, 0
      %p239 = por %p237, %p238
      %s241 = sadd.s32 %s240, 1
      %p244 = scmp.eq.s32.totalorder %s28, 1
      %p245 = scmp.ne.s32.totalorder %s240, %s242
      %p246 = scmp.eq.s32.totalorder %s28, 0
      %p247 = por %p245, %p246
      %p248 = scmp.ne.s32.totalorder %s240, %s242
      %p249 = scmp.eq.s32.totalorder %s33, 1
      %p250 = por %p248, %p249
      %p251 = scmp.ne.s32.totalorder %s242, %s243
      %p252 = scmp.eq.s32.totalorder %s33, 0
      %p253 = por %p251, %p252
      %p254 = scmp.ne.s32.totalorder %s242, %s243
      %p255 = scmp.eq.s32.totalorder %s34, 1
      %p256 = por %p254, %p255
      %p258 = scmp.ne.s32.totalorder %s243, %s257
      %p259 = scmp.eq.s32.totalorder %s34, 0
      %p260 = por %p258, %p259
      %s262 = sadd.s32 %s261, 1
      %p265 = scmp.eq.s32.totalorder %s28, 1
      %p266 = scmp.ne.s32.totalorder %s261, %s263
      %p267 = scmp.eq.s32.totalorder %s28, 0
      %p268 = por %p266, %p267
      %p269 = scmp.ne.s32.totalorder %s261, %s263
      %p270 = scmp.eq.s32.totalorder %s33, 1
      %p271 = por %p269, %p270
      %p272 = scmp.ne.s32.totalorder %s263, %s264
      %p273 = scmp.eq.s32.totalorder %s33, 0
      %p274 = por %p272, %p273
      %p275 = scmp.ne.s32.totalorder %s263, %s264
      %p276 = scmp.eq.s32.totalorder %s34, 1
      %p277 = por %p275, %p276
      %p279 = scmp.ne.s32.totalorder %s264, %s278
      %p280 = scmp.eq.s32.totalorder %s34, 0
      %p281 = por %p279, %p280
      %s283 = sadd.s32 %s282, 1
      %p286 = scmp.eq.s32.totalorder %s28, 1
      %p287 = scmp.ne.s32.totalorder %s282, %s284
      %p288 = scmp.eq.s32.totalorder %s28, 0
      %p289 = por %p287, %p288
      %p290 = scmp.ne.s32.totalorder %s282, %s284
      %p291 = scmp.eq.s32.totalorder %s33, 1
      %p292 = por %p290, %p291
      %p293 = scmp.ne.s32.totalorder %s284, %s285
      %p294 = scmp.eq.s32.totalorder %s33, 0
      %p295 = por %p293, %p294
      %p296 = scmp.ne.s32.totalorder %s284, %s285
      %p297 = scmp.eq.s32.totalorder %s34, 1
      %p298 = por %p296, %p297
      %p300 = scmp.ne.s32.totalorder %s285, %s299
      %p301 = scmp.eq.s32.totalorder %s34, 0
      %p302 = por %p300, %p301
      %s304 = sadd.s32 %s303, 1
      %p307 = scmp.eq.s32.totalorder %s28, 1
      %p308 = scmp.ne.s32.totalorder %s303, %s305
      %p309 = scmp.eq.s32.totalorder %s28, 0
      %p310 = por %p308, %p309
      %p311 = scmp.ne.s32.totalorder %s303, %s305
      %p312 = scmp.eq.s32.totalorder %s33, 1
      %p313 = por %p311, %p312
      %p314 = scmp.ne.s32.totalorder %s305, %s306
      %p315 = scmp.eq.s32.totalorder %s33, 0
      %p316 = por %p314, %p315
      %p317 = scmp.ne.s32.totalorder %s305, %s306
      %p318 = scmp.eq.s32.totalorder %s34, 1
      %p319 = por %p317, %p318
      %p321 = scmp.ne.s32.totalorder %s306, %s320
      %p322 = scmp.eq.s32.totalorder %s34, 0
      %p323 = por %p321, %p322
      %s325 = sadd.s32 %s324, 1
      %p328 = scmp.eq.s32.totalorder %s28, 1
      %p329 = scmp.ne.s32.totalorder %s324, %s326
      %p330 = scmp.eq.s32.totalorder %s28, 0
      %p331 = por %p329, %p330
      %p332 = scmp.ne.s32.totalorder %s324, %s326
      %p333 = scmp.eq.s32.totalorder %s33, 1
      %p334 = por %p332, %p333
      %p335 = scmp.ne.s32.totalorder %s326, %s327
      %p336 = scmp.eq.s32.totalorder %s33, 0
      %p337 = por %p335, %p336
      %p338 = scmp.ne.s32.totalorder %s326, %s327
      %p339 = scmp.eq.s32.totalorder %s34, 1
      %p340 = por %p338, %p339
      %p342 = scmp.ne.s32.totalorder %s327, %s341
      %p343 = scmp.eq.s32.totalorder %s34, 0
      %p344 = por %p342, %p343
      %s346 = sadd.s32 %s345, 1
      %p349 = scmp.eq.s32.totalorder %s28, 1
      %p350 = scmp.ne.s32.totalorder %s345, %s347
      %p351 = scmp.eq.s32.totalorder %s28, 0
      %p352 = por %p350, %p351
      %p353 = scmp.ne.s32.totalorder %s345, %s347
      %p354 = scmp.eq.s32.totalorder %s33, 1
      %p355 = por %p353, %p354
      %p356 = scmp.ne.s32.totalorder %s347, %s348
      %p357 = scmp.eq.s32.totalorder %s33, 0
      %p358 = por %p356, %p357
      %p359 = scmp.ne.s32.totalorder %s347, %s348
      %p360 = scmp.eq.s32.totalorder %s34, 1
      %p361 = por %p359, %p360
      %p363 = scmp.ne.s32.totalorder %s348, %s362
      %p364 = scmp.eq.s32.totalorder %s34, 0
      %p365 = por %p363, %p364
      %s366 = ssub.s32 %s28, %s35
      %p367 = scmp.eq.s32.totalorder %s366, 0
      %s369 = sadd.s32 %s368, 1
      %s370 = scalar_select %p367, %s368, %s369
      %p373 = pneg %p367
      %p374 = scmp.eq.s32.totalorder %s28, 1
      %p375 = por %p373, %p374
      %p376 = scmp.ne.s32.totalorder %s368, %s371
      %p377 = scmp.eq.s32.totalorder %s28, 0
      %p378 = por %p376, %p377
      %p379 = scmp.ne.s32.totalorder %s368, %s371
      %p380 = scmp.eq.s32.totalorder %s33, 1
      %p381 = por %p379, %p380
      %p382 = scmp.ne.s32.totalorder %s371, %s372
      %p383 = scmp.eq.s32.totalorder %s33, 0
      %p384 = por %p382, %p383
      %p385 = scmp.ne.s32.totalorder %s371, %s372
      %p386 = scmp.eq.s32.totalorder %s34, 1
      %p387 = por %p385, %p386
      %p389 = scmp.ne.s32.totalorder %s372, %s388
      %p390 = scmp.eq.s32.totalorder %s34, 0
      %p391 = por %p389, %p390
      %s392 = ssub.s32 %s28, %s35
      %p393 = scmp.eq.s32.totalorder %s392, 0
      %s395 = sadd.s32 %s394, 1
      %s396 = scalar_select %p393, %s394, %s395
      %p399 = pneg %p393
      %p400 = scmp.eq.s32.totalorder %s28, 1
      %p401 = por %p399, %p400
      %p402 = scmp.ne.s32.totalorder %s394, %s397
      %p403 = scmp.eq.s32.totalorder %s28, 0
      %p404 = por %p402, %p403
      %p405 = scmp.ne.s32.totalorder %s394, %s397
      %p406 = scmp.eq.s32.totalorder %s33, 1
      %p407 = por %p405, %p406
      %p408 = scmp.ne.s32.totalorder %s397, %s398
      %p409 = scmp.eq.s32.totalorder %s33, 0
      %p410 = por %p408, %p409
      %p411 = scmp.ne.s32.totalorder %s397, %s398
      %p412 = scmp.eq.s32.totalorder %s34, 1
      %p413 = por %p411, %p412
      %p415 = scmp.ne.s32.totalorder %s398, %s414
      %p416 = scmp.eq.s32.totalorder %s34, 0
      %p417 = por %p415, %p416
      %p418 = scmp.le.s32.totalorder 1, %s28
      %p419 = scmp.lt.s32.totalorder %s28, 3
      %p420 = pnand %p418, %p419
      %p421 = pneg %p420
      // Predicated region
      $region9: #{tpu_custom_call.1} parent=5 // pred_check
        _
      $region10: #{tpu_custom_call.1} parent=5 // pred_check_branch
        %423 = sbr.rel (%p420) target = $region12
      $region11: #{tpu_custom_call.1} parent=5 // pred_region
        %s424 = ssub.s32 %s28, 1
        // Predicated region
        $region13: #{tpu_custom_call.1} parent=11 // pred_check
          %p425 = pneg %p127
        $region14: #{tpu_custom_call.1} parent=11 // pred_check_branch
          %427 = sbr.rel (%p425) target = $region16
        $region15: #{tpu_custom_call.1} parent=11 // pred_region
          %s429 = ssub.s32 256, 256
          %430 = vsyncadd [#allocation6], %s429
          %s431 = sshll.u32 [#allocation5], 4
          %s432 = int_to_ptr.vmem [resolvable:$true] %s431
          %437 = dma.hbm_to_vmem [thread:$0]  %s3, 256, %s432, [#allocation6], 64, 64, 4
        $region16: #{tpu_custom_call.1} parent=11 // pred_fallthru
          _
        // Predicated region
        $region17: #{tpu_custom_call.1} parent=11 // pred_check
          %p438 = pneg %p148
        $region18: #{tpu_custom_call.1} parent=11 // pred_check_branch
          %440 = sbr.rel (%p438) target = $region20
        $region19: #{tpu_custom_call.1} parent=11 // pred_region
          %s442 = ssub.s32 256, 256
          %443 = vsyncadd [#allocation8], %s442
          %s444 = sshll.u32 [#allocation7], 4
          %s445 = int_to_ptr.vmem [resolvable:$true] %s444
          %450 = dma.hbm_to_vmem [thread:$0]  %s4, 256, %s445, [#allocation8], 64, 64, 4
        $region20: #{tpu_custom_call.1} parent=11 // pred_fallthru
          _
        // Predicated region
        $region21: #{tpu_custom_call.1} parent=11 // pred_check
          %p451 = pneg %p169
        $region22: #{tpu_custom_call.1} parent=11 // pred_check_branch
          %453 = sbr.rel (%p451) target = $region24
        $region23: #{tpu_custom_call.1} parent=11 // pred_region
          _
        $region24: #{tpu_custom_call.1} parent=11 // pred_fallthru
          _
        // Predicated region
        $region25: #{tpu_custom_call.1} parent=11 // pred_check
          %p454 = pneg %p190
        $region26: #{tpu_custom_call.1} parent=11 // pred_check_branch
          %456 = sbr.rel (%p454) target = $region28
        $region27: #{tpu_custom_call.1} parent=11 // pred_region
          _
        $region28: #{tpu_custom_call.1} parent=11 // pred_fallthru
          _
        // Predicated region
        $region29: #{tpu_custom_call.1} parent=11 // pred_check
          %p457 = pneg %p211
        $region30: #{tpu_custom_call.1} parent=11 // pred_check_branch
          %459 = sbr.rel (%p457) target = $region32
        $region31: #{tpu_custom_call.1} parent=11 // pred_region
          %s461 = ssub.s32 256, 256
          %462 = vsyncadd [#allocation8], %s461
          %s463 = sshll.u32 [#allocation9], 4
          %s464 = int_to_ptr.vmem [resolvable:$true] %s463
          %469 = dma.hbm_to_vmem [thread:$0]  %s7, 256, %s464, [#allocation8], 64, 64, 4
        $region32: #{tpu_custom_call.1} parent=11 // pred_fallthru
          _
        // Predicated region
        $region33: #{tpu_custom_call.1} parent=11 // pred_check
          %p470 = pneg %p232
        $region34: #{tpu_custom_call.1} parent=11 // pred_check_branch
          %472 = sbr.rel (%p470) target = $region36
        $region35: #{tpu_custom_call.1} parent=11 // pred_region
          _
        $region36: #{tpu_custom_call.1} parent=11 // pred_fallthru
          _
        // Predicated region
        $region37: #{tpu_custom_call.1} parent=11 // pred_check
          %p473 = pneg %p253
        $region38: #{tpu_custom_call.1} parent=11 // pred_check_branch
          %475 = sbr.rel (%p473) target = $region40
        $region39: #{tpu_custom_call.1} parent=11 // pred_region
          %s477 = ssub.s32 256, 256
          %478 = vsyncadd [#allocation11], %s477
          %s479 = sshll.u32 [#allocation10], 4
          %s480 = int_to_ptr.vmem [resolvable:$true] %s479
          %485 = dma.hbm_to_vmem [thread:$0]  %s9, 256, %s480, [#allocation11], 64, 64, 4
        $region40: #{tpu_custom_call.1} parent=11 // pred_fallthru
          _
        // Predicated region
        $region41: #{tpu_custom_call.1} parent=11 // pred_check
          %p486 = pneg %p274
        $region42: #{tpu_custom_call.1} parent=11 // pred_check_branch
          %488 = sbr.rel (%p486) target = $region44
        $region43: #{tpu_custom_call.1} parent=11 // pred_region
          _
        $region44: #{tpu_custom_call.1} parent=11 // pred_fallthru
          _
        // Predicated region
        $region45: #{tpu_custom_call.1} parent=11 // pred_check
          %p489 = pneg %p295
        $region46: #{tpu_custom_call.1} parent=11 // pred_check_branch
          %491 = sbr.rel (%p489) target = $region48
        $region47: #{tpu_custom_call.1} parent=11 // pred_region
          _
        $region48: #{tpu_custom_call.1} parent=11 // pred_fallthru
          _
        // Predicated region
        $region49: #{tpu_custom_call.1} parent=11 // pred_check
          %p492 = pneg %p316
        $region50: #{tpu_custom_call.1} parent=11 // pred_check_branch
          %494 = sbr.rel (%p492) target = $region52
        $region51: #{tpu_custom_call.1} parent=11 // pred_region
          _
        $region52: #{tpu_custom_call.1} parent=11 // pred_fallthru
          _
        // Predicated region
        $region53: #{tpu_custom_call.1} parent=11 // pred_check
          %p495 = pneg %p337
        $region54: #{tpu_custom_call.1} parent=11 // pred_check_branch
          %497 = sbr.rel (%p495) target = $region56
        $region55: #{tpu_custom_call.1} parent=11 // pred_region
          _
        $region56: #{tpu_custom_call.1} parent=11 // pred_fallthru
          _
        // Predicated region
        $region57: #{tpu_custom_call.1} parent=11 // pred_check
          %p498 = pneg %p358
        $region58: #{tpu_custom_call.1} parent=11 // pred_check_branch
          %500 = sbr.rel (%p498) target = $region60
        $region59: #{tpu_custom_call.1} parent=11 // pred_region
          _
        $region60: #{tpu_custom_call.1} parent=11 // pred_fallthru
          _
      $region12: #{tpu_custom_call.1} parent=5 // pred_fallthru
        _
      %p501 = scmp.lt.s32.totalorder %s28, 2
      // Predicated region
      $region61: #{tpu_custom_call.1} parent=5 // pred_check
        %p502 = pneg %p501
      $region62: #{tpu_custom_call.1} parent=5 // pred_check_branch
        %504 = sbr.rel (%p502) target = $region64
      $region63: #{tpu_custom_call.1} parent=5 // pred_region
        // Predicated region
        $region65: #{tpu_custom_call.1} parent=63 // pred_check
          %p505 = pneg %p48
        $region66: #{tpu_custom_call.1} parent=63 // pred_check_branch
          %507 = sbr.rel (%p505) target = $region68
        $region67: #{tpu_custom_call.1} parent=63 // pred_region
          %p508 = scmp.lt.s32.totalorder %s28, 1
          %s509 = scalar_select %p508, %s28, 1
          %s510 = smul.addr %s509, 4
          %s511 = smul.addr %s510, 4
          %s512 = scalar_lea.vmem %s0, %s511
        $region68: #{tpu_custom_call.1} parent=63 // pred_fallthru
          _
        // Predicated region
        $region69: #{tpu_custom_call.1} parent=63 // pred_check
          %p513 = pneg %p74
        $region70: #{tpu_custom_call.1} parent=63 // pred_check_branch
          %515 = sbr.rel (%p513) target = $region72
        $region71: #{tpu_custom_call.1} parent=63 // pred_region
          %p516 = scmp.lt.s32.totalorder %s28, 1
          %s517 = scalar_select %p516, %s28, 1
          %s518 = smul.addr %s517, 8
          %s519 = scalar_lea.vmem %s1, %s518
        $region72: #{tpu_custom_call.1} parent=63 // pred_fallthru
          _
        // Predicated region
        $region73: #{tpu_custom_call.1} parent=63 // pred_check
          %p520 = pneg %p100
        $region74: #{tpu_custom_call.1} parent=63 // pred_check_branch
          %522 = sbr.rel (%p520) target = $region76
        $region75: #{tpu_custom_call.1} parent=63 // pred_region
          %p523 = scmp.lt.s32.totalorder %s28, 1
          %s524 = scalar_select %p523, %s28, 1
          %s525 = scalar_lea.vmem %s2, %s524
        $region76: #{tpu_custom_call.1} parent=63 // pred_fallthru
          _
      $region64: #{tpu_custom_call.1} parent=5 // pred_fallthru
        _
      %p526 = scmp.le.s32.totalorder 1, %s28
      %p527 = scmp.lt.s32.totalorder %s28, 3
      %p528 = pnand %p526, %p527
      %p529 = pneg %p528
      // Predicated region
      $region77: #{tpu_custom_call.1} parent=5 // pred_check
        _
      $region78: #{tpu_custom_call.1} parent=5 // pred_check_branch
        %531 = sbr.rel (%p528) target = $region80
      $region79: #{tpu_custom_call.1} parent=5 // pred_region
        %s532 = ssub.s32 %s28, 1
        // Predicated region
        $region81: #{tpu_custom_call.1} parent=79 // pred_check
          %p533 = pneg %p127
        $region82: #{tpu_custom_call.1} parent=79 // pred_check_branch
          %535 = sbr.rel (%p533) target = $region84
        $region83: #{tpu_custom_call.1} parent=79 // pred_region
          %536 = dma.done [#allocation6], 256
        $region84: #{tpu_custom_call.1} parent=79 // pred_fallthru
          _
        // Predicated region
        $region85: #{tpu_custom_call.1} parent=79 // pred_check
          %p537 = pneg %p148
        $region86: #{tpu_custom_call.1} parent=79 // pred_check_branch
          %539 = sbr.rel (%p537) target = $region88
        $region87: #{tpu_custom_call.1} parent=79 // pred_region
          %540 = dma.done [#allocation8], 256
        $region88: #{tpu_custom_call.1} parent=79 // pred_fallthru
          _
        // Predicated region
        $region89: #{tpu_custom_call.1} parent=79 // pred_check
          %p541 = pneg %p211
        $region90: #{tpu_custom_call.1} parent=79 // pred_check_branch
          %543 = sbr.rel (%p541) target = $region92
        $region91: #{tpu_custom_call.1} parent=79 // pred_region
          %544 = dma.done [#allocation8], 256
        $region92: #{tpu_custom_call.1} parent=79 // pred_fallthru
          _
        // Predicated region
        $region93: #{tpu_custom_call.1} parent=79 // pred_check
          %p545 = pneg %p253
        $region94: #{tpu_custom_call.1} parent=79 // pred_check_branch
          %547 = sbr.rel (%p545) target = $region96
        $region95: #{tpu_custom_call.1} parent=79 // pred_region
          %548 = dma.done [#allocation11], 256
        $region96: #{tpu_custom_call.1} parent=79 // pred_fallthru
          _
        %p549 = scmp.lt.s32.totalorder %s33, 1
        %s550 = scalar_select %p549, %s33, 1
        %s551 = smul.addr %s550, 4
        %s552 = smul.addr %s551, 4
        %s553 = scalar_lea.vmem %s0, %s552
        %p554 = pneg %p54
        %p555 = pneg %p51
        %p556 = scmp.lt.s32.totalorder %s33, 1
        %s557 = scalar_select %p556, %s33, 1
        %s558 = smul.addr %s557, 8
        %s559 = scalar_lea.vmem %s1, %s558
        %p560 = pneg %p80
        %p561 = pneg %p77
        %p562 = scmp.lt.s32.totalorder %s33, 1
        %s563 = scalar_select %p562, %s33, 1
        %s564 = scalar_lea.vmem %s2, %s563
        %p565 = pneg %p106
        %p566 = pneg %p103
        %p567 = pneg %p127
        %p568 = pneg %p124
        %p569 = pneg %p148
        %p570 = pneg %p145
        %p571 = pneg %p169
        %p572 = pneg %p166
        %p573 = pneg %p190
        %p574 = pneg %p187
        %p575 = pneg %p211
        %p576 = pneg %p208
        %p577 = pneg %p232
        %p578 = pneg %p229
        %p579 = pneg %p253
        %p580 = pneg %p250
        %p581 = pneg %p274
        %p582 = pneg %p271
        %p583 = pneg %p295
        %p584 = pneg %p292
        %p585 = pneg %p316
        %p586 = pneg %p313
        %p587 = pneg %p337
        %p588 = pneg %p334
        %p589 = pneg %p358
        %p590 = pneg %p355
        %p591 = pneg %p384
        %p592 = pneg %p381
        %p593 = scmp.lt.s32.totalorder %s33, 1
        %s594 = scalar_select %p593, %s33, 1
        %s595 = smul.addr %s594, 4
        %s596 = scalar_lea.vmem %s15, %s595
        %p597 = pneg %p410
        %p598 = pneg %p407
        %p599 = scmp.lt.s32.totalorder %s33, 1
        %s600 = scalar_select %p599, %s33, 1
        %s601 = smul.addr %s600, 4
        %s602 = scalar_lea.vmem %s16, %s601
        %p603 = scmp.lt.s32.totalorder %s33, 1
        %s604 = scalar_select %p603, %s33, 1
        %s605 = smul.addr %s604, 4
        %s606 = smul.addr %s605, 4
        %s607 = scalar_lea.vmem %s0, %s606
        %p608 = scmp.lt.s32.totalorder %s33, 1
        %s609 = scalar_select %p608, %s33, 1
        %s610 = smul.addr %s609, 8
        %s611 = scalar_lea.vmem %s1, %s610
        %p612 = scmp.lt.s32.totalorder %s33, 1
        %s613 = scalar_select %p612, %s33, 1
        %s614 = scalar_lea.vmem %s2, %s613
        %p615 = scmp.lt.s32.totalorder %s33, 1
        %s616 = scalar_select %p615, %s33, 1
        %s617 = smul.addr %s616, 4
        %s618 = scalar_lea.vmem %s15, %s617
        %p619 = scmp.lt.s32.totalorder %s33, 1
        %s620 = scalar_select %p619, %s33, 1
        %s621 = smul.addr %s620, 4
        %s622 = scalar_lea.vmem %s16, %s621
        %v624 = vld [vmem:[%s607] sm:$0xf]
        %v625 = vld [vmem:[%s607 + $0x4] sm:$0xf]
        %v626 = vld [vmem:[%s607 + $0x8] sm:$0xf]
        %v627 = vld [vmem:[%s607 + $0xc] sm:$0xf]
        %v628 = vld [vmem:[#allocation5] sm:$0xf]
        %v629 = vld [vmem:[#allocation5 + $0x4] sm:$0xf]
        %v630 = vld [vmem:[%s5] sm:$0x1]
        %v632 = vlaneseq
        %v633 = vshrl.u32 %v632, 7
        %v634 = vsub.s32 0, %v633
        %v635 = vrot.slane %v630, %v634
        %v641 = vunpack.c.l.b16 %v624
        %v642 = vunpack.c.l.b16 %v625
        %v643 = vunpack.c.l.b16 %v626
        %v644 = vunpack.c.l.b16 %v627
        %v645 = vpack.c.b16 %v642, %v641
        %v646 = vpack.c.b16 %v644, %v643
        %v649 = vunpack.c.l.b16 %v628
        %v650 = vunpack.c.l.b16 %v629
        %v651 = vpack.c.b16 %v650, %v649
        %vm653 = vcmask 130048
        %v655 = vsel %vm653, %v645, 0
        %v658 = vsel %vm653, %v646, 0
        %660 = vmatprep.subr.bf16.mxu0 0
        %661 = vmatpush1.bf16.msra.mxu0 0
        %662 = vmatprep.subr.bf16.mxu0 0
        %663 = vmatpush1.bf16.msra.mxu0 0
        %664 = vmatprep.subr.bf16.mxu0 0
        %665 = vmatpush1.bf16.msra.mxu0 0
        %666 = vmatprep.subr.bf16.mxu0 0
        %667 = vmatpush1.bf16.msra.mxu0 0
        %668 = vmatprep.subr.bf16.mxu0 0
        %669 = vmatpush1.bf16.msra.mxu0 0
        %670 = vmatprep.subr.bf16.mxu0 0
        %671 = vmatpush1.bf16.msra.mxu0 0
        %672 = vmatprep.subr.bf16.mxu0 0
        %673 = vmatpush1.bf16.msra.mxu0 0
        %674 = vmatprep.subr.bf16.mxu0 0
        %675 = vmatpush1.bf16.msra.mxu0 %v651
        %676 = vmatprep.subr.bf16.mxu0 0
        %677 = vmatpush2.bf16.msra.mxu0 0
        %678 = vmatprep.subr.bf16.mxu0 0
        %679 = vmatpush2.bf16.msra.mxu0 0
        %680 = vmatprep.subr.bf16.mxu0 0
        %681 = vmatpush2.bf16.msra.mxu0 0
        %682 = vmatprep.subr.bf16.mxu0 0
        %683 = vmatpush2.bf16.msra.mxu0 0
        %684 = vmatprep.subr.bf16.mxu0 0
        %685 = vmatpush2.bf16.msra.mxu0 0
        %686 = vmatprep.subr.bf16.mxu0 0
        %687 = vmatpush2.bf16.msra.mxu0 0
        %688 = vmatprep.subr.bf16.mxu0 0
        %689 = vmatpush2.bf16.msra.mxu0 0
        %690 = vmatprep.subr.bf16.mxu0 0
        %691 = vmatpush2.bf16.msra.mxu0 0
        %692 = vmatprep.mubr.bf16.mxu0 0
        %693 = vmatmul.mubr.bf16.gmra.mxu0 %v655
        %v694 = vpop.f32.mrf.mxu0
        %v695 = vadd.f32 %v635, %v694
        %v696 = vpop.f32.mrf.mxu0
        %v697 = vpop.f32.mrf.mxu0
        %v698 = vadd.f32 %v635, %v697
        %v699 = vpop.f32.mrf.mxu0
        %700 = vmatprep.mubr.bf16.mxu0 0
        %701 = vmatmul.mubr.bf16.gmra.mxu0 %v658
        %v702 = vpop.f32.mrf.mxu0
        %v703 = vadd.f32 %v635, %v702
        %v704 = vpop.f32.mrf.mxu0
        %v705 = vpop.f32.mrf.mxu0
        %v706 = vadd.f32 %v635, %v705
        %v707 = vpop.f32.mrf.mxu0
        %708 = vdwg.mxu0
        %s709 = scalar_lea.vmem [#allocation5], 8
        %v710 = vld [vmem:[%s709] sm:$0xf]
        %v711 = vld [vmem:[%s709 + $0x4] sm:$0xf]
        %s712 = scalar_lea.vmem %s5, 1
        %v713 = vld [vmem:[%s712] sm:$0x1]
        %v715 = vlaneseq
        %v716 = vshrl.u32 %v715, 7
        %v717 = vsub.s32 0, %v716
        %v718 = vrot.slane %v713, %v717
        %v722 = vunpack.c.l.b16 %v710
        %v723 = vunpack.c.l.b16 %v711
        %v724 = vpack.c.b16 %v723, %v722
        %726 = vmatprep.subr.bf16.mxu0 0
        %727 = vmatpush1.bf16.msra.mxu0 0
        %728 = vmatprep.subr.bf16.mxu0 0
        %729 = vmatpush1.bf16.msra.mxu0 0
        %730 = vmatprep.subr.bf16.mxu0 0
        %731 = vmatpush1.bf16.msra.mxu0 0
        %732 = vmatprep.subr.bf16.mxu0 0
        %733 = vmatpush1.bf16.msra.mxu0 0
        %734 = vmatprep.subr.bf16.mxu0 0
        %735 = vmatpush1.bf16.msra.mxu0 0
        %736 = vmatprep.subr.bf16.mxu0 0
        %737 = vmatpush1.bf16.msra.mxu0 0
        %738 = vmatprep.subr.bf16.mxu0 0
        %739 = vmatpush1.bf16.msra.mxu0 0
        %740 = vmatprep.subr.bf16.mxu0 0
        %741 = vmatpush1.bf16.msra.mxu0 %v724
        %742 = vmatprep.subr.bf16.mxu0 0
        %743 = vmatpush2.bf16.msra.mxu0 0
        %744 = vmatprep.subr.bf16.mxu0 0
        %745 = vmatpush2.bf16.msra.mxu0 0
        %746 = vmatprep.subr.bf16.mxu0 0
        %747 = vmatpush2.bf16.msra.mxu0 0
        %748 = vmatprep.subr.bf16.mxu0 0
        %749 = vmatpush2.bf16.msra.mxu0 0
        %750 = vmatprep.subr.bf16.mxu0 0
        %751 = vmatpush2.bf16.msra.mxu0 0
        %752 = vmatprep.subr.bf16.mxu0 0
        %753 = vmatpush2.bf16.msra.mxu0 0
        %754 = vmatprep.subr.bf16.mxu0 0
        %755 = vmatpush2.bf16.msra.mxu0 0
        %756 = vmatprep.subr.bf16.mxu0 0
        %757 = vmatpush2.bf16.msra.mxu0 0
        %758 = vmatprep.mubr.bf16.mxu0 0
        %759 = vmatmul.mubr.bf16.gmra.mxu0 %v655
        %v760 = vpop.f32.mrf.mxu0
        %v761 = vadd.f32 %v718, %v760
        %v762 = vpop.f32.mrf.mxu0
        %v763 = vpop.f32.mrf.mxu0
        %v764 = vadd.f32 %v718, %v763
        %v765 = vpop.f32.mrf.mxu0
        %766 = vmatprep.mubr.bf16.mxu0 0
        %767 = vmatmul.mubr.bf16.gmra.mxu0 %v658
        %v768 = vpop.f32.mrf.mxu0
        %v769 = vadd.f32 %v718, %v768
        %v770 = vpop.f32.mrf.mxu0
        %v771 = vpop.f32.mrf.mxu0
        %v772 = vadd.f32 %v718, %v771
        %v773 = vpop.f32.mrf.mxu0
        %774 = vdwg.mxu0
        %v775 = vld [vmem:[#allocation7] sm:$0xf]
        %v776 = vld [vmem:[#allocation7 + $0x4] sm:$0xf]
        %s777 = scalar_lea.vmem [#allocation7], 8
        %v778 = vld [vmem:[%s777] sm:$0xf]
        %v779 = vld [vmem:[%s777 + $0x4] sm:$0xf]
        %v782 = vunpack.c.l.b16 %v775
        %v783 = vunpack.c.l.b16 %v776
        %v784 = vpack.c.b16 %v783, %v782
        %v787 = vsel %vm653, 0, 0
        %789 = vmatprep.subr.bf16.mxu0 0
        %790 = vmatpush1.bf16.msra.mxu0 0
        %791 = vmatprep.subr.bf16.mxu0 0
        %792 = vmatpush1.bf16.msra.mxu0 0
        %793 = vmatprep.subr.bf16.mxu0 0
        %794 = vmatpush1.bf16.msra.mxu0 0
        %795 = vmatprep.subr.bf16.mxu0 0
        %796 = vmatpush1.bf16.msra.mxu0 0
        %797 = vmatprep.subr.bf16.mxu0 0
        %798 = vmatpush1.bf16.msra.mxu0 0
        %799 = vmatprep.subr.bf16.mxu0 0
        %800 = vmatpush1.bf16.msra.mxu0 0
        %801 = vmatprep.subr.bf16.mxu0 0
        %802 = vmatpush1.bf16.msra.mxu0 0
        %803 = vmatprep.subr.bf16.mxu0 0
        %804 = vmatpush1.bf16.msra.mxu0 %v784
        %805 = vmatprep.subr.bf16.mxu0 0
        %806 = vmatpush2.bf16.msra.mxu0 0
        %807 = vmatprep.subr.bf16.mxu0 0
        %808 = vmatpush2.bf16.msra.mxu0 0
        %809 = vmatprep.subr.bf16.mxu0 0
        %810 = vmatpush2.bf16.msra.mxu0 0
        %811 = vmatprep.subr.bf16.mxu0 0
        %812 = vmatpush2.bf16.msra.mxu0 0
        %813 = vmatprep.subr.bf16.mxu0 0
        %814 = vmatpush2.bf16.msra.mxu0 0
        %815 = vmatprep.subr.bf16.mxu0 0
        %816 = vmatpush2.bf16.msra.mxu0 0
        %817 = vmatprep.subr.bf16.mxu0 0
        %818 = vmatpush2.bf16.msra.mxu0 0
        %819 = vmatprep.subr.bf16.mxu0 0
        %820 = vmatpush2.bf16.msra.mxu0 0
        %821 = vmatprep.mubr.bf16.mxu0 0
        %822 = vmatmul.mubr.bf16.gmra.mxu0 %v787
        %v823 = vpop.f32.mrf.mxu0
        %v824 = vadd.f32 0.0, %v823
        %v825 = vpop.f32.mrf.mxu0
        %v826 = vpop.f32.mrf.mxu0
        %v827 = vpop.f32.mrf.mxu0
        %828 = vdwg.mxu0
        %v829 = vadd.f32 %v695, %v824
        %v830 = vxor.u32 %v829, 2147483648
        %v831 = vmul.f32 %v830, 1.442695
        %v832 = vpow.pop %v831
        %v833 = vadd.f32 %v832, 1.0
        %v834 = vrcp.pop %v833
        %v835 = vmul.f32 1.0, %v834
        %v836 = vtanh.pop %v829
        %v837 = vmul.f32 %v835, 0.0
        %839 = vrot.lane.b32.xlu0 %v836, 80
        %v840 = vpop.permute.xlu0 %839
        %v842 = vmul.f32 %v835, %v840
        %844 = vrot.lane.b32.xlu0 %v842, 16
        %v845 = vpop.permute.xlu0 %844
        %v847 = vadd.f32 %v837, %v845
        %v848 = vtanh.pop %v847
        %850 = vrot.lane.b32.xlu0 %v848, 16
        %v851 = vpop.permute.xlu0 %850
        %v853 = vmul.f32 %v835, %v851
        %v856 = vunpack.c.l.b16 %v778
        %v857 = vunpack.c.l.b16 %v779
        %v858 = vpack.c.b16 %v857, %v856
        %860 = vmatprep.subr.bf16.mxu0 0
        %861 = vmatpush1.bf16.msra.mxu0 0
        %862 = vmatprep.subr.bf16.mxu0 0
        %863 = vmatpush1.bf16.msra.mxu0 0
        %864 = vmatprep.subr.bf16.mxu0 0
        %865 = vmatpush1.bf16.msra.mxu0 0
        %866 = vmatprep.subr.bf16.mxu0 0
        %867 = vmatpush1.bf16.msra.mxu0 0
        %868 = vmatprep.subr.bf16.mxu0 0
        %869 = vmatpush1.bf16.msra.mxu0 0
        %870 = vmatprep.subr.bf16.mxu0 0
        %871 = vmatpush1.bf16.msra.mxu0 0
        %872 = vmatprep.subr.bf16.mxu0 0
        %873 = vmatpush1.bf16.msra.mxu0 0
        %874 = vmatprep.subr.bf16.mxu0 0
        %875 = vmatpush1.bf16.msra.mxu0 %v858
        %876 = vmatprep.subr.bf16.mxu0 0
        %877 = vmatpush2.bf16.msra.mxu0 0
        %878 = vmatprep.subr.bf16.mxu0 0
        %879 = vmatpush2.bf16.msra.mxu0 0
        %880 = vmatprep.subr.bf16.mxu0 0
        %881 = vmatpush2.bf16.msra.mxu0 0
        %882 = vmatprep.subr.bf16.mxu0 0
        %883 = vmatpush2.bf16.msra.mxu0 0
        %884 = vmatprep.subr.bf16.mxu0 0
        %885 = vmatpush2.bf16.msra.mxu0 0
        %886 = vmatprep.subr.bf16.mxu0 0
        %887 = vmatpush2.bf16.msra.mxu0 0
        %888 = vmatprep.subr.bf16.mxu0 0
        %889 = vmatpush2.bf16.msra.mxu0 0
        %890 = vmatprep.subr.bf16.mxu0 0
        %891 = vmatpush2.bf16.msra.mxu0 0
        %892 = vmatprep.mubr.bf16.mxu0 0
        %893 = vmatmul.mubr.bf16.gmra.mxu0 %v787
        %v894 = vpop.f32.mrf.mxu0
        %v895 = vadd.f32 0.0, %v894
        %v896 = vpop.f32.mrf.mxu0
        %v897 = vpop.f32.mrf.mxu0
        %v898 = vpop.f32.mrf.mxu0
        %899 = vdwg.mxu0
        %v901 = vrot.slane %v895, 4
        %v903 = vadd.f32 %v772, %v901
        %v904 = vxor.u32 %v903, 2147483648
        %v905 = vmul.f32 %v904, 1.442695
        %v906 = vpow.pop %v905
        %v907 = vadd.f32 %v906, 1.0
        %v908 = vrcp.pop %v907
        %v909 = vmul.f32 1.0, %v908
        %v910 = vtanh.pop %v903
        %v911 = vmul.f32 %v909, 0.0
        %913 = vrot.lane.b32.xlu0 %v910, 80
        %v914 = vpop.permute.xlu0 %913
        %v916 = vmul.f32 %v909, %v914
        %918 = vrot.lane.b32.xlu0 %v916, 16
        %v919 = vpop.permute.xlu0 %918
        %v921 = vadd.f32 %v911, %v919
        %v922 = vtanh.pop %v921
        %924 = vrot.lane.b32.xlu0 %v922, 16
        %v925 = vpop.permute.xlu0 %924
        %v927 = vmul.f32 %v909, %v925
        %929 = vrot.lane.b32.xlu0 %v853, 96
        %v930 = vpop.permute.xlu0 %929
        %vm932 = vcmask 125952
        %933 = vst.msk [vmem:[#allocation2] sm:$0xf] %vm932, %v930
        %935 = vrot.lane.b32.xlu0 %v927, 112
        %v936 = vpop.permute.xlu0 %935
        %vm938 = vcmask 261252
        %939 = vst.msk [vmem:[#allocation2 + $0x18] sm:$0xf0] %vm938, %v936
        %v940 = vpack.c.bf16 %v853, %v853
        %942 = vrot.lane.b32.xlu0 %v940, 96
        %v943 = vpop.permute.xlu0 %942
        %v945 = vsel %vm653, %v943, 0
        %947 = vmatprep.subr.bf16.mxu0 0
        %948 = vmatpush1.bf16.msra.mxu0 0
        %949 = vmatprep.subr.bf16.mxu0 0
        %950 = vmatpush1.bf16.msra.mxu0 0
        %951 = vmatprep.subr.bf16.mxu0 0
        %952 = vmatpush1.bf16.msra.mxu0 0
        %953 = vmatprep.subr.bf16.mxu0 0
        %954 = vmatpush1.bf16.msra.mxu0 0
        %955 = vmatprep.subr.bf16.mxu0 0
        %956 = vmatpush1.bf16.msra.mxu0 0
        %957 = vmatprep.subr.bf16.mxu0 0
        %958 = vmatpush1.bf16.msra.mxu0 0
        %959 = vmatprep.subr.bf16.mxu0 0
        %960 = vmatpush1.bf16.msra.mxu0 0
        %961 = vmatprep.subr.bf16.mxu0 0
        %962 = vmatpush1.bf16.msra.mxu0 %v784
        %963 = vmatprep.subr.bf16.mxu0 0
        %964 = vmatpush2.bf16.msra.mxu0 0
        %965 = vmatprep.subr.bf16.mxu0 0
        %966 = vmatpush2.bf16.msra.mxu0 0
        %967 = vmatprep.subr.bf16.mxu0 0
        %968 = vmatpush2.bf16.msra.mxu0 0
        %969 = vmatprep.subr.bf16.mxu0 0
        %970 = vmatpush2.bf16.msra.mxu0 0
        %971 = vmatprep.subr.bf16.mxu0 0
        %972 = vmatpush2.bf16.msra.mxu0 0
        %973 = vmatprep.subr.bf16.mxu0 0
        %974 = vmatpush2.bf16.msra.mxu0 0
        %975 = vmatprep.subr.bf16.mxu0 0
        %976 = vmatpush2.bf16.msra.mxu0 0
        %977 = vmatprep.subr.bf16.mxu0 0
        %978 = vmatpush2.bf16.msra.mxu0 0
        %979 = vmatprep.mubr.bf16.mxu0 0
        %980 = vmatmul.mubr.bf16.gmra.mxu0 %v945
        %v981 = vpop.f32.mrf.mxu0
        %v982 = vadd.f32 0.0, %v981
        %v983 = vpop.f32.mrf.mxu0
        %v984 = vpop.f32.mrf.mxu0
        %v985 = vpop.f32.mrf.mxu0
        %986 = vdwg.mxu0
        %v988 = vrot.slane %v982, 4
        %v990 = vadd.f32 %v695, %v988
        %v991 = vxor.u32 %v990, 2147483648
        %v992 = vmul.f32 %v991, 1.442695
        %v993 = vpow.pop %v992
        %v994 = vadd.f32 %v993, 1.0
        %v995 = vrcp.pop %v994
        %v996 = vmul.f32 1.0, %v995
        %v997 = vtanh.pop %v990
        %v999 = vrot.slane %v847, 4
        %v1001 = vmul.f32 %v996, %v999
        %1003 = vrot.lane.b32.xlu0 %v997, 80
        %v1004 = vpop.permute.xlu0 %1003
        %v1006 = vmul.f32 %v996, %v1004
        %1008 = vrot.lane.b32.xlu0 %v1006, 16
        %v1009 = vpop.permute.xlu0 %1008
        %v1011 = vadd.f32 %v1001, %v1009
        %v1012 = vtanh.pop %v1011
        %1014 = vrot.lane.b32.xlu0 %v1012, 16
        %v1015 = vpop.permute.xlu0 %1014
        %v1017 = vmul.f32 %v996, %v1015
        %v1018 = vpack.c.bf16 %v927, %v927
        %v1020 = vrot.slane %v1018, 2
        %1021 = vrot.lane.b32.xlu0 %v1020, 96
        %v1022 = vpop.permute.xlu0 %1021
        %v1024 = vsel %vm653, %v1022, 0
        %1026 = vmatprep.subr.bf16.mxu0 0
        %1027 = vmatpush1.bf16.msra.mxu0 0
        %1028 = vmatprep.subr.bf16.mxu0 0
        %1029 = vmatpush1.bf16.msra.mxu0 0
        %1030 = vmatprep.subr.bf16.mxu0 0
        %1031 = vmatpush1.bf16.msra.mxu0 0
        %1032 = vmatprep.subr.bf16.mxu0 0
        %1033 = vmatpush1.bf16.msra.mxu0 0
        %1034 = vmatprep.subr.bf16.mxu0 0
        %1035 = vmatpush1.bf16.msra.mxu0 0
        %1036 = vmatprep.subr.bf16.mxu0 0
        %1037 = vmatpush1.bf16.msra.mxu0 0
        %1038 = vmatprep.subr.bf16.mxu0 0
        %1039 = vmatpush1.bf16.msra.mxu0 0
        %1040 = vmatprep.subr.bf16.mxu0 0
        %1041 = vmatpush1.bf16.msra.mxu0 %v858
        %1042 = vmatprep.subr.bf16.mxu0 0
        %1043 = vmatpush2.bf16.msra.mxu0 0
        %1044 = vmatprep.subr.bf16.mxu0 0
        %1045 = vmatpush2.bf16.msra.mxu0 0
        %1046 = vmatprep.subr.bf16.mxu0 0
        %1047 = vmatpush2.bf16.msra.mxu0 0
        %1048 = vmatprep.subr.bf16.mxu0 0
        %1049 = vmatpush2.bf16.msra.mxu0 0
        %1050 = vmatprep.subr.bf16.mxu0 0
        %1051 = vmatpush2.bf16.msra.mxu0 0
        %1052 = vmatprep.subr.bf16.mxu0 0
        %1053 = vmatpush2.bf16.msra.mxu0 0
        %1054 = vmatprep.subr.bf16.mxu0 0
        %1055 = vmatpush2.bf16.msra.mxu0 0
        %1056 = vmatprep.subr.bf16.mxu0 0
        %1057 = vmatpush2.bf16.msra.mxu0 0
        %1058 = vmatprep.mubr.bf16.mxu0 0
        %1059 = vmatmul.mubr.bf16.gmra.mxu0 %v1024
        %v1060 = vpop.f32.mrf.mxu0
        %v1061 = vadd.f32 0.0, %v1060
        %v1062 = vpop.f32.mrf.mxu0
        %v1063 = vpop.f32.mrf.mxu0
        %v1064 = vpop.f32.mrf.mxu0
        %1065 = vdwg.mxu0
        %v1066 = vadd.f32 %v772, %v1061
        %v1067 = vxor.u32 %v1066, 2147483648
        %v1068 = vmul.f32 %v1067, 1.442695
        %v1069 = vpow.pop %v1068
        %v1070 = vadd.f32 %v1069, 1.0
        %v1071 = vrcp.pop %v1070
        %v1072 = vmul.f32 1.0, %v1071
        %v1073 = vtanh.pop %v1066
        %v1075 = vrot.slane %v921, 4
        %v1077 = vmul.f32 %v1072, %v1075
        %1079 = vrot.lane.b32.xlu0 %v1073, 80
        %v1080 = vpop.permute.xlu0 %1079
        %v1082 = vmul.f32 %v1072, %v1080
        %1084 = vrot.lane.b32.xlu0 %v1082, 16
        %v1085 = vpop.permute.xlu0 %1084
        %v1087 = vadd.f32 %v1077, %v1085
        %v1088 = vtanh.pop %v1087
        %1090 = vrot.lane.b32.xlu0 %v1088, 16
        %v1091 = vpop.permute.xlu0 %1090
        %v1093 = vmul.f32 %v1072, %v1091
        %1095 = vrot.lane.b32.xlu0 %v1017, 96
        %v1096 = vpop.permute.xlu0 %1095
        %vm1098 = vcmask 130052
        %1099 = vst.msk [vmem:[#allocation2] sm:$0xf0] %vm1098, %v1096
        %1101 = vrot.lane.b32.xlu0 %v1093, 112
        %v1102 = vpop.permute.xlu0 %1101
        %vm1104 = vcmask 257152
        %1105 = vst.msk [vmem:[#allocation2 + $0x18] sm:$0xf] %vm1104, %v1102
        %v1106 = vpack.c.bf16 %v1017, %v1017
        %v1108 = vrot.slane %v1106, 2
        %1109 = vrot.lane.b32.xlu0 %v1108, 96
        %v1110 = vpop.permute.xlu0 %1109
        %v1112 = vsel %vm653, %v1110, 0
        %1114 = vmatprep.subr.bf16.mxu0 0
        %1115 = vmatpush1.bf16.msra.mxu0 0
        %1116 = vmatprep.subr.bf16.mxu0 0
        %1117 = vmatpush1.bf16.msra.mxu0 0
        %1118 = vmatprep.subr.bf16.mxu0 0
        %1119 = vmatpush1.bf16.msra.mxu0 0
        %1120 = vmatprep.subr.bf16.mxu0 0
        %1121 = vmatpush1.bf16.msra.mxu0 0
        %1122 = vmatprep.subr.bf16.mxu0 0
        %1123 = vmatpush1.bf16.msra.mxu0 0
        %1124 = vmatprep.subr.bf16.mxu0 0
        %1125 = vmatpush1.bf16.msra.mxu0 0
        %1126 = vmatprep.subr.bf16.mxu0 0
        %1127 = vmatpush1.bf16.msra.mxu0 0
        %1128 = vmatprep.subr.bf16.mxu0 0
        %1129 = vmatpush1.bf16.msra.mxu0 %v784
        %1130 = vmatprep.subr.bf16.mxu0 0
        %1131 = vmatpush2.bf16.msra.mxu0 0
        %1132 = vmatprep.subr.bf16.mxu0 0
        %1133 = vmatpush2.bf16.msra.mxu0 0
        %1134 = vmatprep.subr.bf16.mxu0 0
        %1135 = vmatpush2.bf16.msra.mxu0 0
        %1136 = vmatprep.subr.bf16.mxu0 0
        %1137 = vmatpush2.bf16.msra.mxu0 0
        %1138 = vmatprep.subr.bf16.mxu0 0
        %1139 = vmatpush2.bf16.msra.mxu0 0
        %1140 = vmatprep.subr.bf16.mxu0 0
        %1141 = vmatpush2.bf16.msra.mxu0 0
        %1142 = vmatprep.subr.bf16.mxu0 0
        %1143 = vmatpush2.bf16.msra.mxu0 0
        %1144 = vmatprep.subr.bf16.mxu0 0
        %1145 = vmatpush2.bf16.msra.mxu0 0
        %1146 = vmatprep.mubr.bf16.mxu0 0
        %1147 = vmatmul.mubr.bf16.gmra.mxu0 %v1112
        %v1148 = vpop.f32.mrf.mxu0
        %v1149 = vadd.f32 0.0, %v1148
        %v1150 = vpop.f32.mrf.mxu0
        %v1151 = vpop.f32.mrf.mxu0
        %v1152 = vpop.f32.mrf.mxu0
        %1153 = vdwg.mxu0
        %v1154 = vadd.f32 %v698, %v1149
        %v1155 = vxor.u32 %v1154, 2147483648
        %v1156 = vmul.f32 %v1155, 1.442695
        %v1157 = vpow.pop %v1156
        %v1158 = vadd.f32 %v1157, 1.0
        %v1159 = vrcp.pop %v1158
        %v1160 = vmul.f32 1.0, %v1159
        %v1161 = vtanh.pop %v1154
        %v1163 = vrot.slane %v1011, 4
        %v1165 = vmul.f32 %v1160, %v1163
        %1167 = vrot.lane.b32.xlu0 %v1161, 80
        %v1168 = vpop.permute.xlu0 %1167
        %v1170 = vmul.f32 %v1160, %v1168
        %1172 = vrot.lane.b32.xlu0 %v1170, 16
        %v1173 = vpop.permute.xlu0 %1172
        %v1175 = vadd.f32 %v1165, %v1173
        %v1176 = vtanh.pop %v1175
        %1178 = vrot.lane.b32.xlu0 %v1176, 16
        %v1179 = vpop.permute.xlu0 %1178
        %v1181 = vmul.f32 %v1160, %v1179
        %v1182 = vpack.c.bf16 %v1093, %v1093
        %1184 = vrot.lane.b32.xlu0 %v1182, 96
        %v1185 = vpop.permute.xlu0 %1184
        %v1187 = vsel %vm653, %v1185, 0
        %1189 = vmatprep.subr.bf16.mxu0 0
        %1190 = vmatpush1.bf16.msra.mxu0 0
        %1191 = vmatprep.subr.bf16.mxu0 0
        %1192 = vmatpush1.bf16.msra.mxu0 0
        %1193 = vmatprep.subr.bf16.mxu0 0
        %1194 = vmatpush1.bf16.msra.mxu0 0
        %1195 = vmatprep.subr.bf16.mxu0 0
        %1196 = vmatpush1.bf16.msra.mxu0 0
        %1197 = vmatprep.subr.bf16.mxu0 0
        %1198 = vmatpush1.bf16.msra.mxu0 0
        %1199 = vmatprep.subr.bf16.mxu0 0
        %1200 = vmatpush1.bf16.msra.mxu0 0
        %1201 = vmatprep.subr.bf16.mxu0 0
        %1202 = vmatpush1.bf16.msra.mxu0 0
        %1203 = vmatprep.subr.bf16.mxu0 0
        %1204 = vmatpush1.bf16.msra.mxu0 %v858
        %1205 = vmatprep.subr.bf16.mxu0 0
        %1206 = vmatpush2.bf16.msra.mxu0 0
        %1207 = vmatprep.subr.bf16.mxu0 0
        %1208 = vmatpush2.bf16.msra.mxu0 0
        %1209 = vmatprep.subr.bf16.mxu0 0
        %1210 = vmatpush2.bf16.msra.mxu0 0
        %1211 = vmatprep.subr.bf16.mxu0 0
        %1212 = vmatpush2.bf16.msra.mxu0 0
        %1213 = vmatprep.subr.bf16.mxu0 0
        %1214 = vmatpush2.bf16.msra.mxu0 0
        %1215 = vmatprep.subr.bf16.mxu0 0
        %1216 = vmatpush2.bf16.msra.mxu0 0
        %1217 = vmatprep.subr.bf16.mxu0 0
        %1218 = vmatpush2.bf16.msra.mxu0 0
        %1219 = vmatprep.subr.bf16.mxu0 0
        %1220 = vmatpush2.bf16.msra.mxu0 0
        %1221 = vmatprep.mubr.bf16.mxu0 0
        %1222 = vmatmul.mubr.bf16.gmra.mxu0 %v1187
        %v1223 = vpop.f32.mrf.mxu0
        %v1224 = vadd.f32 0.0, %v1223
        %v1225 = vpop.f32.mrf.mxu0
        %v1226 = vpop.f32.mrf.mxu0
        %v1227 = vpop.f32.mrf.mxu0
        %1228 = vdwg.mxu0
        %v1230 = vrot.slane %v1224, 4
        %v1232 = vadd.f32 %v769, %v1230
        %v1233 = vxor.u32 %v1232, 2147483648
        %v1234 = vmul.f32 %v1233, 1.442695
        %v1235 = vpow.pop %v1234
        %v1236 = vadd.f32 %v1235, 1.0
        %v1237 = vrcp.pop %v1236
        %v1238 = vmul.f32 1.0, %v1237
        %v1239 = vtanh.pop %v1232
        %v1241 = vrot.slane %v1087, 4
        %v1243 = vmul.f32 %v1238, %v1241
        %1245 = vrot.lane.b32.xlu0 %v1239, 80
        %v1246 = vpop.permute.xlu0 %1245
        %v1248 = vmul.f32 %v1238, %v1246
        %1250 = vrot.lane.b32.xlu0 %v1248, 16
        %v1251 = vpop.permute.xlu0 %1250
        %v1253 = vadd.f32 %v1243, %v1251
        %v1254 = vtanh.pop %v1253
        %1256 = vrot.lane.b32.xlu0 %v1254, 16
        %v1257 = vpop.permute.xlu0 %1256
        %v1259 = vmul.f32 %v1238, %v1257
        %1261 = vrot.lane.b32.xlu0 %v1181, 96
        %v1262 = vpop.permute.xlu0 %1261
        %1264 = vst.msk [vmem:[#allocation2 + $0x8] sm:$0xf] %vm932, %v1262
        %1266 = vrot.lane.b32.xlu0 %v1259, 112
        %v1267 = vpop.permute.xlu0 %1266
        %1269 = vst.msk [vmem:[#allocation2 + $0x10] sm:$0xf0] %vm938, %v1267
        %v1270 = vpack.c.bf16 %v1181, %v1181
        %1272 = vrot.lane.b32.xlu0 %v1270, 96
        %v1273 = vpop.permute.xlu0 %1272
        %v1275 = vsel %vm653, %v1273, 0
        %1277 = vmatprep.subr.bf16.mxu0 0
        %1278 = vmatpush1.bf16.msra.mxu0 0
        %1279 = vmatprep.subr.bf16.mxu0 0
        %1280 = vmatpush1.bf16.msra.mxu0 0
        %1281 = vmatprep.subr.bf16.mxu0 0
        %1282 = vmatpush1.bf16.msra.mxu0 0
        %1283 = vmatprep.subr.bf16.mxu0 0
        %1284 = vmatpush1.bf16.msra.mxu0 0
        %1285 = vmatprep.subr.bf16.mxu0 0
        %1286 = vmatpush1.bf16.msra.mxu0 0
        %1287 = vmatprep.subr.bf16.mxu0 0
        %1288 = vmatpush1.bf16.msra.mxu0 0
        %1289 = vmatprep.subr.bf16.mxu0 0
        %1290 = vmatpush1.bf16.msra.mxu0 0
        %1291 = vmatprep.subr.bf16.mxu0 0
        %1292 = vmatpush1.bf16.msra.mxu0 %v784
        %1293 = vmatprep.subr.bf16.mxu0 0
        %1294 = vmatpush2.bf16.msra.mxu0 0
        %1295 = vmatprep.subr.bf16.mxu0 0
        %1296 = vmatpush2.bf16.msra.mxu0 0
        %1297 = vmatprep.subr.bf16.mxu0 0
        %1298 = vmatpush2.bf16.msra.mxu0 0
        %1299 = vmatprep.subr.bf16.mxu0 0
        %1300 = vmatpush2.bf16.msra.mxu0 0
        %1301 = vmatprep.subr.bf16.mxu0 0
        %1302 = vmatpush2.bf16.msra.mxu0 0
        %1303 = vmatprep.subr.bf16.mxu0 0
        %1304 = vmatpush2.bf16.msra.mxu0 0
        %1305 = vmatprep.subr.bf16.mxu0 0
        %1306 = vmatpush2.bf16.msra.mxu0 0
        %1307 = vmatprep.subr.bf16.mxu0 0
        %1308 = vmatpush2.bf16.msra.mxu0 0
        %1309 = vmatprep.mubr.bf16.mxu0 0
        %1310 = vmatmul.mubr.bf16.gmra.mxu0 %v1275
        %v1311 = vpop.f32.mrf.mxu0
        %v1312 = vadd.f32 0.0, %v1311
        %v1313 = vpop.f32.mrf.mxu0
        %v1314 = vpop.f32.mrf.mxu0
        %v1315 = vpop.f32.mrf.mxu0
        %1316 = vdwg.mxu0
        %v1318 = vrot.slane %v1312, 4
        %v1320 = vadd.f32 %v698, %v1318
        %v1321 = vxor.u32 %v1320, 2147483648
        %v1322 = vmul.f32 %v1321, 1.442695
        %v1323 = vpow.pop %v1322
        %v1324 = vadd.f32 %v1323, 1.0
        %v1325 = vrcp.pop %v1324
        %v1326 = vmul.f32 1.0, %v1325
        %v1327 = vtanh.pop %v1320
        %v1329 = vrot.slane %v1175, 4
        %v1331 = vmul.f32 %v1326, %v1329
        %1333 = vrot.lane.b32.xlu0 %v1327, 80
        %v1334 = vpop.permute.xlu0 %1333
        %v1336 = vmul.f32 %v1326, %v1334
        %1338 = vrot.lane.b32.xlu0 %v1336, 16
        %v1339 = vpop.permute.xlu0 %1338
        %v1341 = vadd.f32 %v1331, %v1339
        %v1342 = vtanh.pop %v1341
        %1344 = vrot.lane.b32.xlu0 %v1342, 16
        %v1345 = vpop.permute.xlu0 %1344
        %v1347 = vmul.f32 %v1326, %v1345
        %v1348 = vpack.c.bf16 %v1259, %v1259
        %v1350 = vrot.slane %v1348, 2
        %1351 = vrot.lane.b32.xlu0 %v1350, 96
        %v1352 = vpop.permute.xlu0 %1351
        %v1354 = vsel %vm653, %v1352, 0
        %1356 = vmatprep.subr.bf16.mxu0 0
        %1357 = vmatpush1.bf16.msra.mxu0 0
        %1358 = vmatprep.subr.bf16.mxu0 0
        %1359 = vmatpush1.bf16.msra.mxu0 0
        %1360 = vmatprep.subr.bf16.mxu0 0
        %1361 = vmatpush1.bf16.msra.mxu0 0
        %1362 = vmatprep.subr.bf16.mxu0 0
        %1363 = vmatpush1.bf16.msra.mxu0 0
        %1364 = vmatprep.subr.bf16.mxu0 0
        %1365 = vmatpush1.bf16.msra.mxu0 0
        %1366 = vmatprep.subr.bf16.mxu0 0
        %1367 = vmatpush1.bf16.msra.mxu0 0
        %1368 = vmatprep.subr.bf16.mxu0 0
        %1369 = vmatpush1.bf16.msra.mxu0 0
        %1370 = vmatprep.subr.bf16.mxu0 0
        %1371 = vmatpush1.bf16.msra.mxu0 %v858
        %1372 = vmatprep.subr.bf16.mxu0 0
        %1373 = vmatpush2.bf16.msra.mxu0 0
        %1374 = vmatprep.subr.bf16.mxu0 0
        %1375 = vmatpush2.bf16.msra.mxu0 0
        %1376 = vmatprep.subr.bf16.mxu0 0
        %1377 = vmatpush2.bf16.msra.mxu0 0
        %1378 = vmatprep.subr.bf16.mxu0 0
        %1379 = vmatpush2.bf16.msra.mxu0 0
        %1380 = vmatprep.subr.bf16.mxu0 0
        %1381 = vmatpush2.bf16.msra.mxu0 0
        %1382 = vmatprep.subr.bf16.mxu0 0
        %1383 = vmatpush2.bf16.msra.mxu0 0
        %1384 = vmatprep.subr.bf16.mxu0 0
        %1385 = vmatpush2.bf16.msra.mxu0 0
        %1386 = vmatprep.subr.bf16.mxu0 0
        %1387 = vmatpush2.bf16.msra.mxu0 0
        %1388 = vmatprep.mubr.bf16.mxu0 0
        %1389 = vmatmul.mubr.bf16.gmra.mxu0 %v1354
        %v1390 = vpop.f32.mrf.mxu0
        %v1391 = vadd.f32 0.0, %v1390
        %v1392 = vpop.f32.mrf.mxu0
        %v1393 = vpop.f32.mrf.mxu0
        %v1394 = vpop.f32.mrf.mxu0
        %1395 = vdwg.mxu0
        %v1396 = vadd.f32 %v769, %v1391
        %v1397 = vxor.u32 %v1396, 2147483648
        %v1398 = vmul.f32 %v1397, 1.442695
        %v1399 = vpow.pop %v1398
        %v1400 = vadd.f32 %v1399, 1.0
        %v1401 = vrcp.pop %v1400
        %v1402 = vmul.f32 1.0, %v1401
        %v1403 = vtanh.pop %v1396
        %v1405 = vrot.slane %v1253, 4
        %v1407 = vmul.f32 %v1402, %v1405
        %1409 = vrot.lane.b32.xlu0 %v1403, 80
        %v1410 = vpop.permute.xlu0 %1409
        %v1412 = vmul.f32 %v1402, %v1410
        %1414 = vrot.lane.b32.xlu0 %v1412, 16
        %v1415 = vpop.permute.xlu0 %1414
        %v1417 = vadd.f32 %v1407, %v1415
        %v1418 = vtanh.pop %v1417
        %1420 = vrot.lane.b32.xlu0 %v1418, 16
        %v1421 = vpop.permute.xlu0 %1420
        %v1423 = vmul.f32 %v1402, %v1421
        %1425 = vrot.lane.b32.xlu0 %v1347, 96
        %v1426 = vpop.permute.xlu0 %1425
        %1428 = vst.msk [vmem:[#allocation2 + $0x8] sm:$0xf0] %vm1098, %v1426
        %1430 = vrot.lane.b32.xlu0 %v1423, 112
        %v1431 = vpop.permute.xlu0 %1430
        %1433 = vst.msk [vmem:[#allocation2 + $0x10] sm:$0xf] %vm1104, %v1431
        %v1434 = vpack.c.bf16 %v1347, %v1347
        %v1436 = vrot.slane %v1434, 2
        %1437 = vrot.lane.b32.xlu0 %v1436, 96
        %v1438 = vpop.permute.xlu0 %1437
        %v1440 = vsel %vm653, %v1438, 0
        %1442 = vmatprep.subr.bf16.mxu0 0
        %1443 = vmatpush1.bf16.msra.mxu0 0
        %1444 = vmatprep.subr.bf16.mxu0 0
        %1445 = vmatpush1.bf16.msra.mxu0 0
        %1446 = vmatprep.subr.bf16.mxu0 0
        %1447 = vmatpush1.bf16.msra.mxu0 0
        %1448 = vmatprep.subr.bf16.mxu0 0
        %1449 = vmatpush1.bf16.msra.mxu0 0
        %1450 = vmatprep.subr.bf16.mxu0 0
        %1451 = vmatpush1.bf16.msra.mxu0 0
        %1452 = vmatprep.subr.bf16.mxu0 0
        %1453 = vmatpush1.bf16.msra.mxu0 0
        %1454 = vmatprep.subr.bf16.mxu0 0
        %1455 = vmatpush1.bf16.msra.mxu0 0
        %1456 = vmatprep.subr.bf16.mxu0 0
        %1457 = vmatpush1.bf16.msra.mxu0 %v784
        %1458 = vmatprep.subr.bf16.mxu0 0
        %1459 = vmatpush2.bf16.msra.mxu0 0
        %1460 = vmatprep.subr.bf16.mxu0 0
        %1461 = vmatpush2.bf16.msra.mxu0 0
        %1462 = vmatprep.subr.bf16.mxu0 0
        %1463 = vmatpush2.bf16.msra.mxu0 0
        %1464 = vmatprep.subr.bf16.mxu0 0
        %1465 = vmatpush2.bf16.msra.mxu0 0
        %1466 = vmatprep.subr.bf16.mxu0 0
        %1467 = vmatpush2.bf16.msra.mxu0 0
        %1468 = vmatprep.subr.bf16.mxu0 0
        %1469 = vmatpush2.bf16.msra.mxu0 0
        %1470 = vmatprep.subr.bf16.mxu0 0
        %1471 = vmatpush2.bf16.msra.mxu0 0
        %1472 = vmatprep.subr.bf16.mxu0 0
        %1473 = vmatpush2.bf16.msra.mxu0 0
        %1474 = vmatprep.mubr.bf16.mxu0 0
        %1475 = vmatmul.mubr.bf16.gmra.mxu0 %v1440
        %v1476 = vpop.f32.mrf.mxu0
        %v1477 = vadd.f32 0.0, %v1476
        %v1478 = vpop.f32.mrf.mxu0
        %v1479 = vpop.f32.mrf.mxu0
        %v1480 = vpop.f32.mrf.mxu0
        %1481 = vdwg.mxu0
        %v1482 = vadd.f32 %v703, %v1477
        %v1483 = vxor.u32 %v1482, 2147483648
        %v1484 = vmul.f32 %v1483, 1.442695
        %v1485 = vpow.pop %v1484
        %v1486 = vadd.f32 %v1485, 1.0
        %v1487 = vrcp.pop %v1486
        %v1488 = vmul.f32 1.0, %v1487
        %v1489 = vtanh.pop %v1482
        %v1491 = vrot.slane %v1341, 4
        %v1493 = vmul.f32 %v1488, %v1491
        %1495 = vrot.lane.b32.xlu0 %v1489, 80
        %v1496 = vpop.permute.xlu0 %1495
        %v1498 = vmul.f32 %v1488, %v1496
        %1500 = vrot.lane.b32.xlu0 %v1498, 16
        %v1501 = vpop.permute.xlu0 %1500
        %v1503 = vadd.f32 %v1493, %v1501
        %v1504 = vtanh.pop %v1503
        %1506 = vrot.lane.b32.xlu0 %v1504, 16
        %v1507 = vpop.permute.xlu0 %1506
        %v1509 = vmul.f32 %v1488, %v1507
        %v1510 = vpack.c.bf16 %v1423, %v1423
        %1512 = vrot.lane.b32.xlu0 %v1510, 96
        %v1513 = vpop.permute.xlu0 %1512
        %v1515 = vsel %vm653, %v1513, 0
        %1517 = vmatprep.subr.bf16.mxu0 0
        %1518 = vmatpush1.bf16.msra.mxu0 0
        %1519 = vmatprep.subr.bf16.mxu0 0
        %1520 = vmatpush1.bf16.msra.mxu0 0
        %1521 = vmatprep.subr.bf16.mxu0 0
        %1522 = vmatpush1.bf16.msra.mxu0 0
        %1523 = vmatprep.subr.bf16.mxu0 0
        %1524 = vmatpush1.bf16.msra.mxu0 0
        %1525 = vmatprep.subr.bf16.mxu0 0
        %1526 = vmatpush1.bf16.msra.mxu0 0
        %1527 = vmatprep.subr.bf16.mxu0 0
        %1528 = vmatpush1.bf16.msra.mxu0 0
        %1529 = vmatprep.subr.bf16.mxu0 0
        %1530 = vmatpush1.bf16.msra.mxu0 0
        %1531 = vmatprep.subr.bf16.mxu0 0
        %1532 = vmatpush1.bf16.msra.mxu0 %v858
        %1533 = vmatprep.subr.bf16.mxu0 0
        %1534 = vmatpush2.bf16.msra.mxu0 0
        %1535 = vmatprep.subr.bf16.mxu0 0
        %1536 = vmatpush2.bf16.msra.mxu0 0
        %1537 = vmatprep.subr.bf16.mxu0 0
        %1538 = vmatpush2.bf16.msra.mxu0 0
        %1539 = vmatprep.subr.bf16.mxu0 0
        %1540 = vmatpush2.bf16.msra.mxu0 0
        %1541 = vmatprep.subr.bf16.mxu0 0
        %1542 = vmatpush2.bf16.msra.mxu0 0
        %1543 = vmatprep.subr.bf16.mxu0 0
        %1544 = vmatpush2.bf16.msra.mxu0 0
        %1545 = vmatprep.subr.bf16.mxu0 0
        %1546 = vmatpush2.bf16.msra.mxu0 0
        %1547 = vmatprep.subr.bf16.mxu0 0
        %1548 = vmatpush2.bf16.msra.mxu0 0
        %1549 = vmatprep.mubr.bf16.mxu0 0
        %1550 = vmatmul.mubr.bf16.gmra.mxu0 %v1515
        %v1551 = vpop.f32.mrf.mxu0
        %v1552 = vadd.f32 0.0, %v1551
        %v1553 = vpop.f32.mrf.mxu0
        %v1554 = vpop.f32.mrf.mxu0
        %v1555 = vpop.f32.mrf.mxu0
        %1556 = vdwg.mxu0
        %v1558 = vrot.slane %v1552, 4
        %v1560 = vadd.f32 %v764, %v1558
        %v1561 = vxor.u32 %v1560, 2147483648
        %v1562 = vmul.f32 %v1561, 1.442695
        %v1563 = vpow.pop %v1562
        %v1564 = vadd.f32 %v1563, 1.0
        %v1565 = vrcp.pop %v1564
        %v1566 = vmul.f32 1.0, %v1565
        %v1567 = vtanh.pop %v1560
        %v1569 = vrot.slane %v1417, 4
        %v1571 = vmul.f32 %v1566, %v1569
        %1573 = vrot.lane.b32.xlu0 %v1567, 80
        %v1574 = vpop.permute.xlu0 %1573
        %v1576 = vmul.f32 %v1566, %v1574
        %1578 = vrot.lane.b32.xlu0 %v1576, 16
        %v1579 = vpop.permute.xlu0 %1578
        %v1581 = vadd.f32 %v1571, %v1579
        %v1582 = vtanh.pop %v1581
        %1584 = vrot.lane.b32.xlu0 %v1582, 16
        %v1585 = vpop.permute.xlu0 %1584
        %v1587 = vmul.f32 %v1566, %v1585
        %1589 = vrot.lane.b32.xlu0 %v1509, 96
        %v1590 = vpop.permute.xlu0 %1589
        %1592 = vst.msk [vmem:[#allocation2 + $0x10] sm:$0xf] %vm932, %v1590
        %1594 = vrot.lane.b32.xlu0 %v1587, 112
        %v1595 = vpop.permute.xlu0 %1594
        %1597 = vst.msk [vmem:[#allocation2 + $0x8] sm:$0xf0] %vm938, %v1595
        %v1598 = vpack.c.bf16 %v1509, %v1509
        %1600 = vrot.lane.b32.xlu0 %v1598, 96
        %v1601 = vpop.permute.xlu0 %1600
        %v1603 = vsel %vm653, %v1601, 0
        %1605 = vmatprep.subr.bf16.mxu0 0
        %1606 = vmatpush1.bf16.msra.mxu0 0
        %1607 = vmatprep.subr.bf16.mxu0 0
        %1608 = vmatpush1.bf16.msra.mxu0 0
        %1609 = vmatprep.subr.bf16.mxu0 0
        %1610 = vmatpush1.bf16.msra.mxu0 0
        %1611 = vmatprep.subr.bf16.mxu0 0
        %1612 = vmatpush1.bf16.msra.mxu0 0
        %1613 = vmatprep.subr.bf16.mxu0 0
        %1614 = vmatpush1.bf16.msra.mxu0 0
        %1615 = vmatprep.subr.bf16.mxu0 0
        %1616 = vmatpush1.bf16.msra.mxu0 0
        %1617 = vmatprep.subr.bf16.mxu0 0
        %1618 = vmatpush1.bf16.msra.mxu0 0
        %1619 = vmatprep.subr.bf16.mxu0 0
        %1620 = vmatpush1.bf16.msra.mxu0 %v784
        %1621 = vmatprep.subr.bf16.mxu0 0
        %1622 = vmatpush2.bf16.msra.mxu0 0
        %1623 = vmatprep.subr.bf16.mxu0 0
        %1624 = vmatpush2.bf16.msra.mxu0 0
        %1625 = vmatprep.subr.bf16.mxu0 0
        %1626 = vmatpush2.bf16.msra.mxu0 0
        %1627 = vmatprep.subr.bf16.mxu0 0
        %1628 = vmatpush2.bf16.msra.mxu0 0
        %1629 = vmatprep.subr.bf16.mxu0 0
        %1630 = vmatpush2.bf16.msra.mxu0 0
        %1631 = vmatprep.subr.bf16.mxu0 0
        %1632 = vmatpush2.bf16.msra.mxu0 0
        %1633 = vmatprep.subr.bf16.mxu0 0
        %1634 = vmatpush2.bf16.msra.mxu0 0
        %1635 = vmatprep.subr.bf16.mxu0 0
        %1636 = vmatpush2.bf16.msra.mxu0 0
        %1637 = vmatprep.mubr.bf16.mxu0 0
        %1638 = vmatmul.mubr.bf16.gmra.mxu0 %v1603
        %v1639 = vpop.f32.mrf.mxu0
        %v1640 = vadd.f32 0.0, %v1639
        %v1641 = vpop.f32.mrf.mxu0
        %v1642 = vpop.f32.mrf.mxu0
        %v1643 = vpop.f32.mrf.mxu0
        %1644 = vdwg.mxu0
        %v1646 = vrot.slane %v1640, 4
        %v1648 = vadd.f32 %v703, %v1646
        %v1649 = vxor.u32 %v1648, 2147483648
        %v1650 = vmul.f32 %v1649, 1.442695
        %v1651 = vpow.pop %v1650
        %v1652 = vadd.f32 %v1651, 1.0
        %v1653 = vrcp.pop %v1652
        %v1654 = vmul.f32 1.0, %v1653
        %v1655 = vtanh.pop %v1648
        %v1657 = vrot.slane %v1503, 4
        %v1659 = vmul.f32 %v1654, %v1657
        %1661 = vrot.lane.b32.xlu0 %v1655, 80
        %v1662 = vpop.permute.xlu0 %1661
        %v1664 = vmul.f32 %v1654, %v1662
        %1666 = vrot.lane.b32.xlu0 %v1664, 16
        %v1667 = vpop.permute.xlu0 %1666
        %v1669 = vadd.f32 %v1659, %v1667
        %v1670 = vtanh.pop %v1669
        %1672 = vrot.lane.b32.xlu0 %v1670, 16
        %v1673 = vpop.permute.xlu0 %1672
        %v1675 = vmul.f32 %v1654, %v1673
        %v1676 = vpack.c.bf16 %v1587, %v1587
        %v1678 = vrot.slane %v1676, 2
        %1679 = vrot.lane.b32.xlu0 %v1678, 96
        %v1680 = vpop.permute.xlu0 %1679
        %v1682 = vsel %vm653, %v1680, 0
        %1684 = vmatprep.subr.bf16.mxu0 0
        %1685 = vmatpush1.bf16.msra.mxu0 0
        %1686 = vmatprep.subr.bf16.mxu0 0
        %1687 = vmatpush1.bf16.msra.mxu0 0
        %1688 = vmatprep.subr.bf16.mxu0 0
        %1689 = vmatpush1.bf16.msra.mxu0 0
        %1690 = vmatprep.subr.bf16.mxu0 0
        %1691 = vmatpush1.bf16.msra.mxu0 0
        %1692 = vmatprep.subr.bf16.mxu0 0
        %1693 = vmatpush1.bf16.msra.mxu0 0
        %1694 = vmatprep.subr.bf16.mxu0 0
        %1695 = vmatpush1.bf16.msra.mxu0 0
        %1696 = vmatprep.subr.bf16.mxu0 0
        %1697 = vmatpush1.bf16.msra.mxu0 0
        %1698 = vmatprep.subr.bf16.mxu0 0
        %1699 = vmatpush1.bf16.msra.mxu0 %v858
        %1700 = vmatprep.subr.bf16.mxu0 0
        %1701 = vmatpush2.bf16.msra.mxu0 0
        %1702 = vmatprep.subr.bf16.mxu0 0
        %1703 = vmatpush2.bf16.msra.mxu0 0
        %1704 = vmatprep.subr.bf16.mxu0 0
        %1705 = vmatpush2.bf16.msra.mxu0 0
        %1706 = vmatprep.subr.bf16.mxu0 0
        %1707 = vmatpush2.bf16.msra.mxu0 0
        %1708 = vmatprep.subr.bf16.mxu0 0
        %1709 = vmatpush2.bf16.msra.mxu0 0
        %1710 = vmatprep.subr.bf16.mxu0 0
        %1711 = vmatpush2.bf16.msra.mxu0 0
        %1712 = vmatprep.subr.bf16.mxu0 0
        %1713 = vmatpush2.bf16.msra.mxu0 0
        %1714 = vmatprep.subr.bf16.mxu0 0
        %1715 = vmatpush2.bf16.msra.mxu0 0
        %1716 = vmatprep.mubr.bf16.mxu0 0
        %1717 = vmatmul.mubr.bf16.gmra.mxu0 %v1682
        %v1718 = vpop.f32.mrf.mxu0
        %v1719 = vadd.f32 0.0, %v1718
        %v1720 = vpop.f32.mrf.mxu0
        %v1721 = vpop.f32.mrf.mxu0
        %v1722 = vpop.f32.mrf.mxu0
        %1723 = vdwg.mxu0
        %v1724 = vadd.f32 %v764, %v1719
        %v1725 = vxor.u32 %v1724, 2147483648
        %v1726 = vmul.f32 %v1725, 1.442695
        %v1727 = vpow.pop %v1726
        %v1728 = vadd.f32 %v1727, 1.0
        %v1729 = vrcp.pop %v1728
        %v1730 = vmul.f32 1.0, %v1729
        %v1731 = vtanh.pop %v1724
        %v1733 = vrot.slane %v1581, 4
        %v1735 = vmul.f32 %v1730, %v1733
        %1737 = vrot.lane.b32.xlu0 %v1731, 80
        %v1738 = vpop.permute.xlu0 %1737
        %v1740 = vmul.f32 %v1730, %v1738
        %1742 = vrot.lane.b32.xlu0 %v1740, 16
        %v1743 = vpop.permute.xlu0 %1742
        %v1745 = vadd.f32 %v1735, %v1743
        %v1746 = vtanh.pop %v1745
        %1748 = vrot.lane.b32.xlu0 %v1746, 16
        %v1749 = vpop.permute.xlu0 %1748
        %v1751 = vmul.f32 %v1730, %v1749
        %1753 = vrot.lane.b32.xlu0 %v1675, 96
        %v1754 = vpop.permute.xlu0 %1753
        %1756 = vst.msk [vmem:[#allocation2 + $0x10] sm:$0xf0] %vm1098, %v1754
        %1758 = vrot.lane.b32.xlu0 %v1751, 112
        %v1759 = vpop.permute.xlu0 %1758
        %1761 = vst.msk [vmem:[#allocation2 + $0x8] sm:$0xf] %vm1104, %v1759
        %v1762 = vpack.c.bf16 %v1675, %v1675
        %v1764 = vrot.slane %v1762, 2
        %1765 = vrot.lane.b32.xlu0 %v1764, 96
        %v1766 = vpop.permute.xlu0 %1765
        %v1768 = vsel %vm653, %v1766, 0
        %1770 = vmatprep.subr.bf16.mxu0 0
        %1771 = vmatpush1.bf16.msra.mxu0 0
        %1772 = vmatprep.subr.bf16.mxu0 0
        %1773 = vmatpush1.bf16.msra.mxu0 0
        %1774 = vmatprep.subr.bf16.mxu0 0
        %1775 = vmatpush1.bf16.msra.mxu0 0
        %1776 = vmatprep.subr.bf16.mxu0 0
        %1777 = vmatpush1.bf16.msra.mxu0 0
        %1778 = vmatprep.subr.bf16.mxu0 0
        %1779 = vmatpush1.bf16.msra.mxu0 0
        %1780 = vmatprep.subr.bf16.mxu0 0
        %1781 = vmatpush1.bf16.msra.mxu0 0
        %1782 = vmatprep.subr.bf16.mxu0 0
        %1783 = vmatpush1.bf16.msra.mxu0 0
        %1784 = vmatprep.subr.bf16.mxu0 0
        %1785 = vmatpush1.bf16.msra.mxu0 %v784
        %1786 = vmatprep.subr.bf16.mxu0 0
        %1787 = vmatpush2.bf16.msra.mxu0 0
        %1788 = vmatprep.subr.bf16.mxu0 0
        %1789 = vmatpush2.bf16.msra.mxu0 0
        %1790 = vmatprep.subr.bf16.mxu0 0
        %1791 = vmatpush2.bf16.msra.mxu0 0
        %1792 = vmatprep.subr.bf16.mxu0 0
        %1793 = vmatpush2.bf16.msra.mxu0 0
        %1794 = vmatprep.subr.bf16.mxu0 0
        %1795 = vmatpush2.bf16.msra.mxu0 0
        %1796 = vmatprep.subr.bf16.mxu0 0
        %1797 = vmatpush2.bf16.msra.mxu0 0
        %1798 = vmatprep.subr.bf16.mxu0 0
        %1799 = vmatpush2.bf16.msra.mxu0 0
        %1800 = vmatprep.subr.bf16.mxu0 0
        %1801 = vmatpush2.bf16.msra.mxu0 0
        %1802 = vmatprep.mubr.bf16.mxu0 0
        %1803 = vmatmul.mubr.bf16.gmra.mxu0 %v1768
        %v1804 = vpop.f32.mrf.mxu0
        %v1805 = vadd.f32 0.0, %v1804
        %v1806 = vpop.f32.mrf.mxu0
        %v1807 = vpop.f32.mrf.mxu0
        %v1808 = vpop.f32.mrf.mxu0
        %1809 = vdwg.mxu0
        %v1810 = vadd.f32 %v706, %v1805
        %v1811 = vxor.u32 %v1810, 2147483648
        %v1812 = vmul.f32 %v1811, 1.442695
        %v1813 = vpow.pop %v1812
        %v1814 = vadd.f32 %v1813, 1.0
        %v1815 = vrcp.pop %v1814
        %v1816 = vmul.f32 1.0, %v1815
        %v1817 = vtanh.pop %v1810
        %v1819 = vrot.slane %v1669, 4
        %v1821 = vmul.f32 %v1816, %v1819
        %1823 = vrot.lane.b32.xlu0 %v1817, 80
        %v1824 = vpop.permute.xlu0 %1823
        %v1826 = vmul.f32 %v1816, %v1824
        %1828 = vrot.lane.b32.xlu0 %v1826, 16
        %v1829 = vpop.permute.xlu0 %1828
        %v1831 = vadd.f32 %v1821, %v1829
        %v1832 = vtanh.pop %v1831
        %1834 = vrot.lane.b32.xlu0 %v1832, 16
        %v1835 = vpop.permute.xlu0 %1834
        %v1837 = vmul.f32 %v1816, %v1835
        %v1838 = vpack.c.bf16 %v1751, %v1751
        %1840 = vrot.lane.b32.xlu0 %v1838, 96
        %v1841 = vpop.permute.xlu0 %1840
        %v1843 = vsel %vm653, %v1841, 0
        %1845 = vmatprep.subr.bf16.mxu0 0
        %1846 = vmatpush1.bf16.msra.mxu0 0
        %1847 = vmatprep.subr.bf16.mxu0 0
        %1848 = vmatpush1.bf16.msra.mxu0 0
        %1849 = vmatprep.subr.bf16.mxu0 0
        %1850 = vmatpush1.bf16.msra.mxu0 0
        %1851 = vmatprep.subr.bf16.mxu0 0
        %1852 = vmatpush1.bf16.msra.mxu0 0
        %1853 = vmatprep.subr.bf16.mxu0 0
        %1854 = vmatpush1.bf16.msra.mxu0 0
        %1855 = vmatprep.subr.bf16.mxu0 0
        %1856 = vmatpush1.bf16.msra.mxu0 0
        %1857 = vmatprep.subr.bf16.mxu0 0
        %1858 = vmatpush1.bf16.msra.mxu0 0
        %1859 = vmatprep.subr.bf16.mxu0 0
        %1860 = vmatpush1.bf16.msra.mxu0 %v858
        %1861 = vmatprep.subr.bf16.mxu0 0
        %1862 = vmatpush2.bf16.msra.mxu0 0
        %1863 = vmatprep.subr.bf16.mxu0 0
        %1864 = vmatpush2.bf16.msra.mxu0 0
        %1865 = vmatprep.subr.bf16.mxu0 0
        %1866 = vmatpush2.bf16.msra.mxu0 0
        %1867 = vmatprep.subr.bf16.mxu0 0
        %1868 = vmatpush2.bf16.msra.mxu0 0
        %1869 = vmatprep.subr.bf16.mxu0 0
        %1870 = vmatpush2.bf16.msra.mxu0 0
        %1871 = vmatprep.subr.bf16.mxu0 0
        %1872 = vmatpush2.bf16.msra.mxu0 0
        %1873 = vmatprep.subr.bf16.mxu0 0
        %1874 = vmatpush2.bf16.msra.mxu0 0
        %1875 = vmatprep.subr.bf16.mxu0 0
        %1876 = vmatpush2.bf16.msra.mxu0 0
        %1877 = vmatprep.mubr.bf16.mxu0 0
        %1878 = vmatmul.mubr.bf16.gmra.mxu0 %v1843
        %v1879 = vpop.f32.mrf.mxu0
        %v1880 = vadd.f32 0.0, %v1879
        %v1881 = vpop.f32.mrf.mxu0
        %v1882 = vpop.f32.mrf.mxu0
        %v1883 = vpop.f32.mrf.mxu0
        %1884 = vdwg.mxu0
        %v1886 = vrot.slane %v1880, 4
        %v1888 = vadd.f32 %v761, %v1886
        %v1889 = vxor.u32 %v1888, 2147483648
        %v1890 = vmul.f32 %v1889, 1.442695
        %v1891 = vpow.pop %v1890
        %v1892 = vadd.f32 %v1891, 1.0
        %v1893 = vrcp.pop %v1892
        %v1894 = vmul.f32 1.0, %v1893
        %v1895 = vtanh.pop %v1888
        %v1897 = vrot.slane %v1745, 4
        %v1899 = vmul.f32 %v1894, %v1897
        %1901 = vrot.lane.b32.xlu0 %v1895, 80
        %v1902 = vpop.permute.xlu0 %1901
        %v1904 = vmul.f32 %v1894, %v1902
        %1906 = vrot.lane.b32.xlu0 %v1904, 16
        %v1907 = vpop.permute.xlu0 %1906
        %v1909 = vadd.f32 %v1899, %v1907
        %v1910 = vtanh.pop %v1909
        %1912 = vrot.lane.b32.xlu0 %v1910, 16
        %v1913 = vpop.permute.xlu0 %1912
        %v1915 = vmul.f32 %v1894, %v1913
        %1917 = vrot.lane.b32.xlu0 %v1837, 96
        %v1918 = vpop.permute.xlu0 %1917
        %1920 = vst.msk [vmem:[#allocation2 + $0x18] sm:$0xf] %vm932, %v1918
        %1922 = vrot.lane.b32.xlu0 %v1915, 112
        %v1923 = vpop.permute.xlu0 %1922
        %1925 = vst.msk [vmem:[#allocation2] sm:$0xf0] %vm938, %v1923
        %v1926 = vpack.c.bf16 %v1837, %v1837
        %1928 = vrot.lane.b32.xlu0 %v1926, 96
        %v1929 = vpop.permute.xlu0 %1928
        %v1931 = vsel %vm653, %v1929, 0
        %1933 = vmatprep.subr.bf16.mxu0 0
        %1934 = vmatpush1.bf16.msra.mxu0 0
        %1935 = vmatprep.subr.bf16.mxu0 0
        %1936 = vmatpush1.bf16.msra.mxu0 0
        %1937 = vmatprep.subr.bf16.mxu0 0
        %1938 = vmatpush1.bf16.msra.mxu0 0
        %1939 = vmatprep.subr.bf16.mxu0 0
        %1940 = vmatpush1.bf16.msra.mxu0 0
        %1941 = vmatprep.subr.bf16.mxu0 0
        %1942 = vmatpush1.bf16.msra.mxu0 0
        %1943 = vmatprep.subr.bf16.mxu0 0
        %1944 = vmatpush1.bf16.msra.mxu0 0
        %1945 = vmatprep.subr.bf16.mxu0 0
        %1946 = vmatpush1.bf16.msra.mxu0 0
        %1947 = vmatprep.subr.bf16.mxu0 0
        %1948 = vmatpush1.bf16.msra.mxu0 %v784
        %1949 = vmatprep.subr.bf16.mxu0 0
        %1950 = vmatpush2.bf16.msra.mxu0 0
        %1951 = vmatprep.subr.bf16.mxu0 0
        %1952 = vmatpush2.bf16.msra.mxu0 0
        %1953 = vmatprep.subr.bf16.mxu0 0
        %1954 = vmatpush2.bf16.msra.mxu0 0
        %1955 = vmatprep.subr.bf16.mxu0 0
        %1956 = vmatpush2.bf16.msra.mxu0 0
        %1957 = vmatprep.subr.bf16.mxu0 0
        %1958 = vmatpush2.bf16.msra.mxu0 0
        %1959 = vmatprep.subr.bf16.mxu0 0
        %1960 = vmatpush2.bf16.msra.mxu0 0
        %1961 = vmatprep.subr.bf16.mxu0 0
        %1962 = vmatpush2.bf16.msra.mxu0 0
        %1963 = vmatprep.subr.bf16.mxu0 0
        %1964 = vmatpush2.bf16.msra.mxu0 0
        %1965 = vmatprep.mubr.bf16.mxu0 0
        %1966 = vmatmul.mubr.bf16.gmra.mxu0 %v1931
        %v1967 = vpop.f32.mrf.mxu0
        %v1968 = vadd.f32 0.0, %v1967
        %v1969 = vpop.f32.mrf.mxu0
        %v1970 = vpop.f32.mrf.mxu0
        %v1971 = vpop.f32.mrf.mxu0
        %1972 = vdwg.mxu0
        %v1974 = vrot.slane %v1968, 4
        %v1976 = vadd.f32 %v706, %v1974
        %v1977 = vxor.u32 %v1976, 2147483648
        %v1978 = vmul.f32 %v1977, 1.442695
        %v1979 = vpow.pop %v1978
        %v1980 = vadd.f32 %v1979, 1.0
        %v1981 = vrcp.pop %v1980
        %v1982 = vmul.f32 1.0, %v1981
        %v1983 = vtanh.pop %v1976
        %v1985 = vrot.slane %v1831, 4
        %v1987 = vmul.f32 %v1982, %v1985
        %1989 = vrot.lane.b32.xlu0 %v1983, 80
        %v1990 = vpop.permute.xlu0 %1989
        %v1992 = vmul.f32 %v1982, %v1990
        %1994 = vrot.lane.b32.xlu0 %v1992, 16
        %v1995 = vpop.permute.xlu0 %1994
        %v1997 = vadd.f32 %v1987, %v1995
        %v1998 = vtanh.pop %v1997
        %2000 = vrot.lane.b32.xlu0 %v1998, 16
        %v2001 = vpop.permute.xlu0 %2000
        %v2003 = vmul.f32 %v1982, %v2001
        %v2004 = vpack.c.bf16 %v1915, %v1915
        %v2006 = vrot.slane %v2004, 2
        %2007 = vrot.lane.b32.xlu0 %v2006, 96
        %v2008 = vpop.permute.xlu0 %2007
        %v2010 = vsel %vm653, %v2008, 0
        %2012 = vmatprep.subr.bf16.mxu0 0
        %2013 = vmatpush1.bf16.msra.mxu0 0
        %2014 = vmatprep.subr.bf16.mxu0 0
        %2015 = vmatpush1.bf16.msra.mxu0 0
        %2016 = vmatprep.subr.bf16.mxu0 0
        %2017 = vmatpush1.bf16.msra.mxu0 0
        %2018 = vmatprep.subr.bf16.mxu0 0
        %2019 = vmatpush1.bf16.msra.mxu0 0
        %2020 = vmatprep.subr.bf16.mxu0 0
        %2021 = vmatpush1.bf16.msra.mxu0 0
        %2022 = vmatprep.subr.bf16.mxu0 0
        %2023 = vmatpush1.bf16.msra.mxu0 0
        %2024 = vmatprep.subr.bf16.mxu0 0
        %2025 = vmatpush1.bf16.msra.mxu0 0
        %2026 = vmatprep.subr.bf16.mxu0 0
        %2027 = vmatpush1.bf16.msra.mxu0 %v858
        %2028 = vmatprep.subr.bf16.mxu0 0
        %2029 = vmatpush2.bf16.msra.mxu0 0
        %2030 = vmatprep.subr.bf16.mxu0 0
        %2031 = vmatpush2.bf16.msra.mxu0 0
        %2032 = vmatprep.subr.bf16.mxu0 0
        %2033 = vmatpush2.bf16.msra.mxu0 0
        %2034 = vmatprep.subr.bf16.mxu0 0
        %2035 = vmatpush2.bf16.msra.mxu0 0
        %2036 = vmatprep.subr.bf16.mxu0 0
        %2037 = vmatpush2.bf16.msra.mxu0 0
        %2038 = vmatprep.subr.bf16.mxu0 0
        %2039 = vmatpush2.bf16.msra.mxu0 0
        %2040 = vmatprep.subr.bf16.mxu0 0
        %2041 = vmatpush2.bf16.msra.mxu0 0
        %2042 = vmatprep.subr.bf16.mxu0 0
        %2043 = vmatpush2.bf16.msra.mxu0 0
        %2044 = vmatprep.mubr.bf16.mxu0 0
        %2045 = vmatmul.mubr.bf16.gmra.mxu0 %v2010
        %v2046 = vpop.f32.mrf.mxu0
        %v2047 = vadd.f32 0.0, %v2046
        %v2048 = vpop.f32.mrf.mxu0
        %v2049 = vpop.f32.mrf.mxu0
        %v2050 = vpop.f32.mrf.mxu0
        %2051 = vdwg.mxu0
        %v2052 = vadd.f32 %v761, %v2047
        %v2053 = vxor.u32 %v2052, 2147483648
        %v2054 = vmul.f32 %v2053, 1.442695
        %v2055 = vpow.pop %v2054
        %v2056 = vadd.f32 %v2055, 1.0
        %v2057 = vrcp.pop %v2056
        %v2058 = vmul.f32 1.0, %v2057
        %v2059 = vtanh.pop %v2052
        %v2061 = vrot.slane %v1909, 4
        %v2063 = vmul.f32 %v2058, %v2061
        %2065 = vrot.lane.b32.xlu0 %v2059, 80
        %v2066 = vpop.permute.xlu0 %2065
        %v2068 = vmul.f32 %v2058, %v2066
        %2070 = vrot.lane.b32.xlu0 %v2068, 16
        %v2071 = vpop.permute.xlu0 %2070
        %v2073 = vadd.f32 %v2063, %v2071
        %v2074 = vtanh.pop %v2073
        %2076 = vrot.lane.b32.xlu0 %v2074, 16
        %v2077 = vpop.permute.xlu0 %2076
        %v2079 = vmul.f32 %v2058, %v2077
        %2081 = vrot.lane.b32.xlu0 %v2003, 96
        %v2082 = vpop.permute.xlu0 %2081
        %2084 = vst.msk [vmem:[#allocation2 + $0x18] sm:$0xf0] %vm1098, %v2082
        %2086 = vrot.lane.b32.xlu0 %v2079, 112
        %v2087 = vpop.permute.xlu0 %2086
        %2089 = vst.msk [vmem:[#allocation2] sm:$0xf] %vm1104, %v2087
        %v2090 = vld [vmem:[#allocation2] sm:$0xff]
        %v2091 = vld [vmem:[#allocation2 + $0x8] sm:$0xff]
        %v2092 = vld [vmem:[#allocation2 + $0x10] sm:$0xff]
        %v2093 = vld [vmem:[#allocation2 + $0x18] sm:$0xff]
        %v2094 = vpack.c.bf16 %v2091, %v2090
        %v2095 = vpack.c.bf16 %v2093, %v2092
        %v2096 = vld [vmem:[%s6] sm:$0xf]
        %v2097 = vld [vmem:[%s6 + $0x4] sm:$0xf]
        %v2098 = vld [vmem:[%s6 + $0x8] sm:$0xf]
        %v2099 = vld [vmem:[%s6 + $0xc] sm:$0xf]
        %v2100 = vld [vmem:[%s8] sm:$0x1]
        %v2102 = vlaneseq
        %v2103 = vshrl.u32 %v2102, 7
        %v2104 = vsub.s32 0, %v2103
        %v2105 = vrot.slane %v2100, %v2104
        %v2111 = vunpack.c.l.b16 %v2096
        %v2112 = vunpack.c.l.b16 %v2097
        %v2113 = vunpack.c.l.b16 %v2098
        %v2114 = vunpack.c.l.b16 %v2099
        %v2115 = vpack.c.b16 %v2112, %v2111
        %v2116 = vpack.c.b16 %v2114, %v2113
        %vm2119 = vcmask 261120
        %v2121 = vsel %vm2119, %v2094, 0
        %v2124 = vsel %vm2119, %v2095, 0
        %2126 = vmatprep.subr.bf16.mxu0 0
        %2127 = vmatpush1.bf16.msra.mxu0 0
        %2128 = vmatprep.subr.bf16.mxu0 0
        %2129 = vmatpush1.bf16.msra.mxu0 0
        %2130 = vmatprep.subr.bf16.mxu0 0
        %2131 = vmatpush1.bf16.msra.mxu0 0
        %2132 = vmatprep.subr.bf16.mxu0 0
        %2133 = vmatpush1.bf16.msra.mxu0 0
        %2134 = vmatprep.subr.bf16.mxu0 0
        %2135 = vmatpush1.bf16.msra.mxu0 0
        %2136 = vmatprep.subr.bf16.mxu0 0
        %2137 = vmatpush1.bf16.msra.mxu0 0
        %2138 = vmatprep.subr.bf16.mxu0 0
        %2139 = vmatpush1.bf16.msra.mxu0 %v2116
        %2140 = vmatprep.subr.bf16.mxu0 0
        %2141 = vmatpush1.bf16.msra.mxu0 %v2115
        %2142 = vmatprep.subr.bf16.mxu0 0
        %2143 = vmatpush2.bf16.msra.mxu0 0
        %2144 = vmatprep.subr.bf16.mxu0 0
        %2145 = vmatpush2.bf16.msra.mxu0 0
        %2146 = vmatprep.subr.bf16.mxu0 0
        %2147 = vmatpush2.bf16.msra.mxu0 0
        %2148 = vmatprep.subr.bf16.mxu0 0
        %2149 = vmatpush2.bf16.msra.mxu0 0
        %2150 = vmatprep.subr.bf16.mxu0 0
        %2151 = vmatpush2.bf16.msra.mxu0 0
        %2152 = vmatprep.subr.bf16.mxu0 0
        %2153 = vmatpush2.bf16.msra.mxu0 0
        %2154 = vmatprep.subr.bf16.mxu0 0
        %2155 = vmatpush2.bf16.msra.mxu0 0
        %2156 = vmatprep.subr.bf16.mxu0 0
        %2157 = vmatpush2.bf16.msra.mxu0 0
        %2158 = vmatprep.mubr.bf16.mxu0 0
        %2159 = vmatmul.mubr.bf16.gmra.mxu0 %v2121
        %v2160 = vpop.f32.mrf.mxu0
        %v2161 = vadd.f32 %v2105, %v2160
        %v2162 = vpop.f32.mrf.mxu0
        %v2163 = vpop.f32.mrf.mxu0
        %v2164 = vadd.f32 %v2105, %v2163
        %v2165 = vpop.f32.mrf.mxu0
        %2166 = vmatprep.mubr.bf16.mxu0 0
        %2167 = vmatmul.mubr.bf16.gmra.mxu0 %v2124
        %v2168 = vpop.f32.mrf.mxu0
        %v2169 = vadd.f32 %v2105, %v2168
        %v2170 = vpop.f32.mrf.mxu0
        %v2171 = vpop.f32.mrf.mxu0
        %v2172 = vadd.f32 %v2105, %v2171
        %v2173 = vpop.f32.mrf.mxu0
        %2174 = vdwg.mxu0
        %s2175 = scalar_lea.vmem %s6, 16
        %v2176 = vld [vmem:[%s2175] sm:$0xf]
        %v2177 = vld [vmem:[%s2175 + $0x4] sm:$0xf]
        %v2178 = vld [vmem:[%s2175 + $0x8] sm:$0xf]
        %v2179 = vld [vmem:[%s2175 + $0xc] sm:$0xf]
        %s2180 = scalar_lea.vmem %s8, 1
        %v2181 = vld [vmem:[%s2180] sm:$0x1]
        %v2183 = vlaneseq
        %v2184 = vshrl.u32 %v2183, 7
        %v2185 = vsub.s32 0, %v2184
        %v2186 = vrot.slane %v2181, %v2185
        %v2192 = vunpack.c.l.b16 %v2176
        %v2193 = vunpack.c.l.b16 %v2177
        %v2194 = vunpack.c.l.b16 %v2178
        %v2195 = vunpack.c.l.b16 %v2179
        %v2196 = vpack.c.b16 %v2193, %v2192
        %v2197 = vpack.c.b16 %v2195, %v2194
        %2200 = vmatprep.subr.bf16.mxu0 0
        %2201 = vmatpush1.bf16.msra.mxu0 0
        %2202 = vmatprep.subr.bf16.mxu0 0
        %2203 = vmatpush1.bf16.msra.mxu0 0
        %2204 = vmatprep.subr.bf16.mxu0 0
        %2205 = vmatpush1.bf16.msra.mxu0 0
        %2206 = vmatprep.subr.bf16.mxu0 0
        %2207 = vmatpush1.bf16.msra.mxu0 0
        %2208 = vmatprep.subr.bf16.mxu0 0
        %2209 = vmatpush1.bf16.msra.mxu0 0
        %2210 = vmatprep.subr.bf16.mxu0 0
        %2211 = vmatpush1.bf16.msra.mxu0 0
        %2212 = vmatprep.subr.bf16.mxu0 0
        %2213 = vmatpush1.bf16.msra.mxu0 %v2197
        %2214 = vmatprep.subr.bf16.mxu0 0
        %2215 = vmatpush1.bf16.msra.mxu0 %v2196
        %2216 = vmatprep.subr.bf16.mxu0 0
        %2217 = vmatpush2.bf16.msra.mxu0 0
        %2218 = vmatprep.subr.bf16.mxu0 0
        %2219 = vmatpush2.bf16.msra.mxu0 0
        %2220 = vmatprep.subr.bf16.mxu0 0
        %2221 = vmatpush2.bf16.msra.mxu0 0
        %2222 = vmatprep.subr.bf16.mxu0 0
        %2223 = vmatpush2.bf16.msra.mxu0 0
        %2224 = vmatprep.subr.bf16.mxu0 0
        %2225 = vmatpush2.bf16.msra.mxu0 0
        %2226 = vmatprep.subr.bf16.mxu0 0
        %2227 = vmatpush2.bf16.msra.mxu0 0
        %2228 = vmatprep.subr.bf16.mxu0 0
        %2229 = vmatpush2.bf16.msra.mxu0 0
        %2230 = vmatprep.subr.bf16.mxu0 0
        %2231 = vmatpush2.bf16.msra.mxu0 0
        %2232 = vmatprep.mubr.bf16.mxu0 0
        %2233 = vmatmul.mubr.bf16.gmra.mxu0 %v2121
        %v2234 = vpop.f32.mrf.mxu0
        %v2235 = vadd.f32 %v2186, %v2234
        %v2236 = vpop.f32.mrf.mxu0
        %v2237 = vpop.f32.mrf.mxu0
        %v2238 = vadd.f32 %v2186, %v2237
        %v2239 = vpop.f32.mrf.mxu0
        %2240 = vmatprep.mubr.bf16.mxu0 0
        %2241 = vmatmul.mubr.bf16.gmra.mxu0 %v2124
        %v2242 = vpop.f32.mrf.mxu0
        %v2243 = vadd.f32 %v2186, %v2242
        %v2244 = vpop.f32.mrf.mxu0
        %v2245 = vpop.f32.mrf.mxu0
        %v2246 = vadd.f32 %v2186, %v2245
        %v2247 = vpop.f32.mrf.mxu0
        %2248 = vdwg.mxu0
        %v2249 = vld [vmem:[#allocation9] sm:$0xf]
        %v2250 = vld [vmem:[#allocation9 + $0x4] sm:$0xf]
        %s2251 = scalar_lea.vmem [#allocation9], 8
        %v2252 = vld [vmem:[%s2251] sm:$0xf]
        %v2253 = vld [vmem:[%s2251 + $0x4] sm:$0xf]
        %v2256 = vunpack.c.l.b16 %v2249
        %v2257 = vunpack.c.l.b16 %v2250
        %v2258 = vpack.c.b16 %v2257, %v2256
        %2260 = vmatprep.subr.bf16.mxu0 0
        %2261 = vmatpush1.bf16.msra.mxu0 0
        %2262 = vmatprep.subr.bf16.mxu0 0
        %2263 = vmatpush1.bf16.msra.mxu0 0
        %2264 = vmatprep.subr.bf16.mxu0 0
        %2265 = vmatpush1.bf16.msra.mxu0 0
        %2266 = vmatprep.subr.bf16.mxu0 0
        %2267 = vmatpush1.bf16.msra.mxu0 0
        %2268 = vmatprep.subr.bf16.mxu0 0
        %2269 = vmatpush1.bf16.msra.mxu0 0
        %2270 = vmatprep.subr.bf16.mxu0 0
        %2271 = vmatpush1.bf16.msra.mxu0 0
        %2272 = vmatprep.subr.bf16.mxu0 0
        %2273 = vmatpush1.bf16.msra.mxu0 0
        %2274 = vmatprep.subr.bf16.mxu0 0
        %2275 = vmatpush1.bf16.msra.mxu0 %v2258
        %2276 = vmatprep.subr.bf16.mxu0 0
        %2277 = vmatpush2.bf16.msra.mxu0 0
        %2278 = vmatprep.subr.bf16.mxu0 0
        %2279 = vmatpush2.bf16.msra.mxu0 0
        %2280 = vmatprep.subr.bf16.mxu0 0
        %2281 = vmatpush2.bf16.msra.mxu0 0
        %2282 = vmatprep.subr.bf16.mxu0 0
        %2283 = vmatpush2.bf16.msra.mxu0 0
        %2284 = vmatprep.subr.bf16.mxu0 0
        %2285 = vmatpush2.bf16.msra.mxu0 0
        %2286 = vmatprep.subr.bf16.mxu0 0
        %2287 = vmatpush2.bf16.msra.mxu0 0
        %2288 = vmatprep.subr.bf16.mxu0 0
        %2289 = vmatpush2.bf16.msra.mxu0 0
        %2290 = vmatprep.subr.bf16.mxu0 0
        %2291 = vmatpush2.bf16.msra.mxu0 0
        %2292 = vmatprep.mubr.bf16.mxu0 0
        %2293 = vmatmul.mubr.bf16.gmra.mxu0 %v787
        %v2294 = vpop.f32.mrf.mxu0
        %v2295 = vadd.f32 0.0, %v2294
        %v2296 = vpop.f32.mrf.mxu0
        %v2297 = vpop.f32.mrf.mxu0
        %v2298 = vpop.f32.mrf.mxu0
        %2299 = vdwg.mxu0
        %v2300 = vadd.f32 %v2161, %v2295
        %v2301 = vxor.u32 %v2300, 2147483648
        %v2302 = vmul.f32 %v2301, 1.442695
        %v2303 = vpow.pop %v2302
        %v2304 = vadd.f32 %v2303, 1.0
        %v2305 = vrcp.pop %v2304
        %v2306 = vmul.f32 1.0, %v2305
        %v2307 = vtanh.pop %v2300
        %v2308 = vmul.f32 %v2306, 0.0
        %2310 = vrot.lane.b32.xlu0 %v2307, 80
        %v2311 = vpop.permute.xlu0 %2310
        %v2313 = vmul.f32 %v2306, %v2311
        %2315 = vrot.lane.b32.xlu0 %v2313, 16
        %v2316 = vpop.permute.xlu0 %2315
        %v2318 = vadd.f32 %v2308, %v2316
        %v2319 = vtanh.pop %v2318
        %2321 = vrot.lane.b32.xlu0 %v2319, 16
        %v2322 = vpop.permute.xlu0 %2321
        %v2324 = vmul.f32 %v2306, %v2322
        %v2327 = vunpack.c.l.b16 %v2252
        %v2328 = vunpack.c.l.b16 %v2253
        %v2329 = vpack.c.b16 %v2328, %v2327
        %2331 = vmatprep.subr.bf16.mxu0 0
        %2332 = vmatpush1.bf16.msra.mxu0 0
        %2333 = vmatprep.subr.bf16.mxu0 0
        %2334 = vmatpush1.bf16.msra.mxu0 0
        %2335 = vmatprep.subr.bf16.mxu0 0
        %2336 = vmatpush1.bf16.msra.mxu0 0
        %2337 = vmatprep.subr.bf16.mxu0 0
        %2338 = vmatpush1.bf16.msra.mxu0 0
        %2339 = vmatprep.subr.bf16.mxu0 0
        %2340 = vmatpush1.bf16.msra.mxu0 0
        %2341 = vmatprep.subr.bf16.mxu0 0
        %2342 = vmatpush1.bf16.msra.mxu0 0
        %2343 = vmatprep.subr.bf16.mxu0 0
        %2344 = vmatpush1.bf16.msra.mxu0 0
        %2345 = vmatprep.subr.bf16.mxu0 0
        %2346 = vmatpush1.bf16.msra.mxu0 %v2329
        %2347 = vmatprep.subr.bf16.mxu0 0
        %2348 = vmatpush2.bf16.msra.mxu0 0
        %2349 = vmatprep.subr.bf16.mxu0 0
        %2350 = vmatpush2.bf16.msra.mxu0 0
        %2351 = vmatprep.subr.bf16.mxu0 0
        %2352 = vmatpush2.bf16.msra.mxu0 0
        %2353 = vmatprep.subr.bf16.mxu0 0
        %2354 = vmatpush2.bf16.msra.mxu0 0
        %2355 = vmatprep.subr.bf16.mxu0 0
        %2356 = vmatpush2.bf16.msra.mxu0 0
        %2357 = vmatprep.subr.bf16.mxu0 0
        %2358 = vmatpush2.bf16.msra.mxu0 0
        %2359 = vmatprep.subr.bf16.mxu0 0
        %2360 = vmatpush2.bf16.msra.mxu0 0
        %2361 = vmatprep.subr.bf16.mxu0 0
        %2362 = vmatpush2.bf16.msra.mxu0 0
        %2363 = vmatprep.mubr.bf16.mxu0 0
        %2364 = vmatmul.mubr.bf16.gmra.mxu0 %v787
        %v2365 = vpop.f32.mrf.mxu0
        %v2366 = vadd.f32 0.0, %v2365
        %v2367 = vpop.f32.mrf.mxu0
        %v2368 = vpop.f32.mrf.mxu0
        %v2369 = vpop.f32.mrf.mxu0
        %2370 = vdwg.mxu0
        %v2372 = vrot.slane %v2366, 4
        %v2374 = vadd.f32 %v2246, %v2372
        %v2375 = vxor.u32 %v2374, 2147483648
        %v2376 = vmul.f32 %v2375, 1.442695
        %v2377 = vpow.pop %v2376
        %v2378 = vadd.f32 %v2377, 1.0
        %v2379 = vrcp.pop %v2378
        %v2380 = vmul.f32 1.0, %v2379
        %v2381 = vtanh.pop %v2374
        %v2382 = vmul.f32 %v2380, 0.0
        %2384 = vrot.lane.b32.xlu0 %v2381, 80
        %v2385 = vpop.permute.xlu0 %2384
        %v2387 = vmul.f32 %v2380, %v2385
        %2389 = vrot.lane.b32.xlu0 %v2387, 16
        %v2390 = vpop.permute.xlu0 %2389
        %v2392 = vadd.f32 %v2382, %v2390
        %v2393 = vtanh.pop %v2392
        %2395 = vrot.lane.b32.xlu0 %v2393, 16
        %v2396 = vpop.permute.xlu0 %2395
        %v2398 = vmul.f32 %v2380, %v2396
        %2400 = vrot.lane.b32.xlu0 %v2324, 96
        %v2401 = vpop.permute.xlu0 %2400
        %2403 = vst.msk [vmem:[#allocation3] sm:$0xf] %vm932, %v2401
        %2405 = vrot.lane.b32.xlu0 %v2398, 112
        %v2406 = vpop.permute.xlu0 %2405
        %s2408 = scalar_lea.vmem [#allocation3], 28
        %2409 = vst.msk [vmem:[%s2408 - $0x4] sm:$0xf0] %vm938, %v2406
        %v2410 = vpack.c.bf16 %v2324, %v2324
        %2412 = vrot.lane.b32.xlu0 %v2410, 96
        %v2413 = vpop.permute.xlu0 %2412
        %v2415 = vsel %vm653, %v2413, 0
        %2417 = vmatprep.subr.bf16.mxu0 0
        %2418 = vmatpush1.bf16.msra.mxu0 0
        %2419 = vmatprep.subr.bf16.mxu0 0
        %2420 = vmatpush1.bf16.msra.mxu0 0
        %2421 = vmatprep.subr.bf16.mxu0 0
        %2422 = vmatpush1.bf16.msra.mxu0 0
        %2423 = vmatprep.subr.bf16.mxu0 0
        %2424 = vmatpush1.bf16.msra.mxu0 0
        %2425 = vmatprep.subr.bf16.mxu0 0
        %2426 = vmatpush1.bf16.msra.mxu0 0
        %2427 = vmatprep.subr.bf16.mxu0 0
        %2428 = vmatpush1.bf16.msra.mxu0 0
        %2429 = vmatprep.subr.bf16.mxu0 0
        %2430 = vmatpush1.bf16.msra.mxu0 0
        %2431 = vmatprep.subr.bf16.mxu0 0
        %2432 = vmatpush1.bf16.msra.mxu0 %v2258
        %2433 = vmatprep.subr.bf16.mxu0 0
        %2434 = vmatpush2.bf16.msra.mxu0 0
        %2435 = vmatprep.subr.bf16.mxu0 0
        %2436 = vmatpush2.bf16.msra.mxu0 0
        %2437 = vmatprep.subr.bf16.mxu0 0
        %2438 = vmatpush2.bf16.msra.mxu0 0
        %2439 = vmatprep.subr.bf16.mxu0 0
        %2440 = vmatpush2.bf16.msra.mxu0 0
        %2441 = vmatprep.subr.bf16.mxu0 0
        %2442 = vmatpush2.bf16.msra.mxu0 0
        %2443 = vmatprep.subr.bf16.mxu0 0
        %2444 = vmatpush2.bf16.msra.mxu0 0
        %2445 = vmatprep.subr.bf16.mxu0 0
        %2446 = vmatpush2.bf16.msra.mxu0 0
        %2447 = vmatprep.subr.bf16.mxu0 0
        %2448 = vmatpush2.bf16.msra.mxu0 0
        %2449 = vmatprep.mubr.bf16.mxu0 0
        %2450 = vmatmul.mubr.bf16.gmra.mxu0 %v2415
        %v2451 = vpop.f32.mrf.mxu0
        %v2452 = vadd.f32 0.0, %v2451
        %v2453 = vpop.f32.mrf.mxu0
        %v2454 = vpop.f32.mrf.mxu0
        %v2455 = vpop.f32.mrf.mxu0
        %2456 = vdwg.mxu0
        %v2458 = vrot.slane %v2452, 4
        %v2460 = vadd.f32 %v2161, %v2458
        %v2461 = vxor.u32 %v2460, 2147483648
        %v2462 = vmul.f32 %v2461, 1.442695
        %v2463 = vpow.pop %v2462
        %v2464 = vadd.f32 %v2463, 1.0
        %v2465 = vrcp.pop %v2464
        %v2466 = vmul.f32 1.0, %v2465
        %v2467 = vtanh.pop %v2460
        %v2469 = vrot.slane %v2318, 4
        %v2471 = vmul.f32 %v2466, %v2469
        %2473 = vrot.lane.b32.xlu0 %v2467, 80
        %v2474 = vpop.permute.xlu0 %2473
        %v2476 = vmul.f32 %v2466, %v2474
        %2478 = vrot.lane.b32.xlu0 %v2476, 16
        %v2479 = vpop.permute.xlu0 %2478
        %v2481 = vadd.f32 %v2471, %v2479
        %v2482 = vtanh.pop %v2481
        %2484 = vrot.lane.b32.xlu0 %v2482, 16
        %v2485 = vpop.permute.xlu0 %2484
        %v2487 = vmul.f32 %v2466, %v2485
        %v2488 = vpack.c.bf16 %v2398, %v2398
        %v2490 = vrot.slane %v2488, 2
        %2491 = vrot.lane.b32.xlu0 %v2490, 96
        %v2492 = vpop.permute.xlu0 %2491
        %v2494 = vsel %vm653, %v2492, 0
        %2496 = vmatprep.subr.bf16.mxu0 0
        %2497 = vmatpush1.bf16.msra.mxu0 0
        %2498 = vmatprep.subr.bf16.mxu0 0
        %2499 = vmatpush1.bf16.msra.mxu0 0
        %2500 = vmatprep.subr.bf16.mxu0 0
        %2501 = vmatpush1.bf16.msra.mxu0 0
        %2502 = vmatprep.subr.bf16.mxu0 0
        %2503 = vmatpush1.bf16.msra.mxu0 0
        %2504 = vmatprep.subr.bf16.mxu0 0
        %2505 = vmatpush1.bf16.msra.mxu0 0
        %2506 = vmatprep.subr.bf16.mxu0 0
        %2507 = vmatpush1.bf16.msra.mxu0 0
        %2508 = vmatprep.subr.bf16.mxu0 0
        %2509 = vmatpush1.bf16.msra.mxu0 0
        %2510 = vmatprep.subr.bf16.mxu0 0
        %2511 = vmatpush1.bf16.msra.mxu0 %v2329
        %2512 = vmatprep.subr.bf16.mxu0 0
        %2513 = vmatpush2.bf16.msra.mxu0 0
        %2514 = vmatprep.subr.bf16.mxu0 0
        %2515 = vmatpush2.bf16.msra.mxu0 0
        %2516 = vmatprep.subr.bf16.mxu0 0
        %2517 = vmatpush2.bf16.msra.mxu0 0
        %2518 = vmatprep.subr.bf16.mxu0 0
        %2519 = vmatpush2.bf16.msra.mxu0 0
        %2520 = vmatprep.subr.bf16.mxu0 0
        %2521 = vmatpush2.bf16.msra.mxu0 0
        %2522 = vmatprep.subr.bf16.mxu0 0
        %2523 = vmatpush2.bf16.msra.mxu0 0
        %2524 = vmatprep.subr.bf16.mxu0 0
        %2525 = vmatpush2.bf16.msra.mxu0 0
        %2526 = vmatprep.subr.bf16.mxu0 0
        %2527 = vmatpush2.bf16.msra.mxu0 0
        %2528 = vmatprep.mubr.bf16.mxu0 0
        %2529 = vmatmul.mubr.bf16.gmra.mxu0 %v2494
        %v2530 = vpop.f32.mrf.mxu0
        %v2531 = vadd.f32 0.0, %v2530
        %v2532 = vpop.f32.mrf.mxu0
        %v2533 = vpop.f32.mrf.mxu0
        %v2534 = vpop.f32.mrf.mxu0
        %2535 = vdwg.mxu0
        %v2536 = vadd.f32 %v2246, %v2531
        %v2537 = vxor.u32 %v2536, 2147483648
        %v2538 = vmul.f32 %v2537, 1.442695
        %v2539 = vpow.pop %v2538
        %v2540 = vadd.f32 %v2539, 1.0
        %v2541 = vrcp.pop %v2540
        %v2542 = vmul.f32 1.0, %v2541
        %v2543 = vtanh.pop %v2536
        %v2545 = vrot.slane %v2392, 4
        %v2547 = vmul.f32 %v2542, %v2545
        %2549 = vrot.lane.b32.xlu0 %v2543, 80
        %v2550 = vpop.permute.xlu0 %2549
        %v2552 = vmul.f32 %v2542, %v2550
        %2554 = vrot.lane.b32.xlu0 %v2552, 16
        %v2555 = vpop.permute.xlu0 %2554
        %v2557 = vadd.f32 %v2547, %v2555
        %v2558 = vtanh.pop %v2557
        %2560 = vrot.lane.b32.xlu0 %v2558, 16
        %v2561 = vpop.permute.xlu0 %2560
        %v2563 = vmul.f32 %v2542, %v2561
        %2565 = vrot.lane.b32.xlu0 %v2487, 96
        %v2566 = vpop.permute.xlu0 %2565
        %s2568 = scalar_lea.vmem [#allocation3], 4
        %2569 = vst.msk [vmem:[%s2568 - $0x4] sm:$0xf0] %vm1098, %v2566
        %2571 = vrot.lane.b32.xlu0 %v2563, 112
        %v2572 = vpop.permute.xlu0 %2571
        %s2574 = scalar_lea.vmem [#allocation3], 24
        %2575 = vst.msk [vmem:[%s2574] sm:$0xf] %vm1104, %v2572
        %v2576 = vpack.c.bf16 %v2487, %v2487
        %v2578 = vrot.slane %v2576, 2
        %2579 = vrot.lane.b32.xlu0 %v2578, 96
        %v2580 = vpop.permute.xlu0 %2579
        %v2582 = vsel %vm653, %v2580, 0
        %2584 = vmatprep.subr.bf16.mxu0 0
        %2585 = vmatpush1.bf16.msra.mxu0 0
        %2586 = vmatprep.subr.bf16.mxu0 0
        %2587 = vmatpush1.bf16.msra.mxu0 0
        %2588 = vmatprep.subr.bf16.mxu0 0
        %2589 = vmatpush1.bf16.msra.mxu0 0
        %2590 = vmatprep.subr.bf16.mxu0 0
        %2591 = vmatpush1.bf16.msra.mxu0 0
        %2592 = vmatprep.subr.bf16.mxu0 0
        %2593 = vmatpush1.bf16.msra.mxu0 0
        %2594 = vmatprep.subr.bf16.mxu0 0
        %2595 = vmatpush1.bf16.msra.mxu0 0
        %2596 = vmatprep.subr.bf16.mxu0 0
        %2597 = vmatpush1.bf16.msra.mxu0 0
        %2598 = vmatprep.subr.bf16.mxu0 0
        %2599 = vmatpush1.bf16.msra.mxu0 %v2258
        %2600 = vmatprep.subr.bf16.mxu0 0
        %2601 = vmatpush2.bf16.msra.mxu0 0
        %2602 = vmatprep.subr.bf16.mxu0 0
        %2603 = vmatpush2.bf16.msra.mxu0 0
        %2604 = vmatprep.subr.bf16.mxu0 0
        %2605 = vmatpush2.bf16.msra.mxu0 0
        %2606 = vmatprep.subr.bf16.mxu0 0
        %2607 = vmatpush2.bf16.msra.mxu0 0
        %2608 = vmatprep.subr.bf16.mxu0 0
        %2609 = vmatpush2.bf16.msra.mxu0 0
        %2610 = vmatprep.subr.bf16.mxu0 0
        %2611 = vmatpush2.bf16.msra.mxu0 0
        %2612 = vmatprep.subr.bf16.mxu0 0
        %2613 = vmatpush2.bf16.msra.mxu0 0
        %2614 = vmatprep.subr.bf16.mxu0 0
        %2615 = vmatpush2.bf16.msra.mxu0 0
        %2616 = vmatprep.mubr.bf16.mxu0 0
        %2617 = vmatmul.mubr.bf16.gmra.mxu0 %v2582
        %v2618 = vpop.f32.mrf.mxu0
        %v2619 = vadd.f32 0.0, %v2618
        %v2620 = vpop.f32.mrf.mxu0
        %v2621 = vpop.f32.mrf.mxu0
        %v2622 = vpop.f32.mrf.mxu0
        %2623 = vdwg.mxu0
        %v2624 = vadd.f32 %v2164, %v2619
        %v2625 = vxor.u32 %v2624, 2147483648
        %v2626 = vmul.f32 %v2625, 1.442695
        %v2627 = vpow.pop %v2626
        %v2628 = vadd.f32 %v2627, 1.0
        %v2629 = vrcp.pop %v2628
        %v2630 = vmul.f32 1.0, %v2629
        %v2631 = vtanh.pop %v2624
        %v2633 = vrot.slane %v2481, 4
        %v2635 = vmul.f32 %v2630, %v2633
        %2637 = vrot.lane.b32.xlu0 %v2631, 80
        %v2638 = vpop.permute.xlu0 %2637
        %v2640 = vmul.f32 %v2630, %v2638
        %2642 = vrot.lane.b32.xlu0 %v2640, 16
        %v2643 = vpop.permute.xlu0 %2642
        %v2645 = vadd.f32 %v2635, %v2643
        %v2646 = vtanh.pop %v2645
        %2648 = vrot.lane.b32.xlu0 %v2646, 16
        %v2649 = vpop.permute.xlu0 %2648
        %v2651 = vmul.f32 %v2630, %v2649
        %v2652 = vpack.c.bf16 %v2563, %v2563
        %2654 = vrot.lane.b32.xlu0 %v2652, 96
        %v2655 = vpop.permute.xlu0 %2654
        %v2657 = vsel %vm653, %v2655, 0
        %2659 = vmatprep.subr.bf16.mxu0 0
        %2660 = vmatpush1.bf16.msra.mxu0 0
        %2661 = vmatprep.subr.bf16.mxu0 0
        %2662 = vmatpush1.bf16.msra.mxu0 0
        %2663 = vmatprep.subr.bf16.mxu0 0
        %2664 = vmatpush1.bf16.msra.mxu0 0
        %2665 = vmatprep.subr.bf16.mxu0 0
        %2666 = vmatpush1.bf16.msra.mxu0 0
        %2667 = vmatprep.subr.bf16.mxu0 0
        %2668 = vmatpush1.bf16.msra.mxu0 0
        %2669 = vmatprep.subr.bf16.mxu0 0
        %2670 = vmatpush1.bf16.msra.mxu0 0
        %2671 = vmatprep.subr.bf16.mxu0 0
        %2672 = vmatpush1.bf16.msra.mxu0 0
        %2673 = vmatprep.subr.bf16.mxu0 0
        %2674 = vmatpush1.bf16.msra.mxu0 %v2329
        %2675 = vmatprep.subr.bf16.mxu0 0
        %2676 = vmatpush2.bf16.msra.mxu0 0
        %2677 = vmatprep.subr.bf16.mxu0 0
        %2678 = vmatpush2.bf16.msra.mxu0 0
        %2679 = vmatprep.subr.bf16.mxu0 0
        %2680 = vmatpush2.bf16.msra.mxu0 0
        %2681 = vmatprep.subr.bf16.mxu0 0
        %2682 = vmatpush2.bf16.msra.mxu0 0
        %2683 = vmatprep.subr.bf16.mxu0 0
        %2684 = vmatpush2.bf16.msra.mxu0 0
        %2685 = vmatprep.subr.bf16.mxu0 0
        %2686 = vmatpush2.bf16.msra.mxu0 0
        %2687 = vmatprep.subr.bf16.mxu0 0
        %2688 = vmatpush2.bf16.msra.mxu0 0
        %2689 = vmatprep.subr.bf16.mxu0 0
        %2690 = vmatpush2.bf16.msra.mxu0 0
        %2691 = vmatprep.mubr.bf16.mxu0 0
        %2692 = vmatmul.mubr.bf16.gmra.mxu0 %v2657
        %v2693 = vpop.f32.mrf.mxu0
        %v2694 = vadd.f32 0.0, %v2693
        %v2695 = vpop.f32.mrf.mxu0
        %v2696 = vpop.f32.mrf.mxu0
        %v2697 = vpop.f32.mrf.mxu0
        %2698 = vdwg.mxu0
        %v2700 = vrot.slane %v2694, 4
        %v2702 = vadd.f32 %v2243, %v2700
        %v2703 = vxor.u32 %v2702, 2147483648
        %v2704 = vmul.f32 %v2703, 1.442695
        %v2705 = vpow.pop %v2704
        %v2706 = vadd.f32 %v2705, 1.0
        %v2707 = vrcp.pop %v2706
        %v2708 = vmul.f32 1.0, %v2707
        %v2709 = vtanh.pop %v2702
        %v2711 = vrot.slane %v2557, 4
        %v2713 = vmul.f32 %v2708, %v2711
        %2715 = vrot.lane.b32.xlu0 %v2709, 80
        %v2716 = vpop.permute.xlu0 %2715
        %v2718 = vmul.f32 %v2708, %v2716
        %2720 = vrot.lane.b32.xlu0 %v2718, 16
        %v2721 = vpop.permute.xlu0 %2720
        %v2723 = vadd.f32 %v2713, %v2721
        %v2724 = vtanh.pop %v2723
        %2726 = vrot.lane.b32.xlu0 %v2724, 16
        %v2727 = vpop.permute.xlu0 %2726
        %v2729 = vmul.f32 %v2708, %v2727
        %2731 = vrot.lane.b32.xlu0 %v2651, 96
        %v2732 = vpop.permute.xlu0 %2731
        %s2734 = scalar_lea.vmem [#allocation3], 8
        %2735 = vst.msk [vmem:[%s2734] sm:$0xf] %vm932, %v2732
        %2737 = vrot.lane.b32.xlu0 %v2729, 112
        %v2738 = vpop.permute.xlu0 %2737
        %s2740 = scalar_lea.vmem [#allocation3], 20
        %2741 = vst.msk [vmem:[%s2740 - $0x4] sm:$0xf0] %vm938, %v2738
        %v2742 = vpack.c.bf16 %v2651, %v2651
        %2744 = vrot.lane.b32.xlu0 %v2742, 96
        %v2745 = vpop.permute.xlu0 %2744
        %v2747 = vsel %vm653, %v2745, 0
        %2749 = vmatprep.subr.bf16.mxu0 0
        %2750 = vmatpush1.bf16.msra.mxu0 0
        %2751 = vmatprep.subr.bf16.mxu0 0
        %2752 = vmatpush1.bf16.msra.mxu0 0
        %2753 = vmatprep.subr.bf16.mxu0 0
        %2754 = vmatpush1.bf16.msra.mxu0 0
        %2755 = vmatprep.subr.bf16.mxu0 0
        %2756 = vmatpush1.bf16.msra.mxu0 0
        %2757 = vmatprep.subr.bf16.mxu0 0
        %2758 = vmatpush1.bf16.msra.mxu0 0
        %2759 = vmatprep.subr.bf16.mxu0 0
        %2760 = vmatpush1.bf16.msra.mxu0 0
        %2761 = vmatprep.subr.bf16.mxu0 0
        %2762 = vmatpush1.bf16.msra.mxu0 0
        %2763 = vmatprep.subr.bf16.mxu0 0
        %2764 = vmatpush1.bf16.msra.mxu0 %v2258
        %2765 = vmatprep.subr.bf16.mxu0 0
        %2766 = vmatpush2.bf16.msra.mxu0 0
        %2767 = vmatprep.subr.bf16.mxu0 0
        %2768 = vmatpush2.bf16.msra.mxu0 0
        %2769 = vmatprep.subr.bf16.mxu0 0
        %2770 = vmatpush2.bf16.msra.mxu0 0
        %2771 = vmatprep.subr.bf16.mxu0 0
        %2772 = vmatpush2.bf16.msra.mxu0 0
        %2773 = vmatprep.subr.bf16.mxu0 0
        %2774 = vmatpush2.bf16.msra.mxu0 0
        %2775 = vmatprep.subr.bf16.mxu0 0
        %2776 = vmatpush2.bf16.msra.mxu0 0
        %2777 = vmatprep.subr.bf16.mxu0 0
        %2778 = vmatpush2.bf16.msra.mxu0 0
        %2779 = vmatprep.subr.bf16.mxu0 0
        %2780 = vmatpush2.bf16.msra.mxu0 0
        %2781 = vmatprep.mubr.bf16.mxu0 0
        %2782 = vmatmul.mubr.bf16.gmra.mxu0 %v2747
        %v2783 = vpop.f32.mrf.mxu0
        %v2784 = vadd.f32 0.0, %v2783
        %v2785 = vpop.f32.mrf.mxu0
        %v2786 = vpop.f32.mrf.mxu0
        %v2787 = vpop.f32.mrf.mxu0
        %2788 = vdwg.mxu0
        %v2790 = vrot.slane %v2784, 4
        %v2792 = vadd.f32 %v2164, %v2790
        %v2793 = vxor.u32 %v2792, 2147483648
        %v2794 = vmul.f32 %v2793, 1.442695
        %v2795 = vpow.pop %v2794
        %v2796 = vadd.f32 %v2795, 1.0
        %v2797 = vrcp.pop %v2796
        %v2798 = vmul.f32 1.0, %v2797
        %v2799 = vtanh.pop %v2792
        %v2801 = vrot.slane %v2645, 4
        %v2803 = vmul.f32 %v2798, %v2801
        %2805 = vrot.lane.b32.xlu0 %v2799, 80
        %v2806 = vpop.permute.xlu0 %2805
        %v2808 = vmul.f32 %v2798, %v2806
        %2810 = vrot.lane.b32.xlu0 %v2808, 16
        %v2811 = vpop.permute.xlu0 %2810
        %v2813 = vadd.f32 %v2803, %v2811
        %v2814 = vtanh.pop %v2813
        %2816 = vrot.lane.b32.xlu0 %v2814, 16
        %v2817 = vpop.permute.xlu0 %2816
        %v2819 = vmul.f32 %v2798, %v2817
        %v2820 = vpack.c.bf16 %v2729, %v2729
        %v2822 = vrot.slane %v2820, 2
        %2823 = vrot.lane.b32.xlu0 %v2822, 96
        %v2824 = vpop.permute.xlu0 %2823
        %v2826 = vsel %vm653, %v2824, 0
        %2828 = vmatprep.subr.bf16.mxu0 0
        %2829 = vmatpush1.bf16.msra.mxu0 0
        %2830 = vmatprep.subr.bf16.mxu0 0
        %2831 = vmatpush1.bf16.msra.mxu0 0
        %2832 = vmatprep.subr.bf16.mxu0 0
        %2833 = vmatpush1.bf16.msra.mxu0 0
        %2834 = vmatprep.subr.bf16.mxu0 0
        %2835 = vmatpush1.bf16.msra.mxu0 0
        %2836 = vmatprep.subr.bf16.mxu0 0
        %2837 = vmatpush1.bf16.msra.mxu0 0
        %2838 = vmatprep.subr.bf16.mxu0 0
        %2839 = vmatpush1.bf16.msra.mxu0 0
        %2840 = vmatprep.subr.bf16.mxu0 0
        %2841 = vmatpush1.bf16.msra.mxu0 0
        %2842 = vmatprep.subr.bf16.mxu0 0
        %2843 = vmatpush1.bf16.msra.mxu0 %v2329
        %2844 = vmatprep.subr.bf16.mxu0 0
        %2845 = vmatpush2.bf16.msra.mxu0 0
        %2846 = vmatprep.subr.bf16.mxu0 0
        %2847 = vmatpush2.bf16.msra.mxu0 0
        %2848 = vmatprep.subr.bf16.mxu0 0
        %2849 = vmatpush2.bf16.msra.mxu0 0
        %2850 = vmatprep.subr.bf16.mxu0 0
        %2851 = vmatpush2.bf16.msra.mxu0 0
        %2852 = vmatprep.subr.bf16.mxu0 0
        %2853 = vmatpush2.bf16.msra.mxu0 0
        %2854 = vmatprep.subr.bf16.mxu0 0
        %2855 = vmatpush2.bf16.msra.mxu0 0
        %2856 = vmatprep.subr.bf16.mxu0 0
        %2857 = vmatpush2.bf16.msra.mxu0 0
        %2858 = vmatprep.subr.bf16.mxu0 0
        %2859 = vmatpush2.bf16.msra.mxu0 0
        %2860 = vmatprep.mubr.bf16.mxu0 0
        %2861 = vmatmul.mubr.bf16.gmra.mxu0 %v2826
        %v2862 = vpop.f32.mrf.mxu0
        %v2863 = vadd.f32 0.0, %v2862
        %v2864 = vpop.f32.mrf.mxu0
        %v2865 = vpop.f32.mrf.mxu0
        %v2866 = vpop.f32.mrf.mxu0
        %2867 = vdwg.mxu0
        %v2868 = vadd.f32 %v2243, %v2863
        %v2869 = vxor.u32 %v2868, 2147483648
        %v2870 = vmul.f32 %v2869, 1.442695
        %v2871 = vpow.pop %v2870
        %v2872 = vadd.f32 %v2871, 1.0
        %v2873 = vrcp.pop %v2872
        %v2874 = vmul.f32 1.0, %v2873
        %v2875 = vtanh.pop %v2868
        %v2877 = vrot.slane %v2723, 4
        %v2879 = vmul.f32 %v2874, %v2877
        %2881 = vrot.lane.b32.xlu0 %v2875, 80
        %v2882 = vpop.permute.xlu0 %2881
        %v2884 = vmul.f32 %v2874, %v2882
        %2886 = vrot.lane.b32.xlu0 %v2884, 16
        %v2887 = vpop.permute.xlu0 %2886
        %v2889 = vadd.f32 %v2879, %v2887
        %v2890 = vtanh.pop %v2889
        %2892 = vrot.lane.b32.xlu0 %v2890, 16
        %v2893 = vpop.permute.xlu0 %2892
        %v2895 = vmul.f32 %v2874, %v2893
        %2897 = vrot.lane.b32.xlu0 %v2819, 96
        %v2898 = vpop.permute.xlu0 %2897
        %s2900 = scalar_lea.vmem [#allocation3], 12
        %2901 = vst.msk [vmem:[%s2900 - $0x4] sm:$0xf0] %vm1098, %v2898
        %2903 = vrot.lane.b32.xlu0 %v2895, 112
        %v2904 = vpop.permute.xlu0 %2903
        %s2906 = scalar_lea.vmem [#allocation3], 16
        %2907 = vst.msk [vmem:[%s2906] sm:$0xf] %vm1104, %v2904
        %v2908 = vpack.c.bf16 %v2819, %v2819
        %v2910 = vrot.slane %v2908, 2
        %2911 = vrot.lane.b32.xlu0 %v2910, 96
        %v2912 = vpop.permute.xlu0 %2911
        %v2914 = vsel %vm653, %v2912, 0
        %2916 = vmatprep.subr.bf16.mxu0 0
        %2917 = vmatpush1.bf16.msra.mxu0 0
        %2918 = vmatprep.subr.bf16.mxu0 0
        %2919 = vmatpush1.bf16.msra.mxu0 0
        %2920 = vmatprep.subr.bf16.mxu0 0
        %2921 = vmatpush1.bf16.msra.mxu0 0
        %2922 = vmatprep.subr.bf16.mxu0 0
        %2923 = vmatpush1.bf16.msra.mxu0 0
        %2924 = vmatprep.subr.bf16.mxu0 0
        %2925 = vmatpush1.bf16.msra.mxu0 0
        %2926 = vmatprep.subr.bf16.mxu0 0
        %2927 = vmatpush1.bf16.msra.mxu0 0
        %2928 = vmatprep.subr.bf16.mxu0 0
        %2929 = vmatpush1.bf16.msra.mxu0 0
        %2930 = vmatprep.subr.bf16.mxu0 0
        %2931 = vmatpush1.bf16.msra.mxu0 %v2258
        %2932 = vmatprep.subr.bf16.mxu0 0
        %2933 = vmatpush2.bf16.msra.mxu0 0
        %2934 = vmatprep.subr.bf16.mxu0 0
        %2935 = vmatpush2.bf16.msra.mxu0 0
        %2936 = vmatprep.subr.bf16.mxu0 0
        %2937 = vmatpush2.bf16.msra.mxu0 0
        %2938 = vmatprep.subr.bf16.mxu0 0
        %2939 = vmatpush2.bf16.msra.mxu0 0
        %2940 = vmatprep.subr.bf16.mxu0 0
        %2941 = vmatpush2.bf16.msra.mxu0 0
        %2942 = vmatprep.subr.bf16.mxu0 0
        %2943 = vmatpush2.bf16.msra.mxu0 0
        %2944 = vmatprep.subr.bf16.mxu0 0
        %2945 = vmatpush2.bf16.msra.mxu0 0
        %2946 = vmatprep.subr.bf16.mxu0 0
        %2947 = vmatpush2.bf16.msra.mxu0 0
        %2948 = vmatprep.mubr.bf16.mxu0 0
        %2949 = vmatmul.mubr.bf16.gmra.mxu0 %v2914
        %v2950 = vpop.f32.mrf.mxu0
        %v2951 = vadd.f32 0.0, %v2950
        %v2952 = vpop.f32.mrf.mxu0
        %v2953 = vpop.f32.mrf.mxu0
        %v2954 = vpop.f32.mrf.mxu0
        %2955 = vdwg.mxu0
        %v2956 = vadd.f32 %v2169, %v2951
        %v2957 = vxor.u32 %v2956, 2147483648
        %v2958 = vmul.f32 %v2957, 1.442695
        %v2959 = vpow.pop %v2958
        %v2960 = vadd.f32 %v2959, 1.0
        %v2961 = vrcp.pop %v2960
        %v2962 = vmul.f32 1.0, %v2961
        %v2963 = vtanh.pop %v2956
        %v2965 = vrot.slane %v2813, 4
        %v2967 = vmul.f32 %v2962, %v2965
        %2969 = vrot.lane.b32.xlu0 %v2963, 80
        %v2970 = vpop.permute.xlu0 %2969
        %v2972 = vmul.f32 %v2962, %v2970
        %2974 = vrot.lane.b32.xlu0 %v2972, 16
        %v2975 = vpop.permute.xlu0 %2974
        %v2977 = vadd.f32 %v2967, %v2975
        %v2978 = vtanh.pop %v2977
        %2980 = vrot.lane.b32.xlu0 %v2978, 16
        %v2981 = vpop.permute.xlu0 %2980
        %v2983 = vmul.f32 %v2962, %v2981
        %v2984 = vpack.c.bf16 %v2895, %v2895
        %2986 = vrot.lane.b32.xlu0 %v2984, 96
        %v2987 = vpop.permute.xlu0 %2986
        %v2989 = vsel %vm653, %v2987, 0
        %2991 = vmatprep.subr.bf16.mxu0 0
        %2992 = vmatpush1.bf16.msra.mxu0 0
        %2993 = vmatprep.subr.bf16.mxu0 0
        %2994 = vmatpush1.bf16.msra.mxu0 0
        %2995 = vmatprep.subr.bf16.mxu0 0
        %2996 = vmatpush1.bf16.msra.mxu0 0
        %2997 = vmatprep.subr.bf16.mxu0 0
        %2998 = vmatpush1.bf16.msra.mxu0 0
        %2999 = vmatprep.subr.bf16.mxu0 0
        %3000 = vmatpush1.bf16.msra.mxu0 0
        %3001 = vmatprep.subr.bf16.mxu0 0
        %3002 = vmatpush1.bf16.msra.mxu0 0
        %3003 = vmatprep.subr.bf16.mxu0 0
        %3004 = vmatpush1.bf16.msra.mxu0 0
        %3005 = vmatprep.subr.bf16.mxu0 0
        %3006 = vmatpush1.bf16.msra.mxu0 %v2329
        %3007 = vmatprep.subr.bf16.mxu0 0
        %3008 = vmatpush2.bf16.msra.mxu0 0
        %3009 = vmatprep.subr.bf16.mxu0 0
        %3010 = vmatpush2.bf16.msra.mxu0 0
        %3011 = vmatprep.subr.bf16.mxu0 0
        %3012 = vmatpush2.bf16.msra.mxu0 0
        %3013 = vmatprep.subr.bf16.mxu0 0
        %3014 = vmatpush2.bf16.msra.mxu0 0
        %3015 = vmatprep.subr.bf16.mxu0 0
        %3016 = vmatpush2.bf16.msra.mxu0 0
        %3017 = vmatprep.subr.bf16.mxu0 0
        %3018 = vmatpush2.bf16.msra.mxu0 0
        %3019 = vmatprep.subr.bf16.mxu0 0
        %3020 = vmatpush2.bf16.msra.mxu0 0
        %3021 = vmatprep.subr.bf16.mxu0 0
        %3022 = vmatpush2.bf16.msra.mxu0 0
        %3023 = vmatprep.mubr.bf16.mxu0 0
        %3024 = vmatmul.mubr.bf16.gmra.mxu0 %v2989
        %v3025 = vpop.f32.mrf.mxu0
        %v3026 = vadd.f32 0.0, %v3025
        %v3027 = vpop.f32.mrf.mxu0
        %v3028 = vpop.f32.mrf.mxu0
        %v3029 = vpop.f32.mrf.mxu0
        %3030 = vdwg.mxu0
        %v3032 = vrot.slane %v3026, 4
        %v3034 = vadd.f32 %v2238, %v3032
        %v3035 = vxor.u32 %v3034, 2147483648
        %v3036 = vmul.f32 %v3035, 1.442695
        %v3037 = vpow.pop %v3036
        %v3038 = vadd.f32 %v3037, 1.0
        %v3039 = vrcp.pop %v3038
        %v3040 = vmul.f32 1.0, %v3039
        %v3041 = vtanh.pop %v3034
        %v3043 = vrot.slane %v2889, 4
        %v3045 = vmul.f32 %v3040, %v3043
        %3047 = vrot.lane.b32.xlu0 %v3041, 80
        %v3048 = vpop.permute.xlu0 %3047
        %v3050 = vmul.f32 %v3040, %v3048
        %3052 = vrot.lane.b32.xlu0 %v3050, 16
        %v3053 = vpop.permute.xlu0 %3052
        %v3055 = vadd.f32 %v3045, %v3053
        %v3056 = vtanh.pop %v3055
        %3058 = vrot.lane.b32.xlu0 %v3056, 16
        %v3059 = vpop.permute.xlu0 %3058
        %v3061 = vmul.f32 %v3040, %v3059
        %3063 = vrot.lane.b32.xlu0 %v2983, 96
        %v3064 = vpop.permute.xlu0 %3063
        %3066 = vst.msk [vmem:[%s2906] sm:$0xf] %vm932, %v3064
        %3068 = vrot.lane.b32.xlu0 %v3061, 112
        %v3069 = vpop.permute.xlu0 %3068
        %3071 = vst.msk [vmem:[%s2900 - $0x4] sm:$0xf0] %vm938, %v3069
        %v3072 = vpack.c.bf16 %v2983, %v2983
        %3074 = vrot.lane.b32.xlu0 %v3072, 96
        %v3075 = vpop.permute.xlu0 %3074
        %v3077 = vsel %vm653, %v3075, 0
        %3079 = vmatprep.subr.bf16.mxu0 0
        %3080 = vmatpush1.bf16.msra.mxu0 0
        %3081 = vmatprep.subr.bf16.mxu0 0
        %3082 = vmatpush1.bf16.msra.mxu0 0
        %3083 = vmatprep.subr.bf16.mxu0 0
        %3084 = vmatpush1.bf16.msra.mxu0 0
        %3085 = vmatprep.subr.bf16.mxu0 0
        %3086 = vmatpush1.bf16.msra.mxu0 0
        %3087 = vmatprep.subr.bf16.mxu0 0
        %3088 = vmatpush1.bf16.msra.mxu0 0
        %3089 = vmatprep.subr.bf16.mxu0 0
        %3090 = vmatpush1.bf16.msra.mxu0 0
        %3091 = vmatprep.subr.bf16.mxu0 0
        %3092 = vmatpush1.bf16.msra.mxu0 0
        %3093 = vmatprep.subr.bf16.mxu0 0
        %3094 = vmatpush1.bf16.msra.mxu0 %v2258
        %3095 = vmatprep.subr.bf16.mxu0 0
        %3096 = vmatpush2.bf16.msra.mxu0 0
        %3097 = vmatprep.subr.bf16.mxu0 0
        %3098 = vmatpush2.bf16.msra.mxu0 0
        %3099 = vmatprep.subr.bf16.mxu0 0
        %3100 = vmatpush2.bf16.msra.mxu0 0
        %3101 = vmatprep.subr.bf16.mxu0 0
        %3102 = vmatpush2.bf16.msra.mxu0 0
        %3103 = vmatprep.subr.bf16.mxu0 0
        %3104 = vmatpush2.bf16.msra.mxu0 0
        %3105 = vmatprep.subr.bf16.mxu0 0
        %3106 = vmatpush2.bf16.msra.mxu0 0
        %3107 = vmatprep.subr.bf16.mxu0 0
        %3108 = vmatpush2.bf16.msra.mxu0 0
        %3109 = vmatprep.subr.bf16.mxu0 0
        %3110 = vmatpush2.bf16.msra.mxu0 0
        %3111 = vmatprep.mubr.bf16.mxu0 0
        %3112 = vmatmul.mubr.bf16.gmra.mxu0 %v3077
        %v3113 = vpop.f32.mrf.mxu0
        %v3114 = vadd.f32 0.0, %v3113
        %v3115 = vpop.f32.mrf.mxu0
        %v3116 = vpop.f32.mrf.mxu0
        %v3117 = vpop.f32.mrf.mxu0
        %3118 = vdwg.mxu0
        %v3120 = vrot.slane %v3114, 4
        %v3122 = vadd.f32 %v2169, %v3120
        %v3123 = vxor.u32 %v3122, 2147483648
        %v3124 = vmul.f32 %v3123, 1.442695
        %v3125 = vpow.pop %v3124
        %v3126 = vadd.f32 %v3125, 1.0
        %v3127 = vrcp.pop %v3126
        %v3128 = vmul.f32 1.0, %v3127
        %v3129 = vtanh.pop %v3122
        %v3131 = vrot.slane %v2977, 4
        %v3133 = vmul.f32 %v3128, %v3131
        %3135 = vrot.lane.b32.xlu0 %v3129, 80
        %v3136 = vpop.permute.xlu0 %3135
        %v3138 = vmul.f32 %v3128, %v3136
        %3140 = vrot.lane.b32.xlu0 %v3138, 16
        %v3141 = vpop.permute.xlu0 %3140
        %v3143 = vadd.f32 %v3133, %v3141
        %v3144 = vtanh.pop %v3143
        %3146 = vrot.lane.b32.xlu0 %v3144, 16
        %v3147 = vpop.permute.xlu0 %3146
        %v3149 = vmul.f32 %v3128, %v3147
        %v3150 = vpack.c.bf16 %v3061, %v3061
        %v3152 = vrot.slane %v3150, 2
        %3153 = vrot.lane.b32.xlu0 %v3152, 96
        %v3154 = vpop.permute.xlu0 %3153
        %v3156 = vsel %vm653, %v3154, 0
        %3158 = vmatprep.subr.bf16.mxu0 0
        %3159 = vmatpush1.bf16.msra.mxu0 0
        %3160 = vmatprep.subr.bf16.mxu0 0
        %3161 = vmatpush1.bf16.msra.mxu0 0
        %3162 = vmatprep.subr.bf16.mxu0 0
        %3163 = vmatpush1.bf16.msra.mxu0 0
        %3164 = vmatprep.subr.bf16.mxu0 0
        %3165 = vmatpush1.bf16.msra.mxu0 0
        %3166 = vmatprep.subr.bf16.mxu0 0
        %3167 = vmatpush1.bf16.msra.mxu0 0
        %3168 = vmatprep.subr.bf16.mxu0 0
        %3169 = vmatpush1.bf16.msra.mxu0 0
        %3170 = vmatprep.subr.bf16.mxu0 0
        %3171 = vmatpush1.bf16.msra.mxu0 0
        %3172 = vmatprep.subr.bf16.mxu0 0
        %3173 = vmatpush1.bf16.msra.mxu0 %v2329
        %3174 = vmatprep.subr.bf16.mxu0 0
        %3175 = vmatpush2.bf16.msra.mxu0 0
        %3176 = vmatprep.subr.bf16.mxu0 0
        %3177 = vmatpush2.bf16.msra.mxu0 0
        %3178 = vmatprep.subr.bf16.mxu0 0
        %3179 = vmatpush2.bf16.msra.mxu0 0
        %3180 = vmatprep.subr.bf16.mxu0 0
        %3181 = vmatpush2.bf16.msra.mxu0 0
        %3182 = vmatprep.subr.bf16.mxu0 0
        %3183 = vmatpush2.bf16.msra.mxu0 0
        %3184 = vmatprep.subr.bf16.mxu0 0
        %3185 = vmatpush2.bf16.msra.mxu0 0
        %3186 = vmatprep.subr.bf16.mxu0 0
        %3187 = vmatpush2.bf16.msra.mxu0 0
        %3188 = vmatprep.subr.bf16.mxu0 0
        %3189 = vmatpush2.bf16.msra.mxu0 0
        %3190 = vmatprep.mubr.bf16.mxu0 0
        %3191 = vmatmul.mubr.bf16.gmra.mxu0 %v3156
        %v3192 = vpop.f32.mrf.mxu0
        %v3193 = vadd.f32 0.0, %v3192
        %v3194 = vpop.f32.mrf.mxu0
        %v3195 = vpop.f32.mrf.mxu0
        %v3196 = vpop.f32.mrf.mxu0
        %3197 = vdwg.mxu0
        %v3198 = vadd.f32 %v2238, %v3193
        %v3199 = vxor.u32 %v3198, 2147483648
        %v3200 = vmul.f32 %v3199, 1.442695
        %v3201 = vpow.pop %v3200
        %v3202 = vadd.f32 %v3201, 1.0
        %v3203 = vrcp.pop %v3202
        %v3204 = vmul.f32 1.0, %v3203
        %v3205 = vtanh.pop %v3198
        %v3207 = vrot.slane %v3055, 4
        %v3209 = vmul.f32 %v3204, %v3207
        %3211 = vrot.lane.b32.xlu0 %v3205, 80
        %v3212 = vpop.permute.xlu0 %3211
        %v3214 = vmul.f32 %v3204, %v3212
        %3216 = vrot.lane.b32.xlu0 %v3214, 16
        %v3217 = vpop.permute.xlu0 %3216
        %v3219 = vadd.f32 %v3209, %v3217
        %v3220 = vtanh.pop %v3219
        %3222 = vrot.lane.b32.xlu0 %v3220, 16
        %v3223 = vpop.permute.xlu0 %3222
        %v3225 = vmul.f32 %v3204, %v3223
        %3227 = vrot.lane.b32.xlu0 %v3149, 96
        %v3228 = vpop.permute.xlu0 %3227
        %3230 = vst.msk [vmem:[%s2740 - $0x4] sm:$0xf0] %vm1098, %v3228
        %3232 = vrot.lane.b32.xlu0 %v3225, 112
        %v3233 = vpop.permute.xlu0 %3232
        %3235 = vst.msk [vmem:[%s2734] sm:$0xf] %vm1104, %v3233
        %v3236 = vpack.c.bf16 %v3149, %v3149
        %v3238 = vrot.slane %v3236, 2
        %3239 = vrot.lane.b32.xlu0 %v3238, 96
        %v3240 = vpop.permute.xlu0 %3239
        %v3242 = vsel %vm653, %v3240, 0
        %3244 = vmatprep.subr.bf16.mxu0 0
        %3245 = vmatpush1.bf16.msra.mxu0 0
        %3246 = vmatprep.subr.bf16.mxu0 0
        %3247 = vmatpush1.bf16.msra.mxu0 0
        %3248 = vmatprep.subr.bf16.mxu0 0
        %3249 = vmatpush1.bf16.msra.mxu0 0
        %3250 = vmatprep.subr.bf16.mxu0 0
        %3251 = vmatpush1.bf16.msra.mxu0 0
        %3252 = vmatprep.subr.bf16.mxu0 0
        %3253 = vmatpush1.bf16.msra.mxu0 0
        %3254 = vmatprep.subr.bf16.mxu0 0
        %3255 = vmatpush1.bf16.msra.mxu0 0
        %3256 = vmatprep.subr.bf16.mxu0 0
        %3257 = vmatpush1.bf16.msra.mxu0 0
        %3258 = vmatprep.subr.bf16.mxu0 0
        %3259 = vmatpush1.bf16.msra.mxu0 %v2258
        %3260 = vmatprep.subr.bf16.mxu0 0
        %3261 = vmatpush2.bf16.msra.mxu0 0
        %3262 = vmatprep.subr.bf16.mxu0 0
        %3263 = vmatpush2.bf16.msra.mxu0 0
        %3264 = vmatprep.subr.bf16.mxu0 0
        %3265 = vmatpush2.bf16.msra.mxu0 0
        %3266 = vmatprep.subr.bf16.mxu0 0
        %3267 = vmatpush2.bf16.msra.mxu0 0
        %3268 = vmatprep.subr.bf16.mxu0 0
        %3269 = vmatpush2.bf16.msra.mxu0 0
        %3270 = vmatprep.subr.bf16.mxu0 0
        %3271 = vmatpush2.bf16.msra.mxu0 0
        %3272 = vmatprep.subr.bf16.mxu0 0
        %3273 = vmatpush2.bf16.msra.mxu0 0
        %3274 = vmatprep.subr.bf16.mxu0 0
        %3275 = vmatpush2.bf16.msra.mxu0 0
        %3276 = vmatprep.mubr.bf16.mxu0 0
        %3277 = vmatmul.mubr.bf16.gmra.mxu0 %v3242
        %v3278 = vpop.f32.mrf.mxu0
        %v3279 = vadd.f32 0.0, %v3278
        %v3280 = vpop.f32.mrf.mxu0
        %v3281 = vpop.f32.mrf.mxu0
        %v3282 = vpop.f32.mrf.mxu0
        %3283 = vdwg.mxu0
        %v3284 = vadd.f32 %v2172, %v3279
        %v3285 = vxor.u32 %v3284, 2147483648
        %v3286 = vmul.f32 %v3285, 1.442695
        %v3287 = vpow.pop %v3286
        %v3288 = vadd.f32 %v3287, 1.0
        %v3289 = vrcp.pop %v3288
        %v3290 = vmul.f32 1.0, %v3289
        %v3291 = vtanh.pop %v3284
        %v3293 = vrot.slane %v3143, 4
        %v3295 = vmul.f32 %v3290, %v3293
        %3297 = vrot.lane.b32.xlu0 %v3291, 80
        %v3298 = vpop.permute.xlu0 %3297
        %v3300 = vmul.f32 %v3290, %v3298
        %3302 = vrot.lane.b32.xlu0 %v3300, 16
        %v3303 = vpop.permute.xlu0 %3302
        %v3305 = vadd.f32 %v3295, %v3303
        %v3306 = vtanh.pop %v3305
        %3308 = vrot.lane.b32.xlu0 %v3306, 16
        %v3309 = vpop.permute.xlu0 %3308
        %v3311 = vmul.f32 %v3290, %v3309
        %v3312 = vpack.c.bf16 %v3225, %v3225
        %3314 = vrot.lane.b32.xlu0 %v3312, 96
        %v3315 = vpop.permute.xlu0 %3314
        %v3317 = vsel %vm653, %v3315, 0
        %3319 = vmatprep.subr.bf16.mxu0 0
        %3320 = vmatpush1.bf16.msra.mxu0 0
        %3321 = vmatprep.subr.bf16.mxu0 0
        %3322 = vmatpush1.bf16.msra.mxu0 0
        %3323 = vmatprep.subr.bf16.mxu0 0
        %3324 = vmatpush1.bf16.msra.mxu0 0
        %3325 = vmatprep.subr.bf16.mxu0 0
        %3326 = vmatpush1.bf16.msra.mxu0 0
        %3327 = vmatprep.subr.bf16.mxu0 0
        %3328 = vmatpush1.bf16.msra.mxu0 0
        %3329 = vmatprep.subr.bf16.mxu0 0
        %3330 = vmatpush1.bf16.msra.mxu0 0
        %3331 = vmatprep.subr.bf16.mxu0 0
        %3332 = vmatpush1.bf16.msra.mxu0 0
        %3333 = vmatprep.subr.bf16.mxu0 0
        %3334 = vmatpush1.bf16.msra.mxu0 %v2329
        %3335 = vmatprep.subr.bf16.mxu0 0
        %3336 = vmatpush2.bf16.msra.mxu0 0
        %3337 = vmatprep.subr.bf16.mxu0 0
        %3338 = vmatpush2.bf16.msra.mxu0 0
        %3339 = vmatprep.subr.bf16.mxu0 0
        %3340 = vmatpush2.bf16.msra.mxu0 0
        %3341 = vmatprep.subr.bf16.mxu0 0
        %3342 = vmatpush2.bf16.msra.mxu0 0
        %3343 = vmatprep.subr.bf16.mxu0 0
        %3344 = vmatpush2.bf16.msra.mxu0 0
        %3345 = vmatprep.subr.bf16.mxu0 0
        %3346 = vmatpush2.bf16.msra.mxu0 0
        %3347 = vmatprep.subr.bf16.mxu0 0
        %3348 = vmatpush2.bf16.msra.mxu0 0
        %3349 = vmatprep.subr.bf16.mxu0 0
        %3350 = vmatpush2.bf16.msra.mxu0 0
        %3351 = vmatprep.mubr.bf16.mxu0 0
        %3352 = vmatmul.mubr.bf16.gmra.mxu0 %v3317
        %v3353 = vpop.f32.mrf.mxu0
        %v3354 = vadd.f32 0.0, %v3353
        %v3355 = vpop.f32.mrf.mxu0
        %v3356 = vpop.f32.mrf.mxu0
        %v3357 = vpop.f32.mrf.mxu0
        %3358 = vdwg.mxu0
        %v3360 = vrot.slane %v3354, 4
        %v3362 = vadd.f32 %v2235, %v3360
        %v3363 = vxor.u32 %v3362, 2147483648
        %v3364 = vmul.f32 %v3363, 1.442695
        %v3365 = vpow.pop %v3364
        %v3366 = vadd.f32 %v3365, 1.0
        %v3367 = vrcp.pop %v3366
        %v3368 = vmul.f32 1.0, %v3367
        %v3369 = vtanh.pop %v3362
        %v3371 = vrot.slane %v3219, 4
        %v3373 = vmul.f32 %v3368, %v3371
        %3375 = vrot.lane.b32.xlu0 %v3369, 80
        %v3376 = vpop.permute.xlu0 %3375
        %v3378 = vmul.f32 %v3368, %v3376
        %3380 = vrot.lane.b32.xlu0 %v3378, 16
        %v3381 = vpop.permute.xlu0 %3380
        %v3383 = vadd.f32 %v3373, %v3381
        %v3384 = vtanh.pop %v3383
        %3386 = vrot.lane.b32.xlu0 %v3384, 16
        %v3387 = vpop.permute.xlu0 %3386
        %v3389 = vmul.f32 %v3368, %v3387
        %3391 = vrot.lane.b32.xlu0 %v3311, 96
        %v3392 = vpop.permute.xlu0 %3391
        %3394 = vst.msk [vmem:[%s2574] sm:$0xf] %vm932, %v3392
        %3396 = vrot.lane.b32.xlu0 %v3389, 112
        %v3397 = vpop.permute.xlu0 %3396
        %3399 = vst.msk [vmem:[%s2568 - $0x4] sm:$0xf0] %vm938, %v3397
        %v3400 = vpack.c.bf16 %v3311, %v3311
        %3402 = vrot.lane.b32.xlu0 %v3400, 96
        %v3403 = vpop.permute.xlu0 %3402
        %v3405 = vsel %vm653, %v3403, 0
        %3407 = vmatprep.subr.bf16.mxu0 0
        %3408 = vmatpush1.bf16.msra.mxu0 0
        %3409 = vmatprep.subr.bf16.mxu0 0
        %3410 = vmatpush1.bf16.msra.mxu0 0
        %3411 = vmatprep.subr.bf16.mxu0 0
        %3412 = vmatpush1.bf16.msra.mxu0 0
        %3413 = vmatprep.subr.bf16.mxu0 0
        %3414 = vmatpush1.bf16.msra.mxu0 0
        %3415 = vmatprep.subr.bf16.mxu0 0
        %3416 = vmatpush1.bf16.msra.mxu0 0
        %3417 = vmatprep.subr.bf16.mxu0 0
        %3418 = vmatpush1.bf16.msra.mxu0 0
        %3419 = vmatprep.subr.bf16.mxu0 0
        %3420 = vmatpush1.bf16.msra.mxu0 0
        %3421 = vmatprep.subr.bf16.mxu0 0
        %3422 = vmatpush1.bf16.msra.mxu0 %v2258
        %3423 = vmatprep.subr.bf16.mxu0 0
        %3424 = vmatpush2.bf16.msra.mxu0 0
        %3425 = vmatprep.subr.bf16.mxu0 0
        %3426 = vmatpush2.bf16.msra.mxu0 0
        %3427 = vmatprep.subr.bf16.mxu0 0
        %3428 = vmatpush2.bf16.msra.mxu0 0
        %3429 = vmatprep.subr.bf16.mxu0 0
        %3430 = vmatpush2.bf16.msra.mxu0 0
        %3431 = vmatprep.subr.bf16.mxu0 0
        %3432 = vmatpush2.bf16.msra.mxu0 0
        %3433 = vmatprep.subr.bf16.mxu0 0
        %3434 = vmatpush2.bf16.msra.mxu0 0
        %3435 = vmatprep.subr.bf16.mxu0 0
        %3436 = vmatpush2.bf16.msra.mxu0 0
        %3437 = vmatprep.subr.bf16.mxu0 0
        %3438 = vmatpush2.bf16.msra.mxu0 0
        %3439 = vmatprep.mubr.bf16.mxu0 0
        %3440 = vmatmul.mubr.bf16.gmra.mxu0 %v3405
        %v3441 = vpop.f32.mrf.mxu0
        %v3442 = vadd.f32 0.0, %v3441
        %v3443 = vpop.f32.mrf.mxu0
        %v3444 = vpop.f32.mrf.mxu0
        %v3445 = vpop.f32.mrf.mxu0
        %3446 = vdwg.mxu0
        %v3448 = vrot.slane %v3442, 4
        %v3450 = vadd.f32 %v2172, %v3448
        %v3451 = vxor.u32 %v3450, 2147483648
        %v3452 = vmul.f32 %v3451, 1.442695
        %v3453 = vpow.pop %v3452
        %v3454 = vadd.f32 %v3453, 1.0
        %v3455 = vrcp.pop %v3454
        %v3456 = vmul.f32 1.0, %v3455
        %v3457 = vtanh.pop %v3450
        %v3459 = vrot.slane %v3305, 4
        %v3461 = vmul.f32 %v3456, %v3459
        %3463 = vrot.lane.b32.xlu0 %v3457, 80
        %v3464 = vpop.permute.xlu0 %3463
        %v3466 = vmul.f32 %v3456, %v3464
        %3468 = vrot.lane.b32.xlu0 %v3466, 16
        %v3469 = vpop.permute.xlu0 %3468
        %v3471 = vadd.f32 %v3461, %v3469
        %v3472 = vtanh.pop %v3471
        %3474 = vrot.lane.b32.xlu0 %v3472, 16
        %v3475 = vpop.permute.xlu0 %3474
        %v3477 = vmul.f32 %v3456, %v3475
        %v3478 = vpack.c.bf16 %v3389, %v3389
        %v3480 = vrot.slane %v3478, 2
        %3481 = vrot.lane.b32.xlu0 %v3480, 96
        %v3482 = vpop.permute.xlu0 %3481
        %v3484 = vsel %vm653, %v3482, 0
        %3486 = vmatprep.subr.bf16.mxu0 0
        %3487 = vmatpush1.bf16.msra.mxu0 0
        %3488 = vmatprep.subr.bf16.mxu0 0
        %3489 = vmatpush1.bf16.msra.mxu0 0
        %3490 = vmatprep.subr.bf16.mxu0 0
        %3491 = vmatpush1.bf16.msra.mxu0 0
        %3492 = vmatprep.subr.bf16.mxu0 0
        %3493 = vmatpush1.bf16.msra.mxu0 0
        %3494 = vmatprep.subr.bf16.mxu0 0
        %3495 = vmatpush1.bf16.msra.mxu0 0
        %3496 = vmatprep.subr.bf16.mxu0 0
        %3497 = vmatpush1.bf16.msra.mxu0 0
        %3498 = vmatprep.subr.bf16.mxu0 0
        %3499 = vmatpush1.bf16.msra.mxu0 0
        %3500 = vmatprep.subr.bf16.mxu0 0
        %3501 = vmatpush1.bf16.msra.mxu0 %v2329
        %3502 = vmatprep.subr.bf16.mxu0 0
        %3503 = vmatpush2.bf16.msra.mxu0 0
        %3504 = vmatprep.subr.bf16.mxu0 0
        %3505 = vmatpush2.bf16.msra.mxu0 0
        %3506 = vmatprep.subr.bf16.mxu0 0
        %3507 = vmatpush2.bf16.msra.mxu0 0
        %3508 = vmatprep.subr.bf16.mxu0 0
        %3509 = vmatpush2.bf16.msra.mxu0 0
        %3510 = vmatprep.subr.bf16.mxu0 0
        %3511 = vmatpush2.bf16.msra.mxu0 0
        %3512 = vmatprep.subr.bf16.mxu0 0
        %3513 = vmatpush2.bf16.msra.mxu0 0
        %3514 = vmatprep.subr.bf16.mxu0 0
        %3515 = vmatpush2.bf16.msra.mxu0 0
        %3516 = vmatprep.subr.bf16.mxu0 0
        %3517 = vmatpush2.bf16.msra.mxu0 0
        %3518 = vmatprep.mubr.bf16.mxu0 0
        %3519 = vmatmul.mubr.bf16.gmra.mxu0 %v3484
        %v3520 = vpop.f32.mrf.mxu0
        %v3521 = vadd.f32 0.0, %v3520
        %v3522 = vpop.f32.mrf.mxu0
        %v3523 = vpop.f32.mrf.mxu0
        %v3524 = vpop.f32.mrf.mxu0
        %3525 = vdwg.mxu0
        %v3526 = vadd.f32 %v2235, %v3521
        %v3527 = vxor.u32 %v3526, 2147483648
        %v3528 = vmul.f32 %v3527, 1.442695
        %v3529 = vpow.pop %v3528
        %v3530 = vadd.f32 %v3529, 1.0
        %v3531 = vrcp.pop %v3530
        %v3532 = vmul.f32 1.0, %v3531
        %v3533 = vtanh.pop %v3526
        %v3535 = vrot.slane %v3383, 4
        %v3537 = vmul.f32 %v3532, %v3535
        %3539 = vrot.lane.b32.xlu0 %v3533, 80
        %v3540 = vpop.permute.xlu0 %3539
        %v3542 = vmul.f32 %v3532, %v3540
        %3544 = vrot.lane.b32.xlu0 %v3542, 16
        %v3545 = vpop.permute.xlu0 %3544
        %v3547 = vadd.f32 %v3537, %v3545
        %v3548 = vtanh.pop %v3547
        %3550 = vrot.lane.b32.xlu0 %v3548, 16
        %v3551 = vpop.permute.xlu0 %3550
        %v3553 = vmul.f32 %v3532, %v3551
        %3555 = vrot.lane.b32.xlu0 %v3477, 96
        %v3556 = vpop.permute.xlu0 %3555
        %3558 = vst.msk [vmem:[%s2408 - $0x4] sm:$0xf0] %vm1098, %v3556
        %3560 = vrot.lane.b32.xlu0 %v3553, 112
        %v3561 = vpop.permute.xlu0 %3560
        %3563 = vst.msk [vmem:[#allocation3] sm:$0xf] %vm1104, %v3561
        %v3564 = vld [vmem:[#allocation3] sm:$0xf]
        %v3565 = vld [vmem:[#allocation3 + $0x4] sm:$0xf]
        %v3566 = vld [vmem:[#allocation3 + $0x8] sm:$0xf]
        %v3567 = vld [vmem:[#allocation3 + $0xc] sm:$0xf]
        %v3568 = vld [vmem:[#allocation3 + $0x10] sm:$0xf]
        %v3569 = vld [vmem:[#allocation3 + $0x14] sm:$0xf]
        %v3570 = vld [vmem:[#allocation3 + $0x18] sm:$0xf]
        %v3571 = vld [vmem:[#allocation3 + $0x1c] sm:$0xf]
        %v3572 = vld [vmem:[%s611] sm:$0xff]
        %v3573 = vmul.f32 %v3564, %v3564
        %v3574 = vmul.f32 %v3565, %v3565
        %v3575 = vmul.f32 %v3566, %v3566
        %v3576 = vmul.f32 %v3567, %v3567
        %v3577 = vmul.f32 %v3568, %v3568
        %v3578 = vmul.f32 %v3569, %v3569
        %v3579 = vmul.f32 %v3570, %v3570
        %v3580 = vmul.f32 %v3571, %v3571
        %vm3581 = vcmask 257024
        %v3582 = vsel %vm3581, %v3573, 0.0
        %3583 = vadd.xlane.f32.xlu0 %v3582
        %v3584 = vpop.xlane.xlu0 %3583
        %v3585 = vsel %vm3581, %v3574, 0.0
        %3586 = vadd.xlane.f32.xlu0 %v3585
        %v3587 = vpop.xlane.xlu0 %3586
        %v3588 = vsel %vm3581, %v3575, 0.0
        %3589 = vadd.xlane.f32.xlu0 %v3588
        %v3590 = vpop.xlane.xlu0 %3589
        %v3591 = vsel %vm3581, %v3576, 0.0
        %3592 = vadd.xlane.f32.xlu0 %v3591
        %v3593 = vpop.xlane.xlu0 %3592
        %v3594 = vsel %vm3581, %v3577, 0.0
        %3595 = vadd.xlane.f32.xlu0 %v3594
        %v3596 = vpop.xlane.xlu0 %3595
        %v3597 = vsel %vm3581, %v3578, 0.0
        %3598 = vadd.xlane.f32.xlu0 %v3597
        %v3599 = vpop.xlane.xlu0 %3598
        %v3600 = vsel %vm3581, %v3579, 0.0
        %3601 = vadd.xlane.f32.xlu0 %v3600
        %v3602 = vpop.xlane.xlu0 %3601
        %v3603 = vsel %vm3581, %v3580, 0.0
        %3604 = vadd.xlane.f32.xlu0 %v3603
        %v3605 = vpop.xlane.xlu0 %3604
        %v3606 = vmax.f32 %v3584, 1e-24
        %v3607 = vmax.f32 %v3587, 1e-24
        %v3608 = vmax.f32 %v3590, 1e-24
        %v3609 = vmax.f32 %v3593, 1e-24
        %v3610 = vmax.f32 %v3596, 1e-24
        %v3611 = vmax.f32 %v3599, 1e-24
        %v3612 = vmax.f32 %v3602, 1e-24
        %v3613 = vmax.f32 %v3605, 1e-24
        %v3614 = vrsqrt.pop %v3606
        %v3615 = vrsqrt.pop %v3607
        %v3616 = vrsqrt.pop %v3608
        %v3617 = vrsqrt.pop %v3609
        %v3618 = vrsqrt.pop %v3610
        %v3619 = vrsqrt.pop %v3611
        %v3620 = vrsqrt.pop %v3612
        %v3621 = vrsqrt.pop %v3613
        %v3622 = vmul.f32 %v3564, %v3614
        %v3623 = vmul.f32 %v3565, %v3615
        %v3624 = vmul.f32 %v3566, %v3616
        %v3625 = vmul.f32 %v3567, %v3617
        %v3626 = vmul.f32 %v3568, %v3618
        %v3627 = vmul.f32 %v3569, %v3619
        %v3628 = vmul.f32 %v3570, %v3620
        %v3629 = vmul.f32 %v3571, %v3621
        %v3630 = vlaneseq
        %v3631 = vshrl.u32 %v3630, 7
        %v3632 = vsub.s32 0, %v3631
        %v3633 = vrot.slane %v3572, %v3632
        %3635 = vbcast.lane.b32.xlu0 %v3633, 256
        %v3636 = vpop.permute.xlu0 %3635
        %v3637 = vlaneseq
        %v3638 = vshrl.u32 %v3637, 7
        %v3639 = vsub.s32 1, %v3638
        %v3640 = vrot.slane %v3572, %v3639
        %3642 = vbcast.lane.b32.xlu0 %v3640, 256
        %v3643 = vpop.permute.xlu0 %3642
        %v3644 = vlaneseq
        %v3645 = vshrl.u32 %v3644, 7
        %v3646 = vsub.s32 2, %v3645
        %v3647 = vrot.slane %v3572, %v3646
        %3649 = vbcast.lane.b32.xlu0 %v3647, 256
        %v3650 = vpop.permute.xlu0 %3649
        %v3651 = vlaneseq
        %v3652 = vshrl.u32 %v3651, 7
        %v3653 = vsub.s32 3, %v3652
        %v3654 = vrot.slane %v3572, %v3653
        %3656 = vbcast.lane.b32.xlu0 %v3654, 256
        %v3657 = vpop.permute.xlu0 %3656
        %v3658 = vlaneseq
        %v3659 = vshrl.u32 %v3658, 7
        %v3660 = vsub.s32 4, %v3659
        %v3661 = vrot.slane %v3572, %v3660
        %3663 = vbcast.lane.b32.xlu0 %v3661, 256
        %v3664 = vpop.permute.xlu0 %3663
        %v3665 = vlaneseq
        %v3666 = vshrl.u32 %v3665, 7
        %v3667 = vsub.s32 5, %v3666
        %v3668 = vrot.slane %v3572, %v3667
        %3670 = vbcast.lane.b32.xlu0 %v3668, 256
        %v3671 = vpop.permute.xlu0 %3670
        %v3672 = vlaneseq
        %v3673 = vshrl.u32 %v3672, 7
        %v3674 = vsub.s32 6, %v3673
        %v3675 = vrot.slane %v3572, %v3674
        %3677 = vbcast.lane.b32.xlu0 %v3675, 256
        %v3678 = vpop.permute.xlu0 %3677
        %v3679 = vlaneseq
        %v3680 = vshrl.u32 %v3679, 7
        %v3681 = vsub.s32 7, %v3680
        %v3682 = vrot.slane %v3572, %v3681
        %3684 = vbcast.lane.b32.xlu0 %v3682, 256
        %v3685 = vpop.permute.xlu0 %3684
        %v3686 = vmul.f32 %v3622, %v3636
        %v3687 = vmul.f32 %v3623, %v3643
        %v3688 = vmul.f32 %v3624, %v3650
        %v3689 = vmul.f32 %v3625, %v3657
        %v3690 = vmul.f32 %v3626, %v3664
        %v3691 = vmul.f32 %v3627, %v3671
        %v3692 = vmul.f32 %v3628, %v3678
        %v3693 = vmul.f32 %v3629, %v3685
        %vm3694 = vcmask 257025
        %v3695 = vsel %vm3694, %v3686, 0.0
        %v3696 = vsel %vm3694, %v3687, 0.0
        %v3697 = vadd.f32 %v3695, %v3696
        %v3698 = vsel %vm3694, %v3688, 0.0
        %v3699 = vadd.f32 %v3697, %v3698
        %v3700 = vsel %vm3694, %v3689, 0.0
        %v3701 = vadd.f32 %v3699, %v3700
        %v3702 = vsel %vm3694, %v3690, 0.0
        %v3703 = vadd.f32 %v3701, %v3702
        %v3704 = vsel %vm3694, %v3691, 0.0
        %v3705 = vadd.f32 %v3703, %v3704
        %v3706 = vsel %vm3694, %v3692, 0.0
        %v3707 = vadd.f32 %v3705, %v3706
        %v3708 = vsel %vm3694, %v3693, 0.0
        %v3709 = vadd.f32 %v3707, %v3708
        %v3710 = vpack.c.bf16 %v3686, %v3686
        %v3711 = vpack.c.bf16 %v3687, %v3687
        %v3712 = vpack.c.bf16 %v3688, %v3688
        %v3713 = vpack.c.bf16 %v3689, %v3689
        %v3714 = vpack.c.bf16 %v3690, %v3690
        %v3715 = vpack.c.bf16 %v3691, %v3691
        %v3716 = vpack.c.bf16 %v3692, %v3692
        %v3717 = vpack.c.bf16 %v3693, %v3693
        %v3718 = vld [vmem:[#allocation10] sm:$0xf]
        %v3719 = vld [vmem:[#allocation10 + $0x4] sm:$0xf]
        %v3720 = vld [vmem:[#allocation10 + $0x8] sm:$0xf]
        %v3721 = vld [vmem:[#allocation10 + $0xc] sm:$0xf]
        %v3722 = vld [vmem:[%s10] sm:$0x1]
        %v3724 = vlaneseq
        %v3725 = vshrl.u32 %v3724, 7
        %v3726 = vsub.s32 0, %v3725
        %v3727 = vrot.slane %v3722, %v3726
        %v3737 = vunpack.c.l.b16 %v3710
        %v3738 = vunpack.c.l.b16 %v3711
        %v3739 = vunpack.c.l.b16 %v3712
        %v3740 = vunpack.c.l.b16 %v3713
        %v3741 = vunpack.c.l.b16 %v3714
        %v3742 = vunpack.c.l.b16 %v3715
        %v3743 = vunpack.c.l.b16 %v3716
        %v3744 = vunpack.c.l.b16 %v3717
        %v3745 = vrot.slane %v3738, 7
        %vm3746 = vcmask 1041409
        %v3747 = vsel %vm3746, %v3745, %v3737
        %v3748 = vrot.slane %v3739, 6
        %vm3749 = vcmask 1042434
        %v3750 = vsel %vm3749, %v3748, %v3747
        %v3751 = vrot.slane %v3740, 5
        %vm3752 = vcmask 1043459
        %v3753 = vsel %vm3752, %v3751, %v3750
        %v3754 = vrot.slane %v3741, 4
        %vm3755 = vcmask 1044484
        %v3756 = vsel %vm3755, %v3754, %v3753
        %v3757 = vrot.slane %v3742, 3
        %vm3758 = vcmask 1045509
        %v3759 = vsel %vm3758, %v3757, %v3756
        %v3760 = vrot.slane %v3743, 2
        %vm3761 = vcmask 1046534
        %v3762 = vsel %vm3761, %v3760, %v3759
        %v3763 = vrot.slane %v3744, 1
        %vm3764 = vcmask 1047559
        %v3765 = vsel %vm3764, %v3763, %v3762
        %v3766 = vpack.c.b16 %v3765, %v3765
        %v3771 = vunpack.c.l.b16 %v3718
        %v3772 = vunpack.c.l.b16 %v3719
        %v3773 = vunpack.c.l.b16 %v3720
        %v3774 = vunpack.c.l.b16 %v3721
        %v3775 = vpack.c.b16 %v3772, %v3771
        %v3776 = vpack.c.b16 %v3774, %v3773
        %v3780 = vsel %vm2119, %v3766, 0
        %3782 = vmatprep.subr.bf16.mxu0 0
        %3783 = vmatpush1.bf16.msra.mxu0 0
        %3784 = vmatprep.subr.bf16.mxu0 0
        %3785 = vmatpush1.bf16.msra.mxu0 0
        %3786 = vmatprep.subr.bf16.mxu0 0
        %3787 = vmatpush1.bf16.msra.mxu0 0
        %3788 = vmatprep.subr.bf16.mxu0 0
        %3789 = vmatpush1.bf16.msra.mxu0 0
        %3790 = vmatprep.subr.bf16.mxu0 0
        %3791 = vmatpush1.bf16.msra.mxu0 0
        %3792 = vmatprep.subr.bf16.mxu0 0
        %3793 = vmatpush1.bf16.msra.mxu0 0
        %3794 = vmatprep.subr.bf16.mxu0 0
        %3795 = vmatpush1.bf16.msra.mxu0 %v3776
        %3796 = vmatprep.subr.bf16.mxu0 0
        %3797 = vmatpush1.bf16.msra.mxu0 %v3775
        %3798 = vmatprep.subr.bf16.mxu0 0
        %3799 = vmatpush2.bf16.msra.mxu0 0
        %3800 = vmatprep.subr.bf16.mxu0 0
        %3801 = vmatpush2.bf16.msra.mxu0 0
        %3802 = vmatprep.subr.bf16.mxu0 0
        %3803 = vmatpush2.bf16.msra.mxu0 0
        %3804 = vmatprep.subr.bf16.mxu0 0
        %3805 = vmatpush2.bf16.msra.mxu0 0
        %3806 = vmatprep.subr.bf16.mxu0 0
        %3807 = vmatpush2.bf16.msra.mxu0 0
        %3808 = vmatprep.subr.bf16.mxu0 0
        %3809 = vmatpush2.bf16.msra.mxu0 0
        %3810 = vmatprep.subr.bf16.mxu0 0
        %3811 = vmatpush2.bf16.msra.mxu0 0
        %3812 = vmatprep.subr.bf16.mxu0 0
        %3813 = vmatpush2.bf16.msra.mxu0 0
        %3814 = vmatprep.mubr.bf16.mxu0 0
        %3815 = vmatmul.mubr.bf16.gmra.mxu0 %v3780
        %v3816 = vpop.f32.mrf.mxu0
        %v3817 = vadd.f32 %v3727, %v3816
        %v3818 = vpop.f32.mrf.mxu0
        %v3819 = vpop.f32.mrf.mxu0
        %v3820 = vpop.f32.mrf.mxu0
        %3821 = vdwg.mxu0
        %v3823 = vrot.slane %v3709, 1
        %v3824 = vsel %vm2119, %v3823, 0
        %v3827 = vsel %vm2119, %v3817, 0
        %3829 = vmatprep.subr.mxu0 0.0
        %3830 = vmatpush1.xpose.msra.mxu0 0.0
        %3831 = vmatprep.subr.mxu0 0.0
        %3832 = vmatpush1.xpose.msra.mxu0 0.0
        %3833 = vmatprep.subr.mxu0 0.0
        %3834 = vmatpush1.xpose.msra.mxu0 0.0
        %3835 = vmatprep.subr.mxu0 0.0
        %3836 = vmatpush1.xpose.msra.mxu0 0.0
        %3837 = vmatprep.subr.mxu0 0.0
        %3838 = vmatpush1.xpose.msra.mxu0 0.0
        %3839 = vmatprep.subr.mxu0 0.0
        %3840 = vmatpush1.xpose.msra.mxu0 0.0
        %3841 = vmatprep.subr.mxu0 0.0
        %3842 = vmatpush1.xpose.msra.mxu0 0.0
        %3843 = vmatprep.subr.mxu0 0.0
        %3844 = vmatpush1.xpose.msra.mxu0 0.0
        %3845 = vmatprep.subr.mxu0 0.0
        %3846 = vmatpush1.xpose.msra.mxu0 0.0
        %3847 = vmatprep.subr.mxu0 0.0
        %3848 = vmatpush1.xpose.msra.mxu0 0.0
        %3849 = vmatprep.subr.mxu0 0.0
        %3850 = vmatpush1.xpose.msra.mxu0 0.0
        %3851 = vmatprep.subr.mxu0 0.0
        %3852 = vmatpush1.xpose.msra.mxu0 0.0
        %3853 = vmatprep.subr.mxu0 0.0
        %3854 = vmatpush1.xpose.msra.mxu0 0.0
        %3855 = vmatprep.subr.mxu0 0.0
        %3856 = vmatpush1.xpose.msra.mxu0 0.0
        %3857 = vmatprep.subr.mxu0 0.0
        %3858 = vmatpush1.xpose.msra.mxu0 0.0
        %3859 = vmatprep.subr.mxu0 0.0
        %3860 = vmatpush1.xpose.msra.mxu0 %v3827
        %3861 = vmatprep.subr.mxu0 0.0
        %3862 = vmatpush2.xpose.msra.mxu0 0.0
        %3863 = vmatprep.subr.mxu0 0.0
        %3864 = vmatpush2.xpose.msra.mxu0 0.0
        %3865 = vmatprep.subr.mxu0 0.0
        %3866 = vmatpush2.xpose.msra.mxu0 0.0
        %3867 = vmatprep.subr.mxu0 0.0
        %3868 = vmatpush2.xpose.msra.mxu0 0.0
        %3869 = vmatprep.subr.mxu0 0.0
        %3870 = vmatpush2.xpose.msra.mxu0 0.0
        %3871 = vmatprep.subr.mxu0 0.0
        %3872 = vmatpush2.xpose.msra.mxu0 0.0
        %3873 = vmatprep.subr.mxu0 0.0
        %3874 = vmatpush2.xpose.msra.mxu0 0.0
        %3875 = vmatprep.subr.mxu0 0.0
        %3876 = vmatpush2.xpose.msra.mxu0 0.0
        %3877 = vmatprep.subr.mxu0 0.0
        %3878 = vmatpush2.xpose.msra.mxu0 0.0
        %3879 = vmatprep.subr.mxu0 0.0
        %3880 = vmatpush2.xpose.msra.mxu0 0.0
        %3881 = vmatprep.subr.mxu0 0.0
        %3882 = vmatpush2.xpose.msra.mxu0 0.0
        %3883 = vmatprep.subr.mxu0 0.0
        %3884 = vmatpush2.xpose.msra.mxu0 0.0
        %3885 = vmatprep.subr.mxu0 0.0
        %3886 = vmatpush2.xpose.msra.mxu0 0.0
        %3887 = vmatprep.subr.mxu0 0.0
        %3888 = vmatpush2.xpose.msra.mxu0 0.0
        %3889 = vmatprep.subr.mxu0 0.0
        %3890 = vmatpush2.xpose.msra.mxu0 0.0
        %3891 = vmatprep.subr.mxu0 0.0
        %3892 = vmatpush2.xpose.msra.mxu0 0.0
        %3893 = vmatprep.mubr.f32.mxu0 0.0
        %3894 = vmatmul.mubr.f32.gmra.mxu0 %v3824
        %v3895 = vpop.f32.mrf.mxu0
        %v3896 = vadd.f32 0.0, %v3895
        %v3897 = vpop.f32.mrf.mxu0
        %3898 = vdwg.mxu0
        %v3899 = vld [vmem:[%s614] sm:$0x1]
        %vm3900 = vcmp.gt.f32.partialorder %v3899, 0.0
        %v3901 = vsel %vm3900, 1, 0
        %v3902 = vlaneseq
        %v3903 = vshrl.u32 %v3902, 7
        %v3904 = vsub.s32 0, %v3903
        %v3905 = vrot.slane %v3901, %v3904
        %vm3906 = vcmp.eq.s32.totalorder %v3905, 1
        %v3907 = vsel %vm3906, %v3896, -1e+08
        %vm3908 = vcmask 59392
        %v3909 = vsel %vm3908, %v3907, -inf
        %3910 = vmax.xlane.f32.xlu0 %v3909
        %v3911 = vpop.xlane.xlu0 %3910
        %v3912 = vsub.f32 %v3907, %v3911
        %v3913 = vmul.f32 %v3912, 1.442695
        %v3914 = vpow.pop %v3913
        %v3915 = vsel %vm3908, %v3914, 0.0
        %3916 = vadd.xlane.f32.xlu0 %v3915
        %v3917 = vpop.xlane.xlu0 %3916
        %v3918 = vrcp.pop %v3917
        %v3919 = vmul.f32 %v3914, %v3918
        %v3928 = vrot.slane %v3687, 7
        %v3929 = vsel %vm3746, %v3928, %v3686
        %v3930 = vrot.slane %v3688, 6
        %v3931 = vsel %vm3749, %v3930, %v3929
        %v3932 = vrot.slane %v3689, 5
        %v3933 = vsel %vm3752, %v3932, %v3931
        %v3934 = vrot.slane %v3690, 4
        %v3935 = vsel %vm3755, %v3934, %v3933
        %v3936 = vrot.slane %v3691, 3
        %v3937 = vsel %vm3758, %v3936, %v3935
        %v3938 = vrot.slane %v3692, 2
        %v3939 = vsel %vm3761, %v3938, %v3937
        %v3940 = vrot.slane %v3693, 1
        %v3941 = vsel %vm3764, %v3940, %v3939
        %vm3943 = vcmask 64512
        %v3945 = vsel %vm3943, %v3919, 0
        %3947 = vmatprep.subr.mxu0 0.0
        %3948 = vmatpush1.msra.mxu0 0.0
        %3949 = vmatprep.subr.mxu0 0.0
        %3950 = vmatpush1.msra.mxu0 0.0
        %3951 = vmatprep.subr.mxu0 0.0
        %3952 = vmatpush1.msra.mxu0 0.0
        %3953 = vmatprep.subr.mxu0 0.0
        %3954 = vmatpush1.msra.mxu0 0.0
        %3955 = vmatprep.subr.mxu0 0.0
        %3956 = vmatpush1.msra.mxu0 0.0
        %3957 = vmatprep.subr.mxu0 0.0
        %3958 = vmatpush1.msra.mxu0 0.0
        %3959 = vmatprep.subr.mxu0 0.0
        %3960 = vmatpush1.msra.mxu0 0.0
        %3961 = vmatprep.subr.mxu0 0.0
        %3962 = vmatpush1.msra.mxu0 0.0
        %3963 = vmatprep.subr.mxu0 0.0
        %3964 = vmatpush1.msra.mxu0 0.0
        %3965 = vmatprep.subr.mxu0 0.0
        %3966 = vmatpush1.msra.mxu0 0.0
        %3967 = vmatprep.subr.mxu0 0.0
        %3968 = vmatpush1.msra.mxu0 0.0
        %3969 = vmatprep.subr.mxu0 0.0
        %3970 = vmatpush1.msra.mxu0 0.0
        %3971 = vmatprep.subr.mxu0 0.0
        %3972 = vmatpush1.msra.mxu0 0.0
        %3973 = vmatprep.subr.mxu0 0.0
        %3974 = vmatpush1.msra.mxu0 0.0
        %3975 = vmatprep.subr.mxu0 0.0
        %3976 = vmatpush1.msra.mxu0 0.0
        %3977 = vmatprep.subr.mxu0 0.0
        %3978 = vmatpush1.msra.mxu0 %v3941
        %3979 = vmatprep.subr.mxu0 0.0
        %3980 = vmatpush2.msra.mxu0 0.0
        %3981 = vmatprep.subr.mxu0 0.0
        %3982 = vmatpush2.msra.mxu0 0.0
        %3983 = vmatprep.subr.mxu0 0.0
        %3984 = vmatpush2.msra.mxu0 0.0
        %3985 = vmatprep.subr.mxu0 0.0
        %3986 = vmatpush2.msra.mxu0 0.0
        %3987 = vmatprep.subr.mxu0 0.0
        %3988 = vmatpush2.msra.mxu0 0.0
        %3989 = vmatprep.subr.mxu0 0.0
        %3990 = vmatpush2.msra.mxu0 0.0
        %3991 = vmatprep.subr.mxu0 0.0
        %3992 = vmatpush2.msra.mxu0 0.0
        %3993 = vmatprep.subr.mxu0 0.0
        %3994 = vmatpush2.msra.mxu0 0.0
        %3995 = vmatprep.subr.mxu0 0.0
        %3996 = vmatpush2.msra.mxu0 0.0
        %3997 = vmatprep.subr.mxu0 0.0
        %3998 = vmatpush2.msra.mxu0 0.0
        %3999 = vmatprep.subr.mxu0 0.0
        %4000 = vmatpush2.msra.mxu0 0.0
        %4001 = vmatprep.subr.mxu0 0.0
        %4002 = vmatpush2.msra.mxu0 0.0
        %4003 = vmatprep.subr.mxu0 0.0
        %4004 = vmatpush2.msra.mxu0 0.0
        %4005 = vmatprep.subr.mxu0 0.0
        %4006 = vmatpush2.msra.mxu0 0.0
        %4007 = vmatprep.subr.mxu0 0.0
        %4008 = vmatpush2.msra.mxu0 0.0
        %4009 = vmatprep.subr.mxu0 0.0
        %4010 = vmatpush2.msra.mxu0 0.0
        %4011 = vmatprep.mubr.f32.mxu0 0.0
        %4012 = vmatmul.mubr.f32.gmra.mxu0 %v3945
        %v4013 = vpop.f32.mrf.mxu0
        %v4014 = vadd.f32 0.0, %v4013
        %v4015 = vpop.f32.mrf.mxu0
        %4016 = vdwg.mxu0
        %v4017 = vmul.f32 %v4014, %v4014
        %vm4018 = vcmask 256000
        %v4019 = vsel %vm4018, %v4017, 0.0
        %4020 = vadd.xlane.f32.xlu0 %v4019
        %v4021 = vpop.xlane.xlu0 %4020
        %v4022 = vmul.f32 %v3693, %v3693
        %vm4023 = vcmask 253952
        %v4024 = vsel %vm4023, %v4022, 0.0
        %4025 = vadd.xlane.f32.xlu0 %v4024
        %v4026 = vpop.xlane.xlu0 %4025
        %v4027 = vlaneseq
        %v4028 = vshrl.u32 %v4027, 7
        %v4029 = vsub.s32 0, %v4028
        %v4030 = vrot.slane %v4026, %v4029
        %v4031 = vadd.f32 %v4021, %v4030
        %v4032 = vmax.f32 %v4031, 1e-24
        %v4033 = vrsqrt.pop %v4032
        %v4034 = vld [vmem:[%s11] sm:$0xf]
        %v4035 = vld [vmem:[%s11 + $0x4] sm:$0xf]
        %v4036 = vld [vmem:[%s11 + $0x8] sm:$0xf]
        %v4037 = vld [vmem:[%s11 + $0xc] sm:$0xf]
        %v4038 = vld [vmem:[%s11 + $0x10] sm:$0xf]
        %v4039 = vld [vmem:[%s11 + $0x14] sm:$0xf]
        %v4040 = vld [vmem:[%s11 + $0x18] sm:$0xf]
        %v4041 = vld [vmem:[%s11 + $0x1c] sm:$0xf]
        %v4042 = vld [vmem:[%s11 + $0x20] sm:$0xf]
        %v4043 = vld [vmem:[%s11 + $0x24] sm:$0xf]
        %v4044 = vld [vmem:[%s11 + $0x28] sm:$0xf]
        %v4045 = vld [vmem:[%s11 + $0x2c] sm:$0xf]
        %v4046 = vpack.c.bf16 %v4014, %v4014
        %v4051 = vunpack.c.l.b16 %v4038
        %v4052 = vunpack.c.l.b16 %v4039
        %v4053 = vunpack.c.l.b16 %v4040
        %v4054 = vunpack.c.l.b16 %v4041
        %v4055 = vpack.c.b16 %v4052, %v4051
        %v4056 = vpack.c.b16 %v4054, %v4053
        %v4060 = vsel %vm2119, %v3717, 0
        %4062 = vmatprep.subr.bf16.mxu0 0
        %4063 = vmatpush1.bf16.msra.mxu0 0
        %4064 = vmatprep.subr.bf16.mxu0 0
        %4065 = vmatpush1.bf16.msra.mxu0 0
        %4066 = vmatprep.subr.bf16.mxu0 0
        %4067 = vmatpush1.bf16.msra.mxu0 0
        %4068 = vmatprep.subr.bf16.mxu0 0
        %4069 = vmatpush1.bf16.msra.mxu0 0
        %4070 = vmatprep.subr.bf16.mxu0 0
        %4071 = vmatpush1.bf16.msra.mxu0 0
        %4072 = vmatprep.subr.bf16.mxu0 0
        %4073 = vmatpush1.bf16.msra.mxu0 0
        %4074 = vmatprep.subr.bf16.mxu0 0
        %4075 = vmatpush1.bf16.msra.mxu0 %v4056
        %4076 = vmatprep.subr.bf16.mxu0 0
        %4077 = vmatpush1.bf16.msra.mxu0 %v4055
        %4078 = vmatprep.subr.bf16.mxu0 0
        %4079 = vmatpush2.bf16.msra.mxu0 0
        %4080 = vmatprep.subr.bf16.mxu0 0
        %4081 = vmatpush2.bf16.msra.mxu0 0
        %4082 = vmatprep.subr.bf16.mxu0 0
        %4083 = vmatpush2.bf16.msra.mxu0 0
        %4084 = vmatprep.subr.bf16.mxu0 0
        %4085 = vmatpush2.bf16.msra.mxu0 0
        %4086 = vmatprep.subr.bf16.mxu0 0
        %4087 = vmatpush2.bf16.msra.mxu0 0
        %4088 = vmatprep.subr.bf16.mxu0 0
        %4089 = vmatpush2.bf16.msra.mxu0 0
        %4090 = vmatprep.subr.bf16.mxu0 0
        %4091 = vmatpush2.bf16.msra.mxu0 0
        %4092 = vmatprep.subr.bf16.mxu0 0
        %4093 = vmatpush2.bf16.msra.mxu0 0
        %4094 = vmatprep.mubr.bf16.mxu0 0
        %4095 = vmatmul.mubr.bf16.gmra.mxu0 %v4060
        %v4096 = vpop.f32.mrf.mxu0
        %v4097 = vadd.f32 0.0, %v4096
        %v4098 = vpop.f32.mrf.mxu0
        %v4099 = vpop.f32.mrf.mxu0
        %v4100 = vpop.f32.mrf.mxu0
        %4101 = vdwg.mxu0
        %v4102 = vlaneseq
        %v4103 = vshrl.u32 %v4102, 7
        %v4104 = vsub.s32 0, %v4103
        %v4105 = vrot.slane %v4097, %v4104
        %v4110 = vunpack.c.l.b16 %v4034
        %v4111 = vunpack.c.l.b16 %v4035
        %v4112 = vunpack.c.l.b16 %v4036
        %v4113 = vunpack.c.l.b16 %v4037
        %v4114 = vpack.c.b16 %v4111, %v4110
        %v4115 = vpack.c.b16 %v4113, %v4112
        %v4119 = vsel %vm2119, %v4046, 0
        %4121 = vmatprep.subr.bf16.mxu0 0
        %4122 = vmatpush1.bf16.msra.mxu0 0
        %4123 = vmatprep.subr.bf16.mxu0 0
        %4124 = vmatpush1.bf16.msra.mxu0 0
        %4125 = vmatprep.subr.bf16.mxu0 0
        %4126 = vmatpush1.bf16.msra.mxu0 0
        %4127 = vmatprep.subr.bf16.mxu0 0
        %4128 = vmatpush1.bf16.msra.mxu0 0
        %4129 = vmatprep.subr.bf16.mxu0 0
        %4130 = vmatpush1.bf16.msra.mxu0 0
        %4131 = vmatprep.subr.bf16.mxu0 0
        %4132 = vmatpush1.bf16.msra.mxu0 0
        %4133 = vmatprep.subr.bf16.mxu0 0
        %4134 = vmatpush1.bf16.msra.mxu0 %v4115
        %4135 = vmatprep.subr.bf16.mxu0 0
        %4136 = vmatpush1.bf16.msra.mxu0 %v4114
        %4137 = vmatprep.subr.bf16.mxu0 0
        %4138 = vmatpush2.bf16.msra.mxu0 0
        %4139 = vmatprep.subr.bf16.mxu0 0
        %4140 = vmatpush2.bf16.msra.mxu0 0
        %4141 = vmatprep.subr.bf16.mxu0 0
        %4142 = vmatpush2.bf16.msra.mxu0 0
        %4143 = vmatprep.subr.bf16.mxu0 0
        %4144 = vmatpush2.bf16.msra.mxu0 0
        %4145 = vmatprep.subr.bf16.mxu0 0
        %4146 = vmatpush2.bf16.msra.mxu0 0
        %4147 = vmatprep.subr.bf16.mxu0 0
        %4148 = vmatpush2.bf16.msra.mxu0 0
        %4149 = vmatprep.subr.bf16.mxu0 0
        %4150 = vmatpush2.bf16.msra.mxu0 0
        %4151 = vmatprep.subr.bf16.mxu0 0
        %4152 = vmatpush2.bf16.msra.mxu0 0
        %4153 = vmatprep.mubr.bf16.mxu0 0
        %4154 = vmatmul.mubr.bf16.gmra.mxu0 %v4119
        %v4155 = vpop.f32.mrf.mxu0
        %v4156 = vadd.f32 %v4105, %v4155
        %v4157 = vpop.f32.mrf.mxu0
        %v4158 = vpop.f32.mrf.mxu0
        %v4159 = vpop.f32.mrf.mxu0
        %4160 = vdwg.mxu0
        %v4161 = vmul.f32 %v4156, %v4033
        %v4162 = vshrl.u32 %v3717, 16
        %v4164 = vshll.u32 %v3717, 16
        %v4166 = vrot.slane %v4164, 1
        %v4167 = vor.u32 %v4162, %v4166
        %v4172 = vunpack.c.l.b16 %v4042
        %v4173 = vunpack.c.l.b16 %v4043
        %v4174 = vunpack.c.l.b16 %v4044
        %v4175 = vunpack.c.l.b16 %v4045
        %v4176 = vpack.c.b16 %v4173, %v4172
        %v4177 = vpack.c.b16 %v4175, %v4174
        %v4181 = vsel %vm2119, %v4167, 0
        %4183 = vmatprep.subr.bf16.mxu0 0
        %4184 = vmatpush1.bf16.msra.mxu0 0
        %4185 = vmatprep.subr.bf16.mxu0 0
        %4186 = vmatpush1.bf16.msra.mxu0 0
        %4187 = vmatprep.subr.bf16.mxu0 0
        %4188 = vmatpush1.bf16.msra.mxu0 0
        %4189 = vmatprep.subr.bf16.mxu0 0
        %4190 = vmatpush1.bf16.msra.mxu0 0
        %4191 = vmatprep.subr.bf16.mxu0 0
        %4192 = vmatpush1.bf16.msra.mxu0 0
        %4193 = vmatprep.subr.bf16.mxu0 0
        %4194 = vmatpush1.bf16.msra.mxu0 0
        %4195 = vmatprep.subr.bf16.mxu0 0
        %4196 = vmatpush1.bf16.msra.mxu0 %v4177
        %4197 = vmatprep.subr.bf16.mxu0 0
        %4198 = vmatpush1.bf16.msra.mxu0 %v4176
        %4199 = vmatprep.subr.bf16.mxu0 0
        %4200 = vmatpush2.bf16.msra.mxu0 0
        %4201 = vmatprep.subr.bf16.mxu0 0
        %4202 = vmatpush2.bf16.msra.mxu0 0
        %4203 = vmatprep.subr.bf16.mxu0 0
        %4204 = vmatpush2.bf16.msra.mxu0 0
        %4205 = vmatprep.subr.bf16.mxu0 0
        %4206 = vmatpush2.bf16.msra.mxu0 0
        %4207 = vmatprep.subr.bf16.mxu0 0
        %4208 = vmatpush2.bf16.msra.mxu0 0
        %4209 = vmatprep.subr.bf16.mxu0 0
        %4210 = vmatpush2.bf16.msra.mxu0 0
        %4211 = vmatprep.subr.bf16.mxu0 0
        %4212 = vmatpush2.bf16.msra.mxu0 0
        %4213 = vmatprep.subr.bf16.mxu0 0
        %4214 = vmatpush2.bf16.msra.mxu0 0
        %4215 = vmatprep.mubr.bf16.mxu0 0
        %4216 = vmatmul.mubr.bf16.gmra.mxu0 %v4181
        %v4217 = vpop.f32.mrf.mxu0
        %v4218 = vadd.f32 0.0, %v4217
        %v4219 = vpop.f32.mrf.mxu0
        %v4220 = vpop.f32.mrf.mxu0
        %v4221 = vpop.f32.mrf.mxu0
        %4222 = vdwg.mxu0
        %v4223 = vadd.f32 %v4161, %v4218
        %v4224 = vld [vmem:[%s12] sm:$0x1]
        %v4226 = vlaneseq
        %v4227 = vshrl.u32 %v4226, 7
        %v4228 = vsub.s32 0, %v4227
        %v4229 = vrot.slane %v4224, %v4228
        %v4231 = vadd.f32 %v4223, %v4229
        %v4232 = vtanh.pop %v4231
        %v4233 = vld [vmem:[%s13] sm:$0x1]
        %v4235 = vlaneseq
        %v4236 = vshrl.u32 %v4235, 7
        %v4237 = vsub.s32 0, %v4236
        %v4238 = vrot.slane %v4233, %v4237
        %v4240 = vmul.f32 %v4232, %v4238
        %vm4241 = vcmask 780288
        %v4242 = vsel %vm4241, %v4240, 0.0
        %4243 = vadd.xlane.f32.xlu0 %v4242
        %v4244 = vpop.xlane.xlu0 %4243
        %v4245 = vld [vmem:[#allocation4] sm:$0x1]
        %v4247 = vlaneseq
        %v4248 = vshrl.u32 %v4247, 7
        %v4249 = vsub.s32 0, %v4248
        %v4250 = vrot.slane %v4245, %v4249
        %v4252 = vadd.f32 %v4244, %v4250
        %4253 = vst.msk [vmem:[%s618] sm:$0x7] %vm3908, %v3919
        %vm4254 = vcmask 2048
        %4255 = vst.msk [vmem:[%s622] sm:$0x7] %vm4254, %v4252
        %p4256 = scmp.lt.s32.totalorder %s33, 1
        %s4257 = scalar_select %p4256, %s33, 1
        %s4258 = smul.addr %s4257, 4
        %s4259 = scalar_lea.vmem %s15, %s4258
        %p4260 = scmp.lt.s32.totalorder %s33, 1
        %s4261 = scalar_select %p4260, %s33, 1
        %s4262 = smul.addr %s4261, 4
        %s4263 = scalar_lea.vmem %s16, %s4262
        // Predicated region
        $region97: #{tpu_custom_call.1} parent=79 // pred_check
          %p4264 = pneg %p381
        $region98: #{tpu_custom_call.1} parent=79 // pred_check_branch
          %4266 = sbr.rel (%p4264) target = $region100
        $region99: #{tpu_custom_call.1} parent=79 // pred_region
          _
        $region100: #{tpu_custom_call.1} parent=79 // pred_fallthru
          _
        // Predicated region
        $region101: #{tpu_custom_call.1} parent=79 // pred_check
          %p4267 = pneg %p407
        $region102: #{tpu_custom_call.1} parent=79 // pred_check_branch
          %4269 = sbr.rel (%p4267) target = $region104
        $region103: #{tpu_custom_call.1} parent=79 // pred_region
          _
        $region104: #{tpu_custom_call.1} parent=79 // pred_fallthru
          _
      $region80: #{tpu_custom_call.1} parent=5 // pred_fallthru
        _
      %p4270 = scmp.le.s32.totalorder 2, %s28
      // Predicated region
      $region105: #{tpu_custom_call.1} parent=5 // pred_check
        %p4271 = pneg %p4270
      $region106: #{tpu_custom_call.1} parent=5 // pred_check_branch
        %4273 = sbr.rel (%p4271) target = $region108
      $region107: #{tpu_custom_call.1} parent=5 // pred_region
        %s4274 = ssub.s32 %s28, 2
        // Predicated region
        $region109: #{tpu_custom_call.1} parent=107 // pred_check
          %p4275 = pneg %p387
        $region110: #{tpu_custom_call.1} parent=107 // pred_check_branch
          %4277 = sbr.rel (%p4275) target = $region112
        $region111: #{tpu_custom_call.1} parent=107 // pred_region
          %p4278 = scmp.lt.s32.totalorder %s34, 1
          %s4279 = scalar_select %p4278, %s34, 1
          %s4280 = smul.addr %s4279, 4
          %s4281 = scalar_lea.vmem %s15, %s4280
        $region112: #{tpu_custom_call.1} parent=107 // pred_fallthru
          _
        // Predicated region
        $region113: #{tpu_custom_call.1} parent=107 // pred_check
          %p4282 = pneg %p413
        $region114: #{tpu_custom_call.1} parent=107 // pred_check_branch
          %4284 = sbr.rel (%p4282) target = $region116
        $region115: #{tpu_custom_call.1} parent=107 // pred_region
          %p4285 = scmp.lt.s32.totalorder %s34, 1
          %s4286 = scalar_select %p4285, %s34, 1
          %s4287 = smul.addr %s4286, 4
          %s4288 = scalar_lea.vmem %s16, %s4287
        $region116: #{tpu_custom_call.1} parent=107 // pred_fallthru
          _
      $region108: #{tpu_custom_call.1} parent=5 // pred_fallthru
        _
    $region6: #{tpu_custom_call.1} parent=1 // loop_footer
      %s32 = sadd.s32 1, %s28
    $region7: #{tpu_custom_call.1} parent=1 // loop_footer_branch
      %27 = sbr.rel target = $region3
    $region8: #{tpu_custom_call.1} parent=1 // loop_exit
      _
    %4289 = vsyncpa [#allocation6], 1
    %s4290 = scalar_lea.sflag [#allocation6], 1
    %4291 = vsyncpa %s4290, 1
    %4292 = vsyncpa [#allocation8], 1
    %4293 = vsyncpa [#allocation11], 1

</llo_original>
